<compile_context>
chip_gen: v6e
topology: v6e:2x2x1
jax: 0.10.0
libtpu: 0.0.40
codegen_flags: <defaults>
</compile_context>

<pallas_src>
import jax
import jax.numpy as jnp
import numpy as np
from jax import lax
from jax.experimental import pallas as pl
from jax.experimental.pallas import tpu as pltpu


# --------------------------------------------------------------------------- helpers

def perm_matrix(n):
    """(n, n) exact 0/1 matrix: z = P @ y packs even rows of y into the top half and odd
    rows into the bottom half.  Used for MaxPool1d(2) and the stride-2 subsample."""
    p = np.zeros((n, n), np.float32)
    h = n // 2
    p[np.arange(h), 2 * np.arange(h)] = 1.0
    p[h + np.arange(h), 2 * np.arange(h) + 1] = 1.0
    return jnp.asarray(p)


def prepare_params(params, L):
    """One-time weight packing (hoisted out of the forward).

    Per BaseBlock: zero-pad the k=3/5/7 weights to a common 7-tap weight, fold the
    bottleneck in (exact), and place everything plus the maxpool/conv1 branch into one
    (8*C, C) im2col weight.  MXU operands pre-cast to bf16; BN params packed as (2, C).
    """
    C = params['proj']['gamma'].shape[0]
    dim = C // 4

    def bn_pack(p):
        return jnp.stack([p['gamma'], p['beta']]).astype(jnp.float32)        # (2, C)

    def block_pack(p):
        wtap = jnp.zeros((7, dim, 3 * dim), jnp.float32)
        wtap = wtap.at[2:5, :, 0 * dim:1 * dim].set(p['w2'])   # k=3, pad=1 -> taps 2..4
        wtap = wtap.at[1:6, :, 1 * dim:2 * dim].set(p['w3'])   # k=5, pad=2 -> taps 1..5
        wtap = wtap.at[0:7, :, 2 * dim:3 * dim].set(p['w4'])   # k=7, pad=3 -> taps 0..6
        weff = jnp.einsum('cd,tde->tce', p['wb'], wtap)        # bottleneck folded (exact)
        W = jnp.zeros((8 * C, C), jnp.float32)
        W = W.at[0:C, 0:dim].set(p['w1'])                      # maxpool+conv1 branch
        W = W.at[C:8 * C, dim:C].set(weff.reshape(7 * C, 3 * dim))
        return W.astype(jnp.bfloat16), bn_pack(p)

    packed = {
        'w_proj': params['proj']['w'].astype(jnp.float32),
        'bn_proj': bn_pack(params['proj']),
        'w_s1': params['short1']['w'].astype(jnp.bfloat16),
        'bn_s1': bn_pack(params['short1']),
        'w_s2': params['short2']['w'].astype(jnp.bfloat16),
        'bn_s2': bn_pack(params['short2']),
        'fc_w': params['fc_w'].astype(jnp.bfloat16),
        'fc_b': params['fc_b'].reshape(1, -1).astype(jnp.float32),
        'perms': tuple(perm_matrix(L >> k) for k in range(4)),   # sizes L, L/2, L/4, L/8
    }
    for i in range(1, 5):
        W, bnp = block_pack(params[f'bb{i}'])
        packed[f'w_bb{i}'] = W
        packed[f'bn_bb{i}'] = bnp
    return packed


# ---------------------------------------------------------------- fused forward kernel

def model_kernel(x_ref, wproj_ref, bnproj_ref,
                 ws1_ref, bns1_ref, ws2_ref, bns2_ref,
                 W1_ref, bn1_ref, W2_ref, bn2_ref,
                 W3_ref, bn3_ref, W4_ref, bn4_ref,
                 fcw_ref, fcb_ref,
                 pL_ref, pL2_ref, pL4_ref, pL8_ref,
                 out_ref, xcat_ref):
    B, L, Cin = x_ref.shape
    C = bnproj_ref.shape[1]
    eps = 1e-5

    def batchnorm(y, bn_ref):
        # Training-mode batch statistics (matches the reference); two-pass variance,
        # f32 VPU math.
        gam = bn_ref[0:1, :]                                   # (1, C)
        bet = bn_ref[1:2, :]
        mean = jnp.mean(y, axis=(0, 1), keepdims=True)
        ctr = y - mean
        var = jnp.mean(ctr * ctr, axis=(0, 1), keepdims=True)
        return ctr * (gam * lax.rsqrt(var + eps)) + bet

    def pack_even_odd(y, p_ref):
        # One batched matmul against an exact 0/1 permutation: even rows -> top half,
        # odd rows -> bottom half.  f32 MXU is exact for 0/1 selection.
        Bb, Ly, _ = y.shape
        P = jnp.broadcast_to(p_ref[...], (Bb, Ly, Ly))
        return jnp.einsum('bpl,bld->bpd', P, y, preferred_element_type=jnp.float32)

    def maxpool2(y, p_ref):
        z = pack_even_odd(y, p_ref)
        h = y.shape[1] // 2
        return jnp.maximum(z[:, 0:h, :], z[:, h:, :])

    def subsample2(y, p_ref):                                  # Conv1d stride=2 == even rows
        return pack_even_odd(y, p_ref)[:, 0:y.shape[1] // 2, :]

    def base_block(x, W_ref, bn_ref, p_ref):
        # maxpool(3,1,1)+conv1 and bottleneck+conv2/3/4 all collapse into ONE MXU matmul
        # (K = 8*C) on an im2col LHS staged in VMEM scratch.
        Bb, Lx, Cx = x.shape
        xcat_ref[:, 0:Lx, :] = jnp.zeros((Bb, Lx, 8 * Cx), jnp.float32)
        # 7 shifted zero-padded copies of x -> lane groups 1..7 (the conv2/3/4 columns).
        for t in range(7):
            s = t - 3
            dlo, dhi = max(0, -s), Lx - max(0, s)
            slo, shi = max(0, s), Lx - max(0, -s)
            xcat_ref[:, dlo:dhi, (1 + t) * Cx:(2 + t) * Cx] = x[:, slo:shi, :]
        # MaxPool1d(3, stride=1, pad=1) branch (PyTorch pads with -inf): reuse the +/-1
        # shifted copies already staged, masking the pad rows to -inf.
        pos = lax.broadcasted_iota(jnp.int32, (Bb, Lx, Cx), 1)
        left = jnp.where(pos == 0, -jnp.inf, xcat_ref[:, 0:Lx, 3 * Cx:4 * Cx])
        right = jnp.where(pos == Lx - 1, -jnp.inf, xcat_ref[:, 0:Lx, 5 * Cx:6 * Cx])
        xcat_ref[:, 0:Lx, 0:Cx] = jnp.maximum(jnp.maximum(left, x), right)
        # One bf16 MXU matmul (f32 accumulation), K = 8*C = 256 at d_model=32.
        xcat = xcat_ref[:, 0:Lx, :].astype(jnp.bfloat16)
        y = jnp.einsum('blk,kd->bld', xcat, W_ref[...],
                       preferred_element_type=jnp.float32)     # (B, Lx, C)
        # BN + ReLU on the full concatenated width, then MaxPool1d(2).
        y = jnp.maximum(batchnorm(y, bn_ref), 0.0)
        return maxpool2(y, p_ref)

    def shortcut(x, w_ref, bn_ref, p_sub_ref, p_pool_ref):
        xs = subsample2(x, p_sub_ref)                          # Conv1d(k=1, stride=2)
        y = jnp.einsum('blc,cd->bld', xs.astype(jnp.bfloat16), w_ref[...],
                       preferred_element_type=jnp.float32)
        y = jnp.maximum(batchnorm(y, bn_ref), 0.0)
        return maxpool2(y, p_pool_ref)

    # ---- proj: Conv1d(k=1, bias=False) + BN (no ReLU) ----
    x_in = x_ref[...]
    if Cin == 1:
        y0 = x_in * wproj_ref[...]          # (B,L,1) * (1,C): lane broadcast, skip the MXU
    else:
        y0 = jnp.einsum('blc,cd->bld', x_in.astype(jnp.bfloat16),
                        wproj_ref[...].astype(jnp.bfloat16),
                        preferred_element_type=jnp.float32)
    x = batchnorm(y0, bnproj_ref)                              # (B, L, C)

    # ---- body (all residents of VMEM/registers) ----
    s1 = shortcut(x, ws1_ref, bns1_ref, pL_ref, pL2_ref)       # (B, L/4, C)
    x = base_block(x, W1_ref, bn1_ref, pL_ref)                 # (B, L/2, C)
    x = base_block(x, W2_ref, bn2_ref, pL2_ref)                # (B, L/4, C)
    x = x + s1
    s2 = shortcut(x, ws2_ref, bns2_ref, pL4_ref, pL8_ref)      # (B, L/16, C)
    x = base_block(x, W3_ref, bn3_ref, pL4_ref)                # (B, L/8, C)
    x = base_block(x, W4_ref, bn4_ref, pL8_ref)                # (B, L/16, C)
    x = x + s2

    # ---- head: AdaptiveAvgPool1d(1) + flatten + Linear ----
    feat = jnp.mean(x, axis=1)                                 # (B, C)
    out_ref[...] = jnp.dot(feat.astype(jnp.bfloat16), fcw_ref[...],
                           preferred_element_type=jnp.float32) + fcb_ref[...]


def mini_inception_time(x_ncl, packed):
    """x_ncl: [B, in_channel, L] (PyTorch NCL).  Returns [B, num_classes] logits.
    The whole forward is a single pallas_call (no grid)."""
    x = jnp.transpose(x_ncl, (0, 2, 1)).astype(jnp.float32)    # NCL -> NLC
    B, L, _ = x.shape
    C = packed['bn_proj'].shape[1]
    nc = packed['fc_w'].shape[1]
    args = (x,
            packed['w_proj'], packed['bn_proj'],
            packed['w_s1'], packed['bn_s1'],
            packed['w_s2'], packed['bn_s2'],
            packed['w_bb1'], packed['bn_bb1'],
            packed['w_bb2'], packed['bn_bb2'],
            packed['w_bb3'], packed['bn_bb3'],
            packed['w_bb4'], packed['bn_bb4'],
            packed['fc_w'], packed['fc_b'],
            *packed['perms'])
    return pl.pallas_call(
        model_kernel,
        out_shape=jax.ShapeDtypeStruct((B, nc), jnp.float32),
        in_specs=[pl.BlockSpec(memory_space=pltpu.MemorySpace.VMEM)] * len(args),
        out_specs=pl.BlockSpec(memory_space=pltpu.MemorySpace.VMEM),
        scratch_shapes=[pltpu.VMEM((B, L, 8 * C), jnp.float32)],   # im2col staging buffer
    )(*args)


# --------------------------------------------------------------- pure-JAX f32 reference

def _ref_bn(y, gamma, beta):
    mean = jnp.mean(y, axis=(0, 1), keepdims=True)
    var = jnp.mean((y - mean) ** 2, axis=(0, 1), keepdims=True)
    return (y - mean) * lax.rsqrt(var + 1e-5) * gamma.reshape(1, 1, -1) + beta.reshape(1, 1, -1)


def _ref_pool2(y):
    return jnp.maximum(y[:, 0::2, :], y[:, 1::2, :])


def reference_base_block(x, p):
    B, L, C = x.shape
    xn = jnp.pad(x, ((0, 0), (1, 1), (0, 0)), constant_values=-jnp.inf)
    xm = jnp.maximum(jnp.maximum(xn[:, 0:L], xn[:, 1:L + 1]), xn[:, 2:L + 2])
    x1 = jnp.einsum('blc,cd->bld', xm, p['w1'])
    xb = jnp.einsum('blc,cd->bld', x, p['wb'])

    def convk(inp, w):
        k = w.shape[0]
        pd = (k - 1) // 2
        ip = jnp.pad(inp, ((0, 0), (pd, pd), (0, 0)))
        return sum(jnp.einsum('blc,cd->bld', ip[:, t:t + L], w[t]) for t in range(k))

    y = jnp.concatenate([x1, convk(xb, p['w2']), convk(xb, p['w3']), convk(xb, p['w4'])],
                        axis=-1)
    return _ref_pool2(jnp.maximum(_ref_bn(y, p['gamma'], p['beta']), 0.0))


def reference_pointwise(x, p, *, stride=1, relu=False, pool=False):
    if stride > 1:
        x = x[:, ::stride, :]
    y = _ref_bn(jnp.einsum('blc,cd->bld', x, p['w']), p['gamma'], p['beta'])
    if relu:
        y = jnp.maximum(y, 0.0)
    if pool:
        y = _ref_pool2(y)
    return y


def reference_model(x_ncl, params):
    x = jnp.transpose(x_ncl, (0, 2, 1)).astype(jnp.float32)
    x = reference_pointwise(x, params['proj'])
    s1 = reference_pointwise(x, params['short1'], stride=2, relu=True, pool=True)
    x = reference_base_block(x, params['bb1'])
    x = reference_base_block(x, params['bb2'])
    x = x + s1
    s2 = reference_pointwise(x, params['short2'], stride=2, relu=True, pool=True)
    x = reference_base_block(x, params['bb3'])
    x = reference_base_block(x, params['bb4'])
    x = x + s2
    feat = jnp.mean(x, axis=1)
    return feat @ params['fc_w'] + params['fc_b'].reshape(1, -1)


# ------------------------------------------------------------------------ parameters

def init_params(key, in_channel, d_model, num_classes):
    dim = d_model // 4

    def bn(k, c):
        kg, kb = jax.random.split(k)
        return (1.0 + 0.1 * jax.random.normal(kg, (c,), jnp.float32),
                0.1 * jax.random.normal(kb, (c,), jnp.float32))

    def pw(k, cin, cout):
        kw, kbn = jax.random.split(k)
        g, b = bn(kbn, cout)
        return {'w': 0.3 * jax.random.normal(kw, (cin, cout), jnp.float32),
                'gamma': g, 'beta': b}

    def bb(k):
        k1, k2, k3, k4, k5, kbn = jax.random.split(k, 6)
        g, b = bn(kbn, d_model)
        return {'w1': 0.3 * jax.random.normal(k1, (d_model, dim), jnp.float32),
                'wb': 0.3 * jax.random.normal(k2, (d_model, dim), jnp.float32),
                'w2': 0.3 * jax.random.normal(k3, (3, dim, dim), jnp.float32),
                'w3': 0.3 * jax.random.normal(k4, (5, dim, dim), jnp.float32),
                'w4': 0.3 * jax.random.normal(k5, (7, dim, dim), jnp.float32),
                'gamma': g, 'beta': b}

    ks = jax.random.split(key, 9)
    return {'proj': pw(ks[0], in_channel, d_model),
            'short1': pw(ks[1], d_model, d_model),
            'short2': pw(ks[2], d_model, d_model),
            'bb1': bb(ks[3]), 'bb2': bb(ks[4]), 'bb3': bb(ks[5]), 'bb4': bb(ks[6]),
            'fc_w': 0.3 * jax.random.normal(ks[7], (d_model, num_classes), jnp.float32),
            'fc_b': 0.1 * jax.random.normal(ks[8], (num_classes,), jnp.float32)}


if __name__ == "__main__":
    B, in_channel, L = 2, 1, 32
    d_model, num_classes = 32, 10

    root = jax.random.PRNGKey(0)
    kp, kx = jax.random.split(root)
    params = init_params(kp, in_channel, d_model, num_classes)
    x = jax.random.normal(kx, (B, in_channel, L), jnp.float32)

    packed = prepare_params(params, L)    # one-time weight packing, hoisted out of the forward

    logits = jax.block_until_ready(jax.jit(mini_inception_time)(x, packed))
    ref = reference_model(x, params)
    np.testing.assert_allclose(np.asarray(logits), np.asarray(ref), rtol=5e-2, atol=1e-1)

    print("KERNEL_OK")
</pallas_src>

<mosaic_0001>
module attributes {stable_mosaic.version = 11 : i64} {
  func.func @model_kernel(%arg0: memref<2x32x1xf32, #tpu.memory_space<vmem>>, %arg1: memref<1x32xf32, #tpu.memory_space<vmem>>, %arg2: memref<2x32xf32, #tpu.memory_space<vmem>>, %arg3: memref<32x32xbf16, #tpu.memory_space<vmem>>, %arg4: memref<2x32xf32, #tpu.memory_space<vmem>>, %arg5: memref<32x32xbf16, #tpu.memory_space<vmem>>, %arg6: memref<2x32xf32, #tpu.memory_space<vmem>>, %arg7: memref<256x32xbf16, #tpu.memory_space<vmem>>, %arg8: memref<2x32xf32, #tpu.memory_space<vmem>>, %arg9: memref<256x32xbf16, #tpu.memory_space<vmem>>, %arg10: memref<2x32xf32, #tpu.memory_space<vmem>>, %arg11: memref<256x32xbf16, #tpu.memory_space<vmem>>, %arg12: memref<2x32xf32, #tpu.memory_space<vmem>>, %arg13: memref<256x32xbf16, #tpu.memory_space<vmem>>, %arg14: memref<2x32xf32, #tpu.memory_space<vmem>>, %arg15: memref<32x10xbf16, #tpu.memory_space<vmem>>, %arg16: memref<1x10xf32, #tpu.memory_space<vmem>>, %arg17: memref<32x32xf32, #tpu.memory_space<vmem>>, %arg18: memref<16x16xf32, #tpu.memory_space<vmem>>, %arg19: memref<8x8xf32, #tpu.memory_space<vmem>>, %arg20: memref<4x4xf32, #tpu.memory_space<vmem>>, %arg21: memref<2x10xf32, #tpu.memory_space<vmem>>, %arg22: memref<2x32x256xf32, #tpu.memory_space<vmem>>) attributes {dimension_semantics = [], scalar_prefetch = 0 : i64, scratch_operands = 1 : i64, tpu.core_type = #tpu.core_type<tc>} {
    %c0 = arith.constant 0 : index
    %c0_0 = arith.constant 0 : index
    %c0_1 = arith.constant 0 : index
    %0 = vector.load %arg0[%c0, %c0_0, %c0_1] : memref<2x32x1xf32, #tpu.memory_space<vmem>>, vector<2x32x1xf32>
    %c0_2 = arith.constant 0 : index
    %c0_3 = arith.constant 0 : index
    %1 = vector.load %arg1[%c0_2, %c0_3] : memref<1x32xf32, #tpu.memory_space<vmem>>, vector<1x32xf32>
    %2 = vector.shape_cast %1 : vector<1x32xf32> to vector<1x1x32xf32>
    %3 = vector.broadcast %0 : vector<2x32x1xf32> to vector<2x32x32xf32>
    %4 = vector.broadcast %2 : vector<1x1x32xf32> to vector<2x32x32xf32>
    %5 = arith.mulf %3, %4 : vector<2x32x32xf32>
    %c0_4 = arith.constant 0 : index
    %c0_5 = arith.constant 0 : index
    %6 = vector.load %arg2[%c0_4, %c0_5] : memref<2x32xf32, #tpu.memory_space<vmem>>, vector<1x32xf32>
    %c1 = arith.constant 1 : index
    %c0_6 = arith.constant 0 : index
    %7 = vector.load %arg2[%c1, %c0_6] : memref<2x32xf32, #tpu.memory_space<vmem>>, vector<1x32xf32>
    %cst = arith.constant dense<0.000000e+00> : vector<32xf32>
    %8 = vector.multi_reduction <add>, %5, %cst [0, 1] : vector<2x32x32xf32> to vector<32xf32>
    %9 = vector.shape_cast %8 : vector<32xf32> to vector<1x1x32xf32>
    %cst_7 = arith.constant 6.400000e+01 : f32
    %10 = vector.broadcast %cst_7 : f32 to vector<1x1x32xf32>
    %11 = arith.divf %9, %10 : vector<1x1x32xf32>
    %12 = vector.broadcast %11 : vector<1x1x32xf32> to vector<2x32x32xf32>
    %13 = arith.subf %5, %12 : vector<2x32x32xf32>
    %14 = arith.mulf %13, %13 : vector<2x32x32xf32>
    %cst_8 = arith.constant dense<0.000000e+00> : vector<32xf32>
    %15 = vector.multi_reduction <add>, %14, %cst_8 [0, 1] : vector<2x32x32xf32> to vector<32xf32>
    %16 = vector.shape_cast %15 : vector<32xf32> to vector<1x1x32xf32>
    %cst_9 = arith.constant 6.400000e+01 : f32
    %17 = vector.broadcast %cst_9 : f32 to vector<1x1x32xf32>
    %18 = arith.divf %16, %17 : vector<1x1x32xf32>
    %cst_10 = arith.constant 9.99999974E-6 : f32
    %19 = vector.broadcast %cst_10 : f32 to vector<1x1x32xf32>
    %20 = arith.addf %18, %19 : vector<1x1x32xf32>
    %21 = math.rsqrt %20 : vector<1x1x32xf32>
    %22 = vector.shape_cast %6 : vector<1x32xf32> to vector<1x1x32xf32>
    %23 = arith.mulf %22, %21 : vector<1x1x32xf32>
    %24 = vector.broadcast %23 : vector<1x1x32xf32> to vector<2x32x32xf32>
    %25 = arith.mulf %13, %24 : vector<2x32x32xf32>
    %26 = vector.shape_cast %7 : vector<1x32xf32> to vector<1x1x32xf32>
    %27 = vector.broadcast %26 : vector<1x1x32xf32> to vector<2x32x32xf32>
    %28 = arith.addf %25, %27 : vector<2x32x32xf32>
    %c0_11 = arith.constant 0 : index
    %c0_12 = arith.constant 0 : index
    %29 = vector.load %arg17[%c0_11, %c0_12] : memref<32x32xf32, #tpu.memory_space<vmem>>, vector<32x32xf32>
    %30 = vector.shape_cast %29 : vector<32x32xf32> to vector<1x32x32xf32>
    %31 = vector.broadcast %30 : vector<1x32x32xf32> to vector<2x32x32xf32>
    "tpu.trace_start"() <{level = 10 : i32, message = "bpl,bld->bpd"}> : () -> ()
    %cst_13 = arith.constant dense<0.000000e+00> : vector<2x32x32xf32>
    %32 = tpu.matmul %31, %28, %cst_13 {dimension_numbers = #tpu.dot_dimension_numbers<[2], [1], [1], [2], [0, 0, 0, 1, 1, 2], [0], [0]>} : vector<2x32x32xf32>, vector<2x32x32xf32>, vector<2x32x32xf32> -> vector<2x32x32xf32>
    "tpu.trace_stop"() : () -> ()
    %33 = vector.extract_strided_slice %32 {offsets = [0, 0, 0], sizes = [2, 16, 32], strides = [1, 1, 1]} : vector<2x32x32xf32> to vector<2x16x32xf32>
    %34 = arith.truncf %33 : vector<2x16x32xf32> to vector<2x16x32xbf16>
    %c0_14 = arith.constant 0 : index
    %c0_15 = arith.constant 0 : index
    %35 = vector.load %arg3[%c0_14, %c0_15] : memref<32x32xbf16, #tpu.memory_space<vmem>>, vector<32x32xbf16>
    "tpu.trace_start"() <{level = 10 : i32, message = "blc,cd->bld"}> : () -> ()
    %cst_16 = arith.constant dense<0.000000e+00> : vector<2x16x32xf32>
    %36 = tpu.matmul %34, %35, %cst_16 {dimension_numbers = #tpu.dot_dimension_numbers<[2], [0], [0, 1], [1], [0, 0, 0, 1, 1, 1], [], []>} : vector<2x16x32xbf16>, vector<32x32xbf16>, vector<2x16x32xf32> -> vector<2x16x32xf32>
    "tpu.trace_stop"() : () -> ()
    %c0_17 = arith.constant 0 : index
    %c0_18 = arith.constant 0 : index
    %37 = vector.load %arg4[%c0_17, %c0_18] : memref<2x32xf32, #tpu.memory_space<vmem>>, vector<1x32xf32>
    %c1_19 = arith.constant 1 : index
    %c0_20 = arith.constant 0 : index
    %38 = vector.load %arg4[%c1_19, %c0_20] : memref<2x32xf32, #tpu.memory_space<vmem>>, vector<1x32xf32>
    %cst_21 = arith.constant dense<0.000000e+00> : vector<32xf32>
    %39 = vector.multi_reduction <add>, %36, %cst_21 [0, 1] : vector<2x16x32xf32> to vector<32xf32>
    %40 = vector.shape_cast %39 : vector<32xf32> to vector<1x1x32xf32>
    %cst_22 = arith.constant 3.200000e+01 : f32
    %41 = vector.broadcast %cst_22 : f32 to vector<1x1x32xf32>
    %42 = arith.divf %40, %41 : vector<1x1x32xf32>
    %43 = vector.broadcast %42 : vector<1x1x32xf32> to vector<2x16x32xf32>
    %44 = arith.subf %36, %43 : vector<2x16x32xf32>
    %45 = arith.mulf %44, %44 : vector<2x16x32xf32>
    %cst_23 = arith.constant dense<0.000000e+00> : vector<32xf32>
    %46 = vector.multi_reduction <add>, %45, %cst_23 [0, 1] : vector<2x16x32xf32> to vector<32xf32>
    %47 = vector.shape_cast %46 : vector<32xf32> to vector<1x1x32xf32>
    %cst_24 = arith.constant 3.200000e+01 : f32
    %48 = vector.broadcast %cst_24 : f32 to vector<1x1x32xf32>
    %49 = arith.divf %47, %48 : vector<1x1x32xf32>
    %cst_25 = arith.constant 9.99999974E-6 : f32
    %50 = vector.broadcast %cst_25 : f32 to vector<1x1x32xf32>
    %51 = arith.addf %49, %50 : vector<1x1x32xf32>
    %52 = math.rsqrt %51 : vector<1x1x32xf32>
    %53 = vector.shape_cast %37 : vector<1x32xf32> to vector<1x1x32xf32>
    %54 = arith.mulf %53, %52 : vector<1x1x32xf32>
    %55 = vector.broadcast %54 : vector<1x1x32xf32> to vector<2x16x32xf32>
    %56 = arith.mulf %44, %55 : vector<2x16x32xf32>
    %57 = vector.shape_cast %38 : vector<1x32xf32> to vector<1x1x32xf32>
    %58 = vector.broadcast %57 : vector<1x1x32xf32> to vector<2x16x32xf32>
    %59 = arith.addf %56, %58 : vector<2x16x32xf32>
    %cst_26 = arith.constant 0.000000e+00 : f32
    %60 = vector.broadcast %cst_26 : f32 to vector<2x16x32xf32>
    %61 = arith.maximumf %59, %60 : vector<2x16x32xf32>
    %c0_27 = arith.constant 0 : index
    %c0_28 = arith.constant 0 : index
    %62 = vector.load %arg18[%c0_27, %c0_28] : memref<16x16xf32, #tpu.memory_space<vmem>>, vector<16x16xf32>
    %63 = vector.shape_cast %62 : vector<16x16xf32> to vector<1x16x16xf32>
    %64 = vector.broadcast %63 : vector<1x16x16xf32> to vector<2x16x16xf32>
    "tpu.trace_start"() <{level = 10 : i32, message = "bpl,bld->bpd"}> : () -> ()
    %cst_29 = arith.constant dense<0.000000e+00> : vector<2x16x32xf32>
    %65 = tpu.matmul %64, %61, %cst_29 {dimension_numbers = #tpu.dot_dimension_numbers<[2], [1], [1], [2], [0, 0, 0, 1, 1, 2], [0], [0]>} : vector<2x16x16xf32>, vector<2x16x32xf32>, vector<2x16x32xf32> -> vector<2x16x32xf32>
    "tpu.trace_stop"() : () -> ()
    %66 = vector.extract_strided_slice %65 {offsets = [0, 0, 0], sizes = [2, 8, 32], strides = [1, 1, 1]} : vector<2x16x32xf32> to vector<2x8x32xf32>
    %67 = vector.extract_strided_slice %65 {offsets = [0, 8, 0], sizes = [2, 8, 32], strides = [1, 1, 1]} : vector<2x16x32xf32> to vector<2x8x32xf32>
    %68 = arith.maximumf %66, %67 : vector<2x8x32xf32>
    %cst_30 = arith.constant 0.000000e+00 : f32
    %69 = vector.broadcast %cst_30 : f32 to vector<2x32x256xf32>
    %c0_31 = arith.constant 0 : index
    %c0_32 = arith.constant 0 : index
    %c0_33 = arith.constant 0 : index
    %70 = vector.load %arg22[%c0_31, %c0_32, %c0_33] : memref<2x32x256xf32, #tpu.memory_space<vmem>>, vector<2x32x256xf32>
    tpu.vector_store %arg22[%c0_31, %c0_32, %c0_33], %69 {strides = array<i32>} : memref<2x32x256xf32, #tpu.memory_space<vmem>>, vector<2x32x256xf32>,
    %71 = vector.extract_strided_slice %28 {offsets = [0, 0, 0], sizes = [2, 29, 32], strides = [1, 1, 1]} : vector<2x32x32xf32> to vector<2x29x32xf32>
    %c0_34 = arith.constant 0 : index
    %c3 = arith.constant 3 : index
    %c32 = arith.constant 32 : index
    %72 = vector.load %arg22[%c0_34, %c3, %c32] : memref<2x32x256xf32, #tpu.memory_space<vmem>>, vector<2x29x32xf32>
    tpu.vector_store %arg22[%c0_34, %c3, %c32], %71 {strides = array<i32>} : memref<2x32x256xf32, #tpu.memory_space<vmem>>, vector<2x29x32xf32>,
    %73 = vector.extract_strided_slice %28 {offsets = [0, 0, 0], sizes = [2, 30, 32], strides = [1, 1, 1]} : vector<2x32x32xf32> to vector<2x30x32xf32>
    %c0_35 = arith.constant 0 : index
    %c2 = arith.constant 2 : index
    %c64 = arith.constant 64 : index
    %74 = vector.load %arg22[%c0_35, %c2, %c64] : memref<2x32x256xf32, #tpu.memory_space<vmem>>, vector<2x30x32xf32>
    tpu.vector_store %arg22[%c0_35, %c2, %c64], %73 {strides = array<i32>} : memref<2x32x256xf32, #tpu.memory_space<vmem>>, vector<2x30x32xf32>,
    %75 = vector.extract_strided_slice %28 {offsets = [0, 0, 0], sizes = [2, 31, 32], strides = [1, 1, 1]} : vector<2x32x32xf32> to vector<2x31x32xf32>
    %c0_36 = arith.constant 0 : index
    %c1_37 = arith.constant 1 : index
    %c96 = arith.constant 96 : index
    %76 = vector.load %arg22[%c0_36, %c1_37, %c96] : memref<2x32x256xf32, #tpu.memory_space<vmem>>, vector<2x31x32xf32>
    tpu.vector_store %arg22[%c0_36, %c1_37, %c96], %75 {strides = array<i32>} : memref<2x32x256xf32, #tpu.memory_space<vmem>>, vector<2x31x32xf32>,
    %c0_38 = arith.constant 0 : index
    %c0_39 = arith.constant 0 : index
    %c128 = arith.constant 128 : index
    %77 = vector.load %arg22[%c0_38, %c0_39, %c128] : memref<2x32x256xf32, #tpu.memory_space<vmem>>, vector<2x32x32xf32>
    tpu.vector_store %arg22[%c0_38, %c0_39, %c128], %28 {strides = array<i32>} : memref<2x32x256xf32, #tpu.memory_space<vmem>>, vector<2x32x32xf32>,
    %78 = vector.extract_strided_slice %28 {offsets = [0, 1, 0], sizes = [2, 31, 32], strides = [1, 1, 1]} : vector<2x32x32xf32> to vector<2x31x32xf32>
    %c0_40 = arith.constant 0 : index
    %c0_41 = arith.constant 0 : index
    %c160 = arith.constant 160 : index
    %79 = vector.load %arg22[%c0_40, %c0_41, %c160] : memref<2x32x256xf32, #tpu.memory_space<vmem>>, vector<2x31x32xf32>
    tpu.vector_store %arg22[%c0_40, %c0_41, %c160], %78 {strides = array<i32>} : memref<2x32x256xf32, #tpu.memory_space<vmem>>, vector<2x31x32xf32>,
    %80 = vector.extract_strided_slice %28 {offsets = [0, 2, 0], sizes = [2, 30, 32], strides = [1, 1, 1]} : vector<2x32x32xf32> to vector<2x30x32xf32>
    %c0_42 = arith.constant 0 : index
    %c0_43 = arith.constant 0 : index
    %c192 = arith.constant 192 : index
    %81 = vector.load %arg22[%c0_42, %c0_43, %c192] : memref<2x32x256xf32, #tpu.memory_space<vmem>>, vector<2x30x32xf32>
    tpu.vector_store %arg22[%c0_42, %c0_43, %c192], %80 {strides = array<i32>} : memref<2x32x256xf32, #tpu.memory_space<vmem>>, vector<2x30x32xf32>,
    %82 = vector.extract_strided_slice %28 {offsets = [0, 3, 0], sizes = [2, 29, 32], strides = [1, 1, 1]} : vector<2x32x32xf32> to vector<2x29x32xf32>
    %c0_44 = arith.constant 0 : index
    %c0_45 = arith.constant 0 : index
    %c224 = arith.constant 224 : index
    %83 = vector.load %arg22[%c0_44, %c0_45, %c224] : memref<2x32x256xf32, #tpu.memory_space<vmem>>, vector<2x29x32xf32>
    tpu.vector_store %arg22[%c0_44, %c0_45, %c224], %82 {strides = array<i32>} : memref<2x32x256xf32, #tpu.memory_space<vmem>>, vector<2x29x32xf32>,
    %84 = tpu.iota {dimensions = array<i32: 1>} : vector<2x32x32xi32>
    %c0_i32 = arith.constant 0 : i32
    %85 = vector.broadcast %c0_i32 : i32 to vector<2x32x32xi32>
    %86 = arith.cmpi eq, %84, %85 : vector<2x32x32xi32>
    %c0_46 = arith.constant 0 : index
    %c0_47 = arith.constant 0 : index
    %c96_48 = arith.constant 96 : index
    %87 = vector.load %arg22[%c0_46, %c0_47, %c96_48] : memref<2x32x256xf32, #tpu.memory_space<vmem>>, vector<2x32x32xf32>
    %cst_49 = arith.constant 0xFF800000 : f32
    %88 = vector.broadcast %cst_49 : f32 to vector<2x32x32xf32>
    %89 = arith.select %86, %88, %87 : vector<2x32x32xi1>, vector<2x32x32xf32>
    %c31_i32 = arith.constant 31 : i32
    %90 = vector.broadcast %c31_i32 : i32 to vector<2x32x32xi32>
    %91 = arith.cmpi eq, %84, %90 : vector<2x32x32xi32>
    %c0_50 = arith.constant 0 : index
    %c0_51 = arith.constant 0 : index
    %c160_52 = arith.constant 160 : index
    %92 = vector.load %arg22[%c0_50, %c0_51, %c160_52] : memref<2x32x256xf32, #tpu.memory_space<vmem>>, vector<2x32x32xf32>
    %cst_53 = arith.constant 0xFF800000 : f32
    %93 = vector.broadcast %cst_53 : f32 to vector<2x32x32xf32>
    %94 = arith.select %91, %93, %92 : vector<2x32x32xi1>, vector<2x32x32xf32>
    %95 = arith.maximumf %89, %28 : vector<2x32x32xf32>
    %96 = arith.maximumf %95, %94 : vector<2x32x32xf32>
    %c0_54 = arith.constant 0 : index
    %c0_55 = arith.constant 0 : index
    %c0_56 = arith.constant 0 : index
    %97 = vector.load %arg22[%c0_54, %c0_55, %c0_56] : memref<2x32x256xf32, #tpu.memory_space<vmem>>, vector<2x32x32xf32>
    tpu.vector_store %arg22[%c0_54, %c0_55, %c0_56], %96 {strides = array<i32>} : memref<2x32x256xf32, #tpu.memory_space<vmem>>, vector<2x32x32xf32>,
    %c0_57 = arith.constant 0 : index
    %c0_58 = arith.constant 0 : index
    %c0_59 = arith.constant 0 : index
    %98 = vector.load %arg22[%c0_57, %c0_58, %c0_59] : memref<2x32x256xf32, #tpu.memory_space<vmem>>, vector<2x32x256xf32>
    %99 = arith.truncf %98 : vector<2x32x256xf32> to vector<2x32x256xbf16>
    %c0_60 = arith.constant 0 : index
    %c0_61 = arith.constant 0 : index
    %100 = vector.load %arg7[%c0_60, %c0_61] : memref<256x32xbf16, #tpu.memory_space<vmem>>, vector<256x32xbf16>
    "tpu.trace_start"() <{level = 10 : i32, message = "blk,kd->bld"}> : () -> ()
    %cst_62 = arith.constant dense<0.000000e+00> : vector<2x32x32xf32>
    %101 = tpu.matmul %99, %100, %cst_62 {dimension_numbers = #tpu.dot_dimension_numbers<[2], [0], [0, 1], [1], [0, 0, 0, 1, 1, 1], [], []>} : vector<2x32x256xbf16>, vector<256x32xbf16>, vector<2x32x32xf32> -> vector<2x32x32xf32>
    "tpu.trace_stop"() : () -> ()
    %c0_63 = arith.constant 0 : index
    %c0_64 = arith.constant 0 : index
    %102 = vector.load %arg8[%c0_63, %c0_64] : memref<2x32xf32, #tpu.memory_space<vmem>>, vector<1x32xf32>
    %c1_65 = arith.constant 1 : index
    %c0_66 = arith.constant 0 : index
    %103 = vector.load %arg8[%c1_65, %c0_66] : memref<2x32xf32, #tpu.memory_space<vmem>>, vector<1x32xf32>
    %cst_67 = arith.constant dense<0.000000e+00> : vector<32xf32>
    %104 = vector.multi_reduction <add>, %101, %cst_67 [0, 1] : vector<2x32x32xf32> to vector<32xf32>
    %105 = vector.shape_cast %104 : vector<32xf32> to vector<1x1x32xf32>
    %cst_68 = arith.constant 6.400000e+01 : f32
    %106 = vector.broadcast %cst_68 : f32 to vector<1x1x32xf32>
    %107 = arith.divf %105, %106 : vector<1x1x32xf32>
    %108 = vector.broadcast %107 : vector<1x1x32xf32> to vector<2x32x32xf32>
    %109 = arith.subf %101, %108 : vector<2x32x32xf32>
    %110 = arith.mulf %109, %109 : vector<2x32x32xf32>
    %cst_69 = arith.constant dense<0.000000e+00> : vector<32xf32>
    %111 = vector.multi_reduction <add>, %110, %cst_69 [0, 1] : vector<2x32x32xf32> to vector<32xf32>
    %112 = vector.shape_cast %111 : vector<32xf32> to vector<1x1x32xf32>
    %cst_70 = arith.constant 6.400000e+01 : f32
    %113 = vector.broadcast %cst_70 : f32 to vector<1x1x32xf32>
    %114 = arith.divf %112, %113 : vector<1x1x32xf32>
    %cst_71 = arith.constant 9.99999974E-6 : f32
    %115 = vector.broadcast %cst_71 : f32 to vector<1x1x32xf32>
    %116 = arith.addf %114, %115 : vector<1x1x32xf32>
    %117 = math.rsqrt %116 : vector<1x1x32xf32>
    %118 = vector.shape_cast %102 : vector<1x32xf32> to vector<1x1x32xf32>
    %119 = arith.mulf %118, %117 : vector<1x1x32xf32>
    %120 = vector.broadcast %119 : vector<1x1x32xf32> to vector<2x32x32xf32>
    %121 = arith.mulf %109, %120 : vector<2x32x32xf32>
    %122 = vector.shape_cast %103 : vector<1x32xf32> to vector<1x1x32xf32>
    %123 = vector.broadcast %122 : vector<1x1x32xf32> to vector<2x32x32xf32>
    %124 = arith.addf %121, %123 : vector<2x32x32xf32>
    %cst_72 = arith.constant 0.000000e+00 : f32
    %125 = vector.broadcast %cst_72 : f32 to vector<2x32x32xf32>
    %126 = arith.maximumf %124, %125 : vector<2x32x32xf32>
    %c0_73 = arith.constant 0 : index
    %c0_74 = arith.constant 0 : index
    %127 = vector.load %arg17[%c0_73, %c0_74] : memref<32x32xf32, #tpu.memory_space<vmem>>, vector<32x32xf32>
    %128 = vector.shape_cast %127 : vector<32x32xf32> to vector<1x32x32xf32>
    %129 = vector.broadcast %128 : vector<1x32x32xf32> to vector<2x32x32xf32>
    "tpu.trace_start"() <{level = 10 : i32, message = "bpl,bld->bpd"}> : () -> ()
    %cst_75 = arith.constant dense<0.000000e+00> : vector<2x32x32xf32>
    %130 = tpu.matmul %129, %126, %cst_75 {dimension_numbers = #tpu.dot_dimension_numbers<[2], [1], [1], [2], [0, 0, 0, 1, 1, 2], [0], [0]>} : vector<2x32x32xf32>, vector<2x32x32xf32>, vector<2x32x32xf32> -> vector<2x32x32xf32>
    "tpu.trace_stop"() : () -> ()
    %131 = vector.extract_strided_slice %130 {offsets = [0, 0, 0], sizes = [2, 16, 32], strides = [1, 1, 1]} : vector<2x32x32xf32> to vector<2x16x32xf32>
    %132 = vector.extract_strided_slice %130 {offsets = [0, 16, 0], sizes = [2, 16, 32], strides = [1, 1, 1]} : vector<2x32x32xf32> to vector<2x16x32xf32>
    %133 = arith.maximumf %131, %132 : vector<2x16x32xf32>
    %cst_76 = arith.constant 0.000000e+00 : f32
    %134 = vector.broadcast %cst_76 : f32 to vector<2x16x256xf32>
    %c0_77 = arith.constant 0 : index
    %c0_78 = arith.constant 0 : index
    %c0_79 = arith.constant 0 : index
    %135 = vector.load %arg22[%c0_77, %c0_78, %c0_79] : memref<2x32x256xf32, #tpu.memory_space<vmem>>, vector<2x16x256xf32>
    tpu.vector_store %arg22[%c0_77, %c0_78, %c0_79], %134 {strides = array<i32>} : memref<2x32x256xf32, #tpu.memory_space<vmem>>, vector<2x16x256xf32>,
    %136 = vector.extract_strided_slice %133 {offsets = [0, 0, 0], sizes = [2, 13, 32], strides = [1, 1, 1]} : vector<2x16x32xf32> to vector<2x13x32xf32>
    %c0_80 = arith.constant 0 : index
    %c3_81 = arith.constant 3 : index
    %c32_82 = arith.constant 32 : index
    %137 = vector.load %arg22[%c0_80, %c3_81, %c32_82] : memref<2x32x256xf32, #tpu.memory_space<vmem>>, vector<2x13x32xf32>
    tpu.vector_store %arg22[%c0_80, %c3_81, %c32_82], %136 {strides = array<i32>} : memref<2x32x256xf32, #tpu.memory_space<vmem>>, vector<2x13x32xf32>,
    %138 = vector.extract_strided_slice %133 {offsets = [0, 0, 0], sizes = [2, 14, 32], strides = [1, 1, 1]} : vector<2x16x32xf32> to vector<2x14x32xf32>
    %c0_83 = arith.constant 0 : index
    %c2_84 = arith.constant 2 : index
    %c64_85 = arith.constant 64 : index
    %139 = vector.load %arg22[%c0_83, %c2_84, %c64_85] : memref<2x32x256xf32, #tpu.memory_space<vmem>>, vector<2x14x32xf32>
    tpu.vector_store %arg22[%c0_83, %c2_84, %c64_85], %138 {strides = array<i32>} : memref<2x32x256xf32, #tpu.memory_space<vmem>>, vector<2x14x32xf32>,
    %140 = vector.extract_strided_slice %133 {offsets = [0, 0, 0], sizes = [2, 15, 32], strides = [1, 1, 1]} : vector<2x16x32xf32> to vector<2x15x32xf32>
    %c0_86 = arith.constant 0 : index
    %c1_87 = arith.constant 1 : index
    %c96_88 = arith.constant 96 : index
    %141 = vector.load %arg22[%c0_86, %c1_87, %c96_88] : memref<2x32x256xf32, #tpu.memory_space<vmem>>, vector<2x15x32xf32>
    tpu.vector_store %arg22[%c0_86, %c1_87, %c96_88], %140 {strides = array<i32>} : memref<2x32x256xf32, #tpu.memory_space<vmem>>, vector<2x15x32xf32>,
    %c0_89 = arith.constant 0 : index
    %c0_90 = arith.constant 0 : index
    %c128_91 = arith.constant 128 : index
    %142 = vector.load %arg22[%c0_89, %c0_90, %c128_91] : memref<2x32x256xf32, #tpu.memory_space<vmem>>, vector<2x16x32xf32>
    tpu.vector_store %arg22[%c0_89, %c0_90, %c128_91], %133 {strides = array<i32>} : memref<2x32x256xf32, #tpu.memory_space<vmem>>, vector<2x16x32xf32>,
    %143 = vector.extract_strided_slice %133 {offsets = [0, 1, 0], sizes = [2, 15, 32], strides = [1, 1, 1]} : vector<2x16x32xf32> to vector<2x15x32xf32>
    %c0_92 = arith.constant 0 : index
    %c0_93 = arith.constant 0 : index
    %c160_94 = arith.constant 160 : index
    %144 = vector.load %arg22[%c0_92, %c0_93, %c160_94] : memref<2x32x256xf32, #tpu.memory_space<vmem>>, vector<2x15x32xf32>
    tpu.vector_store %arg22[%c0_92, %c0_93, %c160_94], %143 {strides = array<i32>} : memref<2x32x256xf32, #tpu.memory_space<vmem>>, vector<2x15x32xf32>,
    %145 = vector.extract_strided_slice %133 {offsets = [0, 2, 0], sizes = [2, 14, 32], strides = [1, 1, 1]} : vector<2x16x32xf32> to vector<2x14x32xf32>
    %c0_95 = arith.constant 0 : index
    %c0_96 = arith.constant 0 : index
    %c192_97 = arith.constant 192 : index
    %146 = vector.load %arg22[%c0_95, %c0_96, %c192_97] : memref<2x32x256xf32, #tpu.memory_space<vmem>>, vector<2x14x32xf32>
    tpu.vector_store %arg22[%c0_95, %c0_96, %c192_97], %145 {strides = array<i32>} : memref<2x32x256xf32, #tpu.memory_space<vmem>>, vector<2x14x32xf32>,
    %147 = vector.extract_strided_slice %133 {offsets = [0, 3, 0], sizes = [2, 13, 32], strides = [1, 1, 1]} : vector<2x16x32xf32> to vector<2x13x32xf32>
    %c0_98 = arith.constant 0 : index
    %c0_99 = arith.constant 0 : index
    %c224_100 = arith.constant 224 : index
    %148 = vector.load %arg22[%c0_98, %c0_99, %c224_100] : memref<2x32x256xf32, #tpu.memory_space<vmem>>, vector<2x13x32xf32>
    tpu.vector_store %arg22[%c0_98, %c0_99, %c224_100], %147 {strides = array<i32>} : memref<2x32x256xf32, #tpu.memory_space<vmem>>, vector<2x13x32xf32>,
    %149 = tpu.iota {dimensions = array<i32: 1>} : vector<2x16x32xi32>
    %c0_i32_101 = arith.constant 0 : i32
    %150 = vector.broadcast %c0_i32_101 : i32 to vector<2x16x32xi32>
    %151 = arith.cmpi eq, %149, %150 : vector<2x16x32xi32>
    %c0_102 = arith.constant 0 : index
    %c0_103 = arith.constant 0 : index
    %c96_104 = arith.constant 96 : index
    %152 = vector.load %arg22[%c0_102, %c0_103, %c96_104] : memref<2x32x256xf32, #tpu.memory_space<vmem>>, vector<2x16x32xf32>
    %cst_105 = arith.constant 0xFF800000 : f32
    %153 = vector.broadcast %cst_105 : f32 to vector<2x16x32xf32>
    %154 = arith.select %151, %153, %152 : vector<2x16x32xi1>, vector<2x16x32xf32>
    %c15_i32 = arith.constant 15 : i32
    %155 = vector.broadcast %c15_i32 : i32 to vector<2x16x32xi32>
    %156 = arith.cmpi eq, %149, %155 : vector<2x16x32xi32>
    %c0_106 = arith.constant 0 : index
    %c0_107 = arith.constant 0 : index
    %c160_108 = arith.constant 160 : index
    %157 = vector.load %arg22[%c0_106, %c0_107, %c160_108] : memref<2x32x256xf32, #tpu.memory_space<vmem>>, vector<2x16x32xf32>
    %cst_109 = arith.constant 0xFF800000 : f32
    %158 = vector.broadcast %cst_109 : f32 to vector<2x16x32xf32>
    %159 = arith.select %156, %158, %157 : vector<2x16x32xi1>, vector<2x16x32xf32>
    %160 = arith.maximumf %154, %133 : vector<2x16x32xf32>
    %161 = arith.maximumf %160, %159 : vector<2x16x32xf32>
    %c0_110 = arith.constant 0 : index
    %c0_111 = arith.constant 0 : index
    %c0_112 = arith.constant 0 : index
    %162 = vector.load %arg22[%c0_110, %c0_111, %c0_112] : memref<2x32x256xf32, #tpu.memory_space<vmem>>, vector<2x16x32xf32>
    tpu.vector_store %arg22[%c0_110, %c0_111, %c0_112], %161 {strides = array<i32>} : memref<2x32x256xf32, #tpu.memory_space<vmem>>, vector<2x16x32xf32>,
    %c0_113 = arith.constant 0 : index
    %c0_114 = arith.constant 0 : index
    %c0_115 = arith.constant 0 : index
    %163 = vector.load %arg22[%c0_113, %c0_114, %c0_115] : memref<2x32x256xf32, #tpu.memory_space<vmem>>, vector<2x16x256xf32>
    %164 = arith.truncf %163 : vector<2x16x256xf32> to vector<2x16x256xbf16>
    %c0_116 = arith.constant 0 : index
    %c0_117 = arith.constant 0 : index
    %165 = vector.load %arg9[%c0_116, %c0_117] : memref<256x32xbf16, #tpu.memory_space<vmem>>, vector<256x32xbf16>
    "tpu.trace_start"() <{level = 10 : i32, message = "blk,kd->bld"}> : () -> ()
    %cst_118 = arith.constant dense<0.000000e+00> : vector<2x16x32xf32>
    %166 = tpu.matmul %164, %165, %cst_118 {dimension_numbers = #tpu.dot_dimension_numbers<[2], [0], [0, 1], [1], [0, 0, 0, 1, 1, 1], [], []>} : vector<2x16x256xbf16>, vector<256x32xbf16>, vector<2x16x32xf32> -> vector<2x16x32xf32>
    "tpu.trace_stop"() : () -> ()
    %c0_119 = arith.constant 0 : index
    %c0_120 = arith.constant 0 : index
    %167 = vector.load %arg10[%c0_119, %c0_120] : memref<2x32xf32, #tpu.memory_space<vmem>>, vector<1x32xf32>
    %c1_121 = arith.constant 1 : index
    %c0_122 = arith.constant 0 : index
    %168 = vector.load %arg10[%c1_121, %c0_122] : memref<2x32xf32, #tpu.memory_space<vmem>>, vector<1x32xf32>
    %cst_123 = arith.constant dense<0.000000e+00> : vector<32xf32>
    %169 = vector.multi_reduction <add>, %166, %cst_123 [0, 1] : vector<2x16x32xf32> to vector<32xf32>
    %170 = vector.shape_cast %169 : vector<32xf32> to vector<1x1x32xf32>
    %cst_124 = arith.constant 3.200000e+01 : f32
    %171 = vector.broadcast %cst_124 : f32 to vector<1x1x32xf32>
    %172 = arith.divf %170, %171 : vector<1x1x32xf32>
    %173 = vector.broadcast %172 : vector<1x1x32xf32> to vector<2x16x32xf32>
    %174 = arith.subf %166, %173 : vector<2x16x32xf32>
    %175 = arith.mulf %174, %174 : vector<2x16x32xf32>
    %cst_125 = arith.constant dense<0.000000e+00> : vector<32xf32>
    %176 = vector.multi_reduction <add>, %175, %cst_125 [0, 1] : vector<2x16x32xf32> to vector<32xf32>
    %177 = vector.shape_cast %176 : vector<32xf32> to vector<1x1x32xf32>
    %cst_126 = arith.constant 3.200000e+01 : f32
    %178 = vector.broadcast %cst_126 : f32 to vector<1x1x32xf32>
    %179 = arith.divf %177, %178 : vector<1x1x32xf32>
    %cst_127 = arith.constant 9.99999974E-6 : f32
    %180 = vector.broadcast %cst_127 : f32 to vector<1x1x32xf32>
    %181 = arith.addf %179, %180 : vector<1x1x32xf32>
    %182 = math.rsqrt %181 : vector<1x1x32xf32>
    %183 = vector.shape_cast %167 : vector<1x32xf32> to vector<1x1x32xf32>
    %184 = arith.mulf %183, %182 : vector<1x1x32xf32>
    %185 = vector.broadcast %184 : vector<1x1x32xf32> to vector<2x16x32xf32>
    %186 = arith.mulf %174, %185 : vector<2x16x32xf32>
    %187 = vector.shape_cast %168 : vector<1x32xf32> to vector<1x1x32xf32>
    %188 = vector.broadcast %187 : vector<1x1x32xf32> to vector<2x16x32xf32>
    %189 = arith.addf %186, %188 : vector<2x16x32xf32>
    %cst_128 = arith.constant 0.000000e+00 : f32
    %190 = vector.broadcast %cst_128 : f32 to vector<2x16x32xf32>
    %191 = arith.maximumf %189, %190 : vector<2x16x32xf32>
    %c0_129 = arith.constant 0 : index
    %c0_130 = arith.constant 0 : index
    %192 = vector.load %arg18[%c0_129, %c0_130] : memref<16x16xf32, #tpu.memory_space<vmem>>, vector<16x16xf32>
    %193 = vector.shape_cast %192 : vector<16x16xf32> to vector<1x16x16xf32>
    %194 = vector.broadcast %193 : vector<1x16x16xf32> to vector<2x16x16xf32>
    "tpu.trace_start"() <{level = 10 : i32, message = "bpl,bld->bpd"}> : () -> ()
    %cst_131 = arith.constant dense<0.000000e+00> : vector<2x16x32xf32>
    %195 = tpu.matmul %194, %191, %cst_131 {dimension_numbers = #tpu.dot_dimension_numbers<[2], [1], [1], [2], [0, 0, 0, 1, 1, 2], [0], [0]>} : vector<2x16x16xf32>, vector<2x16x32xf32>, vector<2x16x32xf32> -> vector<2x16x32xf32>
    "tpu.trace_stop"() : () -> ()
    %196 = vector.extract_strided_slice %195 {offsets = [0, 0, 0], sizes = [2, 8, 32], strides = [1, 1, 1]} : vector<2x16x32xf32> to vector<2x8x32xf32>
    %197 = vector.extract_strided_slice %195 {offsets = [0, 8, 0], sizes = [2, 8, 32], strides = [1, 1, 1]} : vector<2x16x32xf32> to vector<2x8x32xf32>
    %198 = arith.maximumf %196, %197 : vector<2x8x32xf32>
    %199 = arith.addf %198, %68 : vector<2x8x32xf32>
    %c0_132 = arith.constant 0 : index
    %c0_133 = arith.constant 0 : index
    %200 = vector.load %arg19[%c0_132, %c0_133] : memref<8x8xf32, #tpu.memory_space<vmem>>, vector<8x8xf32>
    %201 = vector.shape_cast %200 : vector<8x8xf32> to vector<1x8x8xf32>
    %202 = vector.broadcast %201 : vector<1x8x8xf32> to vector<2x8x8xf32>
    "tpu.trace_start"() <{level = 10 : i32, message = "bpl,bld->bpd"}> : () -> ()
    %cst_134 = arith.constant dense<0.000000e+00> : vector<2x8x32xf32>
    %203 = tpu.matmul %202, %199, %cst_134 {dimension_numbers = #tpu.dot_dimension_numbers<[2], [1], [1], [2], [0, 0, 0, 1, 1, 2], [0], [0]>} : vector<2x8x8xf32>, vector<2x8x32xf32>, vector<2x8x32xf32> -> vector<2x8x32xf32>
    "tpu.trace_stop"() : () -> ()
    %204 = vector.extract_strided_slice %203 {offsets = [0, 0, 0], sizes = [2, 4, 32], strides = [1, 1, 1]} : vector<2x8x32xf32> to vector<2x4x32xf32>
    %205 = arith.truncf %204 : vector<2x4x32xf32> to vector<2x4x32xbf16>
    %c0_135 = arith.constant 0 : index
    %c0_136 = arith.constant 0 : index
    %206 = vector.load %arg5[%c0_135, %c0_136] : memref<32x32xbf16, #tpu.memory_space<vmem>>, vector<32x32xbf16>
    "tpu.trace_start"() <{level = 10 : i32, message = "blc,cd->bld"}> : () -> ()
    %cst_137 = arith.constant dense<0.000000e+00> : vector<2x4x32xf32>
    %207 = tpu.matmul %205, %206, %cst_137 {dimension_numbers = #tpu.dot_dimension_numbers<[2], [0], [0, 1], [1], [0, 0, 0, 1, 1, 1], [], []>} : vector<2x4x32xbf16>, vector<32x32xbf16>, vector<2x4x32xf32> -> vector<2x4x32xf32>
    "tpu.trace_stop"() : () -> ()
    %c0_138 = arith.constant 0 : index
    %c0_139 = arith.constant 0 : index
    %208 = vector.load %arg6[%c0_138, %c0_139] : memref<2x32xf32, #tpu.memory_space<vmem>>, vector<1x32xf32>
    %c1_140 = arith.constant 1 : index
    %c0_141 = arith.constant 0 : index
    %209 = vector.load %arg6[%c1_140, %c0_141] : memref<2x32xf32, #tpu.memory_space<vmem>>, vector<1x32xf32>
    %cst_142 = arith.constant dense<0.000000e+00> : vector<32xf32>
    %210 = vector.multi_reduction <add>, %207, %cst_142 [0, 1] : vector<2x4x32xf32> to vector<32xf32>
    %211 = vector.shape_cast %210 : vector<32xf32> to vector<1x1x32xf32>
    %cst_143 = arith.constant 8.000000e+00 : f32
    %212 = vector.broadcast %cst_143 : f32 to vector<1x1x32xf32>
    %213 = arith.divf %211, %212 : vector<1x1x32xf32>
    %214 = vector.broadcast %213 : vector<1x1x32xf32> to vector<2x4x32xf32>
    %215 = arith.subf %207, %214 : vector<2x4x32xf32>
    %216 = arith.mulf %215, %215 : vector<2x4x32xf32>
    %cst_144 = arith.constant dense<0.000000e+00> : vector<32xf32>
    %217 = vector.multi_reduction <add>, %216, %cst_144 [0, 1] : vector<2x4x32xf32> to vector<32xf32>
    %218 = vector.shape_cast %217 : vector<32xf32> to vector<1x1x32xf32>
    %cst_145 = arith.constant 8.000000e+00 : f32
    %219 = vector.broadcast %cst_145 : f32 to vector<1x1x32xf32>
    %220 = arith.divf %218, %219 : vector<1x1x32xf32>
    %cst_146 = arith.constant 9.99999974E-6 : f32
    %221 = vector.broadcast %cst_146 : f32 to vector<1x1x32xf32>
    %222 = arith.addf %220, %221 : vector<1x1x32xf32>
    %223 = math.rsqrt %222 : vector<1x1x32xf32>
    %224 = vector.shape_cast %208 : vector<1x32xf32> to vector<1x1x32xf32>
    %225 = arith.mulf %224, %223 : vector<1x1x32xf32>
    %226 = vector.broadcast %225 : vector<1x1x32xf32> to vector<2x4x32xf32>
    %227 = arith.mulf %215, %226 : vector<2x4x32xf32>
    %228 = vector.shape_cast %209 : vector<1x32xf32> to vector<1x1x32xf32>
    %229 = vector.broadcast %228 : vector<1x1x32xf32> to vector<2x4x32xf32>
    %230 = arith.addf %227, %229 : vector<2x4x32xf32>
    %cst_147 = arith.constant 0.000000e+00 : f32
    %231 = vector.broadcast %cst_147 : f32 to vector<2x4x32xf32>
    %232 = arith.maximumf %230, %231 : vector<2x4x32xf32>
    %c0_148 = arith.constant 0 : index
    %c0_149 = arith.constant 0 : index
    %233 = vector.load %arg20[%c0_148, %c0_149] : memref<4x4xf32, #tpu.memory_space<vmem>>, vector<4x4xf32>
    %234 = vector.shape_cast %233 : vector<4x4xf32> to vector<1x4x4xf32>
    %235 = vector.broadcast %234 : vector<1x4x4xf32> to vector<2x4x4xf32>
    "tpu.trace_start"() <{level = 10 : i32, message = "bpl,bld->bpd"}> : () -> ()
    %cst_150 = arith.constant dense<0.000000e+00> : vector<2x4x32xf32>
    %236 = tpu.matmul %235, %232, %cst_150 {dimension_numbers = #tpu.dot_dimension_numbers<[2], [1], [1], [2], [0, 0, 0, 1, 1, 2], [0], [0]>} : vector<2x4x4xf32>, vector<2x4x32xf32>, vector<2x4x32xf32> -> vector<2x4x32xf32>
    "tpu.trace_stop"() : () -> ()
    %237 = vector.extract_strided_slice %236 {offsets = [0, 0, 0], sizes = [2, 2, 32], strides = [1, 1, 1]} : vector<2x4x32xf32> to vector<2x2x32xf32>
    %238 = vector.extract_strided_slice %236 {offsets = [0, 2, 0], sizes = [2, 2, 32], strides = [1, 1, 1]} : vector<2x4x32xf32> to vector<2x2x32xf32>
    %239 = arith.maximumf %237, %238 : vector<2x2x32xf32>
    %cst_151 = arith.constant 0.000000e+00 : f32
    %240 = vector.broadcast %cst_151 : f32 to vector<2x8x256xf32>
    %c0_152 = arith.constant 0 : index
    %c0_153 = arith.constant 0 : index
    %c0_154 = arith.constant 0 : index
    %241 = vector.load %arg22[%c0_152, %c0_153, %c0_154] : memref<2x32x256xf32, #tpu.memory_space<vmem>>, vector<2x8x256xf32>
    tpu.vector_store %arg22[%c0_152, %c0_153, %c0_154], %240 {strides = array<i32>} : memref<2x32x256xf32, #tpu.memory_space<vmem>>, vector<2x8x256xf32>,
    %242 = vector.extract_strided_slice %199 {offsets = [0, 0, 0], sizes = [2, 5, 32], strides = [1, 1, 1]} : vector<2x8x32xf32> to vector<2x5x32xf32>
    %c0_155 = arith.constant 0 : index
    %c3_156 = arith.constant 3 : index
    %c32_157 = arith.constant 32 : index
    %243 = vector.load %arg22[%c0_155, %c3_156, %c32_157] : memref<2x32x256xf32, #tpu.memory_space<vmem>>, vector<2x5x32xf32>
    tpu.vector_store %arg22[%c0_155, %c3_156, %c32_157], %242 {strides = array<i32>} : memref<2x32x256xf32, #tpu.memory_space<vmem>>, vector<2x5x32xf32>,
    %244 = vector.extract_strided_slice %199 {offsets = [0, 0, 0], sizes = [2, 6, 32], strides = [1, 1, 1]} : vector<2x8x32xf32> to vector<2x6x32xf32>
    %c0_158 = arith.constant 0 : index
    %c2_159 = arith.constant 2 : index
    %c64_160 = arith.constant 64 : index
    %245 = vector.load %arg22[%c0_158, %c2_159, %c64_160] : memref<2x32x256xf32, #tpu.memory_space<vmem>>, vector<2x6x32xf32>
    tpu.vector_store %arg22[%c0_158, %c2_159, %c64_160], %244 {strides = array<i32>} : memref<2x32x256xf32, #tpu.memory_space<vmem>>, vector<2x6x32xf32>,
    %246 = vector.extract_strided_slice %199 {offsets = [0, 0, 0], sizes = [2, 7, 32], strides = [1, 1, 1]} : vector<2x8x32xf32> to vector<2x7x32xf32>
    %c0_161 = arith.constant 0 : index
    %c1_162 = arith.constant 1 : index
    %c96_163 = arith.constant 96 : index
    %247 = vector.load %arg22[%c0_161, %c1_162, %c96_163] : memref<2x32x256xf32, #tpu.memory_space<vmem>>, vector<2x7x32xf32>
    tpu.vector_store %arg22[%c0_161, %c1_162, %c96_163], %246 {strides = array<i32>} : memref<2x32x256xf32, #tpu.memory_space<vmem>>, vector<2x7x32xf32>,
    %c0_164 = arith.constant 0 : index
    %c0_165 = arith.constant 0 : index
    %c128_166 = arith.constant 128 : index
    %248 = vector.load %arg22[%c0_164, %c0_165, %c128_166] : memref<2x32x256xf32, #tpu.memory_space<vmem>>, vector<2x8x32xf32>
    tpu.vector_store %arg22[%c0_164, %c0_165, %c128_166], %199 {strides = array<i32>} : memref<2x32x256xf32, #tpu.memory_space<vmem>>, vector<2x8x32xf32>,
    %249 = vector.extract_strided_slice %199 {offsets = [0, 1, 0], sizes = [2, 7, 32], strides = [1, 1, 1]} : vector<2x8x32xf32> to vector<2x7x32xf32>
    %c0_167 = arith.constant 0 : index
    %c0_168 = arith.constant 0 : index
    %c160_169 = arith.constant 160 : index
    %250 = vector.load %arg22[%c0_167, %c0_168, %c160_169] : memref<2x32x256xf32, #tpu.memory_space<vmem>>, vector<2x7x32xf32>
    tpu.vector_store %arg22[%c0_167, %c0_168, %c160_169], %249 {strides = array<i32>} : memref<2x32x256xf32, #tpu.memory_space<vmem>>, vector<2x7x32xf32>,
    %251 = vector.extract_strided_slice %199 {offsets = [0, 2, 0], sizes = [2, 6, 32], strides = [1, 1, 1]} : vector<2x8x32xf32> to vector<2x6x32xf32>
    %c0_170 = arith.constant 0 : index
    %c0_171 = arith.constant 0 : index
    %c192_172 = arith.constant 192 : index
    %252 = vector.load %arg22[%c0_170, %c0_171, %c192_172] : memref<2x32x256xf32, #tpu.memory_space<vmem>>, vector<2x6x32xf32>
    tpu.vector_store %arg22[%c0_170, %c0_171, %c192_172], %251 {strides = array<i32>} : memref<2x32x256xf32, #tpu.memory_space<vmem>>, vector<2x6x32xf32>,
    %253 = vector.extract_strided_slice %199 {offsets = [0, 3, 0], sizes = [2, 5, 32], strides = [1, 1, 1]} : vector<2x8x32xf32> to vector<2x5x32xf32>
    %c0_173 = arith.constant 0 : index
    %c0_174 = arith.constant 0 : index
    %c224_175 = arith.constant 224 : index
    %254 = vector.load %arg22[%c0_173, %c0_174, %c224_175] : memref<2x32x256xf32, #tpu.memory_space<vmem>>, vector<2x5x32xf32>
    tpu.vector_store %arg22[%c0_173, %c0_174, %c224_175], %253 {strides = array<i32>} : memref<2x32x256xf32, #tpu.memory_space<vmem>>, vector<2x5x32xf32>,
    %255 = tpu.iota {dimensions = array<i32: 1>} : vector<2x8x32xi32>
    %c0_i32_176 = arith.constant 0 : i32
    %256 = vector.broadcast %c0_i32_176 : i32 to vector<2x8x32xi32>
    %257 = arith.cmpi eq, %255, %256 : vector<2x8x32xi32>
    %c0_177 = arith.constant 0 : index
    %c0_178 = arith.constant 0 : index
    %c96_179 = arith.constant 96 : index
    %258 = vector.load %arg22[%c0_177, %c0_178, %c96_179] : memref<2x32x256xf32, #tpu.memory_space<vmem>>, vector<2x8x32xf32>
    %cst_180 = arith.constant 0xFF800000 : f32
    %259 = vector.broadcast %cst_180 : f32 to vector<2x8x32xf32>
    %260 = arith.select %257, %259, %258 : vector<2x8x32xi1>, vector<2x8x32xf32>
    %c7_i32 = arith.constant 7 : i32
    %261 = vector.broadcast %c7_i32 : i32 to vector<2x8x32xi32>
    %262 = arith.cmpi eq, %255, %261 : vector<2x8x32xi32>
    %c0_181 = arith.constant 0 : index
    %c0_182 = arith.constant 0 : index
    %c160_183 = arith.constant 160 : index
    %263 = vector.load %arg22[%c0_181, %c0_182, %c160_183] : memref<2x32x256xf32, #tpu.memory_space<vmem>>, vector<2x8x32xf32>
    %cst_184 = arith.constant 0xFF800000 : f32
    %264 = vector.broadcast %cst_184 : f32 to vector<2x8x32xf32>
    %265 = arith.select %262, %264, %263 : vector<2x8x32xi1>, vector<2x8x32xf32>
    %266 = arith.maximumf %260, %199 : vector<2x8x32xf32>
    %267 = arith.maximumf %266, %265 : vector<2x8x32xf32>
    %c0_185 = arith.constant 0 : index
    %c0_186 = arith.constant 0 : index
    %c0_187 = arith.constant 0 : index
    %268 = vector.load %arg22[%c0_185, %c0_186, %c0_187] : memref<2x32x256xf32, #tpu.memory_space<vmem>>, vector<2x8x32xf32>
    tpu.vector_store %arg22[%c0_185, %c0_186, %c0_187], %267 {strides = array<i32>} : memref<2x32x256xf32, #tpu.memory_space<vmem>>, vector<2x8x32xf32>,
    %c0_188 = arith.constant 0 : index
    %c0_189 = arith.constant 0 : index
    %c0_190 = arith.constant 0 : index
    %269 = vector.load %arg22[%c0_188, %c0_189, %c0_190] : memref<2x32x256xf32, #tpu.memory_space<vmem>>, vector<2x8x256xf32>
    %270 = arith.truncf %269 : vector<2x8x256xf32> to vector<2x8x256xbf16>
    %c0_191 = arith.constant 0 : index
    %c0_192 = arith.constant 0 : index
    %271 = vector.load %arg11[%c0_191, %c0_192] : memref<256x32xbf16, #tpu.memory_space<vmem>>, vector<256x32xbf16>
    "tpu.trace_start"() <{level = 10 : i32, message = "blk,kd->bld"}> : () -> ()
    %cst_193 = arith.constant dense<0.000000e+00> : vector<2x8x32xf32>
    %272 = tpu.matmul %270, %271, %cst_193 {dimension_numbers = #tpu.dot_dimension_numbers<[2], [0], [0, 1], [1], [0, 0, 0, 1, 1, 1], [], []>} : vector<2x8x256xbf16>, vector<256x32xbf16>, vector<2x8x32xf32> -> vector<2x8x32xf32>
    "tpu.trace_stop"() : () -> ()
    %c0_194 = arith.constant 0 : index
    %c0_195 = arith.constant 0 : index
    %273 = vector.load %arg12[%c0_194, %c0_195] : memref<2x32xf32, #tpu.memory_space<vmem>>, vector<1x32xf32>
    %c1_196 = arith.constant 1 : index
    %c0_197 = arith.constant 0 : index
    %274 = vector.load %arg12[%c1_196, %c0_197] : memref<2x32xf32, #tpu.memory_space<vmem>>, vector<1x32xf32>
    %cst_198 = arith.constant dense<0.000000e+00> : vector<32xf32>
    %275 = vector.multi_reduction <add>, %272, %cst_198 [0, 1] : vector<2x8x32xf32> to vector<32xf32>
    %276 = vector.shape_cast %275 : vector<32xf32> to vector<1x1x32xf32>
    %cst_199 = arith.constant 1.600000e+01 : f32
    %277 = vector.broadcast %cst_199 : f32 to vector<1x1x32xf32>
    %278 = arith.divf %276, %277 : vector<1x1x32xf32>
    %279 = vector.broadcast %278 : vector<1x1x32xf32> to vector<2x8x32xf32>
    %280 = arith.subf %272, %279 : vector<2x8x32xf32>
    %281 = arith.mulf %280, %280 : vector<2x8x32xf32>
    %cst_200 = arith.constant dense<0.000000e+00> : vector<32xf32>
    %282 = vector.multi_reduction <add>, %281, %cst_200 [0, 1] : vector<2x8x32xf32> to vector<32xf32>
    %283 = vector.shape_cast %282 : vector<32xf32> to vector<1x1x32xf32>
    %cst_201 = arith.constant 1.600000e+01 : f32
    %284 = vector.broadcast %cst_201 : f32 to vector<1x1x32xf32>
    %285 = arith.divf %283, %284 : vector<1x1x32xf32>
    %cst_202 = arith.constant 9.99999974E-6 : f32
    %286 = vector.broadcast %cst_202 : f32 to vector<1x1x32xf32>
    %287 = arith.addf %285, %286 : vector<1x1x32xf32>
    %288 = math.rsqrt %287 : vector<1x1x32xf32>
    %289 = vector.shape_cast %273 : vector<1x32xf32> to vector<1x1x32xf32>
    %290 = arith.mulf %289, %288 : vector<1x1x32xf32>
    %291 = vector.broadcast %290 : vector<1x1x32xf32> to vector<2x8x32xf32>
    %292 = arith.mulf %280, %291 : vector<2x8x32xf32>
    %293 = vector.shape_cast %274 : vector<1x32xf32> to vector<1x1x32xf32>
    %294 = vector.broadcast %293 : vector<1x1x32xf32> to vector<2x8x32xf32>
    %295 = arith.addf %292, %294 : vector<2x8x32xf32>
    %cst_203 = arith.constant 0.000000e+00 : f32
    %296 = vector.broadcast %cst_203 : f32 to vector<2x8x32xf32>
    %297 = arith.maximumf %295, %296 : vector<2x8x32xf32>
    %c0_204 = arith.constant 0 : index
    %c0_205 = arith.constant 0 : index
    %298 = vector.load %arg19[%c0_204, %c0_205] : memref<8x8xf32, #tpu.memory_space<vmem>>, vector<8x8xf32>
    %299 = vector.shape_cast %298 : vector<8x8xf32> to vector<1x8x8xf32>
    %300 = vector.broadcast %299 : vector<1x8x8xf32> to vector<2x8x8xf32>
    "tpu.trace_start"() <{level = 10 : i32, message = "bpl,bld->bpd"}> : () -> ()
    %cst_206 = arith.constant dense<0.000000e+00> : vector<2x8x32xf32>
    %301 = tpu.matmul %300, %297, %cst_206 {dimension_numbers = #tpu.dot_dimension_numbers<[2], [1], [1], [2], [0, 0, 0, 1, 1, 2], [0], [0]>} : vector<2x8x8xf32>, vector<2x8x32xf32>, vector<2x8x32xf32> -> vector<2x8x32xf32>
    "tpu.trace_stop"() : () -> ()
    %302 = vector.extract_strided_slice %301 {offsets = [0, 0, 0], sizes = [2, 4, 32], strides = [1, 1, 1]} : vector<2x8x32xf32> to vector<2x4x32xf32>
    %303 = vector.extract_strided_slice %301 {offsets = [0, 4, 0], sizes = [2, 4, 32], strides = [1, 1, 1]} : vector<2x8x32xf32> to vector<2x4x32xf32>
    %304 = arith.maximumf %302, %303 : vector<2x4x32xf32>
    %cst_207 = arith.constant 0.000000e+00 : f32
    %305 = vector.broadcast %cst_207 : f32 to vector<2x4x256xf32>
    %c0_208 = arith.constant 0 : index
    %c0_209 = arith.constant 0 : index
    %c0_210 = arith.constant 0 : index
    %306 = vector.load %arg22[%c0_208, %c0_209, %c0_210] : memref<2x32x256xf32, #tpu.memory_space<vmem>>, vector<2x4x256xf32>
    tpu.vector_store %arg22[%c0_208, %c0_209, %c0_210], %305 {strides = array<i32>} : memref<2x32x256xf32, #tpu.memory_space<vmem>>, vector<2x4x256xf32>,
    %307 = vector.extract_strided_slice %304 {offsets = [0, 0, 0], sizes = [2, 1, 32], strides = [1, 1, 1]} : vector<2x4x32xf32> to vector<2x1x32xf32>
    %c0_211 = arith.constant 0 : index
    %c3_212 = arith.constant 3 : index
    %c32_213 = arith.constant 32 : index
    %308 = vector.load %arg22[%c0_211, %c3_212, %c32_213] : memref<2x32x256xf32, #tpu.memory_space<vmem>>, vector<2x1x32xf32>
    tpu.vector_store %arg22[%c0_211, %c3_212, %c32_213], %307 {strides = array<i32>} : memref<2x32x256xf32, #tpu.memory_space<vmem>>, vector<2x1x32xf32>,
    %309 = vector.extract_strided_slice %304 {offsets = [0, 0, 0], sizes = [2, 2, 32], strides = [1, 1, 1]} : vector<2x4x32xf32> to vector<2x2x32xf32>
    %c0_214 = arith.constant 0 : index
    %c2_215 = arith.constant 2 : index
    %c64_216 = arith.constant 64 : index
    %310 = vector.load %arg22[%c0_214, %c2_215, %c64_216] : memref<2x32x256xf32, #tpu.memory_space<vmem>>, vector<2x2x32xf32>
    tpu.vector_store %arg22[%c0_214, %c2_215, %c64_216], %309 {strides = array<i32>} : memref<2x32x256xf32, #tpu.memory_space<vmem>>, vector<2x2x32xf32>,
    %311 = vector.extract_strided_slice %304 {offsets = [0, 0, 0], sizes = [2, 3, 32], strides = [1, 1, 1]} : vector<2x4x32xf32> to vector<2x3x32xf32>
    %c0_217 = arith.constant 0 : index
    %c1_218 = arith.constant 1 : index
    %c96_219 = arith.constant 96 : index
    %312 = vector.load %arg22[%c0_217, %c1_218, %c96_219] : memref<2x32x256xf32, #tpu.memory_space<vmem>>, vector<2x3x32xf32>
    tpu.vector_store %arg22[%c0_217, %c1_218, %c96_219], %311 {strides = array<i32>} : memref<2x32x256xf32, #tpu.memory_space<vmem>>, vector<2x3x32xf32>,
    %c0_220 = arith.constant 0 : index
    %c0_221 = arith.constant 0 : index
    %c128_222 = arith.constant 128 : index
    %313 = vector.load %arg22[%c0_220, %c0_221, %c128_222] : memref<2x32x256xf32, #tpu.memory_space<vmem>>, vector<2x4x32xf32>
    tpu.vector_store %arg22[%c0_220, %c0_221, %c128_222], %304 {strides = array<i32>} : memref<2x32x256xf32, #tpu.memory_space<vmem>>, vector<2x4x32xf32>,
    %314 = vector.extract_strided_slice %304 {offsets = [0, 1, 0], sizes = [2, 3, 32], strides = [1, 1, 1]} : vector<2x4x32xf32> to vector<2x3x32xf32>
    %c0_223 = arith.constant 0 : index
    %c0_224 = arith.constant 0 : index
    %c160_225 = arith.constant 160 : index
    %315 = vector.load %arg22[%c0_223, %c0_224, %c160_225] : memref<2x32x256xf32, #tpu.memory_space<vmem>>, vector<2x3x32xf32>
    tpu.vector_store %arg22[%c0_223, %c0_224, %c160_225], %314 {strides = array<i32>} : memref<2x32x256xf32, #tpu.memory_space<vmem>>, vector<2x3x32xf32>,
    %316 = vector.extract_strided_slice %304 {offsets = [0, 2, 0], sizes = [2, 2, 32], strides = [1, 1, 1]} : vector<2x4x32xf32> to vector<2x2x32xf32>
    %c0_226 = arith.constant 0 : index
    %c0_227 = arith.constant 0 : index
    %c192_228 = arith.constant 192 : index
    %317 = vector.load %arg22[%c0_226, %c0_227, %c192_228] : memref<2x32x256xf32, #tpu.memory_space<vmem>>, vector<2x2x32xf32>
    tpu.vector_store %arg22[%c0_226, %c0_227, %c192_228], %316 {strides = array<i32>} : memref<2x32x256xf32, #tpu.memory_space<vmem>>, vector<2x2x32xf32>,
    %318 = vector.extract_strided_slice %304 {offsets = [0, 3, 0], sizes = [2, 1, 32], strides = [1, 1, 1]} : vector<2x4x32xf32> to vector<2x1x32xf32>
    %c0_229 = arith.constant 0 : index
    %c0_230 = arith.constant 0 : index
    %c224_231 = arith.constant 224 : index
    %319 = vector.load %arg22[%c0_229, %c0_230, %c224_231] : memref<2x32x256xf32, #tpu.memory_space<vmem>>, vector<2x1x32xf32>
    tpu.vector_store %arg22[%c0_229, %c0_230, %c224_231], %318 {strides = array<i32>} : memref<2x32x256xf32, #tpu.memory_space<vmem>>, vector<2x1x32xf32>,
    %320 = tpu.iota {dimensions = array<i32: 1>} : vector<2x4x32xi32>
    %c0_i32_232 = arith.constant 0 : i32
    %321 = vector.broadcast %c0_i32_232 : i32 to vector<2x4x32xi32>
    %322 = arith.cmpi eq, %320, %321 : vector<2x4x32xi32>
    %c0_233 = arith.constant 0 : index
    %c0_234 = arith.constant 0 : index
    %c96_235 = arith.constant 96 : index
    %323 = vector.load %arg22[%c0_233, %c0_234, %c96_235] : memref<2x32x256xf32, #tpu.memory_space<vmem>>, vector<2x4x32xf32>
    %cst_236 = arith.constant 0xFF800000 : f32
    %324 = vector.broadcast %cst_236 : f32 to vector<2x4x32xf32>
    %325 = arith.select %322, %324, %323 : vector<2x4x32xi1>, vector<2x4x32xf32>
    %c3_i32 = arith.constant 3 : i32
    %326 = vector.broadcast %c3_i32 : i32 to vector<2x4x32xi32>
    %327 = arith.cmpi eq, %320, %326 : vector<2x4x32xi32>
    %c0_237 = arith.constant 0 : index
    %c0_238 = arith.constant 0 : index
    %c160_239 = arith.constant 160 : index
    %328 = vector.load %arg22[%c0_237, %c0_238, %c160_239] : memref<2x32x256xf32, #tpu.memory_space<vmem>>, vector<2x4x32xf32>
    %cst_240 = arith.constant 0xFF800000 : f32
    %329 = vector.broadcast %cst_240 : f32 to vector<2x4x32xf32>
    %330 = arith.select %327, %329, %328 : vector<2x4x32xi1>, vector<2x4x32xf32>
    %331 = arith.maximumf %325, %304 : vector<2x4x32xf32>
    %332 = arith.maximumf %331, %330 : vector<2x4x32xf32>
    %c0_241 = arith.constant 0 : index
    %c0_242 = arith.constant 0 : index
    %c0_243 = arith.constant 0 : index
    %333 = vector.load %arg22[%c0_241, %c0_242, %c0_243] : memref<2x32x256xf32, #tpu.memory_space<vmem>>, vector<2x4x32xf32>
    tpu.vector_store %arg22[%c0_241, %c0_242, %c0_243], %332 {strides = array<i32>} : memref<2x32x256xf32, #tpu.memory_space<vmem>>, vector<2x4x32xf32>,
    %c0_244 = arith.constant 0 : index
    %c0_245 = arith.constant 0 : index
    %c0_246 = arith.constant 0 : index
    %334 = vector.load %arg22[%c0_244, %c0_245, %c0_246] : memref<2x32x256xf32, #tpu.memory_space<vmem>>, vector<2x4x256xf32>
    %335 = arith.truncf %334 : vector<2x4x256xf32> to vector<2x4x256xbf16>
    %c0_247 = arith.constant 0 : index
    %c0_248 = arith.constant 0 : index
    %336 = vector.load %arg13[%c0_247, %c0_248] : memref<256x32xbf16, #tpu.memory_space<vmem>>, vector<256x32xbf16>
    "tpu.trace_start"() <{level = 10 : i32, message = "blk,kd->bld"}> : () -> ()
    %cst_249 = arith.constant dense<0.000000e+00> : vector<2x4x32xf32>
    %337 = tpu.matmul %335, %336, %cst_249 {dimension_numbers = #tpu.dot_dimension_numbers<[2], [0], [0, 1], [1], [0, 0, 0, 1, 1, 1], [], []>} : vector<2x4x256xbf16>, vector<256x32xbf16>, vector<2x4x32xf32> -> vector<2x4x32xf32>
    "tpu.trace_stop"() : () -> ()
    %c0_250 = arith.constant 0 : index
    %c0_251 = arith.constant 0 : index
    %338 = vector.load %arg14[%c0_250, %c0_251] : memref<2x32xf32, #tpu.memory_space<vmem>>, vector<1x32xf32>
    %c1_252 = arith.constant 1 : index
    %c0_253 = arith.constant 0 : index
    %339 = vector.load %arg14[%c1_252, %c0_253] : memref<2x32xf32, #tpu.memory_space<vmem>>, vector<1x32xf32>
    %cst_254 = arith.constant dense<0.000000e+00> : vector<32xf32>
    %340 = vector.multi_reduction <add>, %337, %cst_254 [0, 1] : vector<2x4x32xf32> to vector<32xf32>
    %341 = vector.shape_cast %340 : vector<32xf32> to vector<1x1x32xf32>
    %cst_255 = arith.constant 8.000000e+00 : f32
    %342 = vector.broadcast %cst_255 : f32 to vector<1x1x32xf32>
    %343 = arith.divf %341, %342 : vector<1x1x32xf32>
    %344 = vector.broadcast %343 : vector<1x1x32xf32> to vector<2x4x32xf32>
    %345 = arith.subf %337, %344 : vector<2x4x32xf32>
    %346 = arith.mulf %345, %345 : vector<2x4x32xf32>
    %cst_256 = arith.constant dense<0.000000e+00> : vector<32xf32>
    %347 = vector.multi_reduction <add>, %346, %cst_256 [0, 1] : vector<2x4x32xf32> to vector<32xf32>
    %348 = vector.shape_cast %347 : vector<32xf32> to vector<1x1x32xf32>
    %cst_257 = arith.constant 8.000000e+00 : f32
    %349 = vector.broadcast %cst_257 : f32 to vector<1x1x32xf32>
    %350 = arith.divf %348, %349 : vector<1x1x32xf32>
    %cst_258 = arith.constant 9.99999974E-6 : f32
    %351 = vector.broadcast %cst_258 : f32 to vector<1x1x32xf32>
    %352 = arith.addf %350, %351 : vector<1x1x32xf32>
    %353 = math.rsqrt %352 : vector<1x1x32xf32>
    %354 = vector.shape_cast %338 : vector<1x32xf32> to vector<1x1x32xf32>
    %355 = arith.mulf %354, %353 : vector<1x1x32xf32>
    %356 = vector.broadcast %355 : vector<1x1x32xf32> to vector<2x4x32xf32>
    %357 = arith.mulf %345, %356 : vector<2x4x32xf32>
    %358 = vector.shape_cast %339 : vector<1x32xf32> to vector<1x1x32xf32>
    %359 = vector.broadcast %358 : vector<1x1x32xf32> to vector<2x4x32xf32>
    %360 = arith.addf %357, %359 : vector<2x4x32xf32>
    %cst_259 = arith.constant 0.000000e+00 : f32
    %361 = vector.broadcast %cst_259 : f32 to vector<2x4x32xf32>
    %362 = arith.maximumf %360, %361 : vector<2x4x32xf32>
    %c0_260 = arith.constant 0 : index
    %c0_261 = arith.constant 0 : index
    %363 = vector.load %arg20[%c0_260, %c0_261] : memref<4x4xf32, #tpu.memory_space<vmem>>, vector<4x4xf32>
    %364 = vector.shape_cast %363 : vector<4x4xf32> to vector<1x4x4xf32>
    %365 = vector.broadcast %364 : vector<1x4x4xf32> to vector<2x4x4xf32>
    "tpu.trace_start"() <{level = 10 : i32, message = "bpl,bld->bpd"}> : () -> ()
    %cst_262 = arith.constant dense<0.000000e+00> : vector<2x4x32xf32>
    %366 = tpu.matmul %365, %362, %cst_262 {dimension_numbers = #tpu.dot_dimension_numbers<[2], [1], [1], [2], [0, 0, 0, 1, 1, 2], [0], [0]>} : vector<2x4x4xf32>, vector<2x4x32xf32>, vector<2x4x32xf32> -> vector<2x4x32xf32>
    "tpu.trace_stop"() : () -> ()
    %367 = vector.extract_strided_slice %366 {offsets = [0, 0, 0], sizes = [2, 2, 32], strides = [1, 1, 1]} : vector<2x4x32xf32> to vector<2x2x32xf32>
    %368 = vector.extract_strided_slice %366 {offsets = [0, 2, 0], sizes = [2, 2, 32], strides = [1, 1, 1]} : vector<2x4x32xf32> to vector<2x2x32xf32>
    %369 = arith.maximumf %367, %368 : vector<2x2x32xf32>
    %370 = arith.addf %369, %239 : vector<2x2x32xf32>
    %cst_263 = arith.constant dense<0.000000e+00> : vector<2x32xf32>
    %371 = vector.multi_reduction <add>, %370, %cst_263 [1] : vector<2x2x32xf32> to vector<2x32xf32>
    %cst_264 = arith.constant 2.000000e+00 : f32
    %372 = vector.broadcast %cst_264 : f32 to vector<2x32xf32>
    %373 = arith.divf %371, %372 : vector<2x32xf32>
    %374 = arith.truncf %373 : vector<2x32xf32> to vector<2x32xbf16>
    %c0_265 = arith.constant 0 : index
    %c0_266 = arith.constant 0 : index
    %375 = vector.load %arg15[%c0_265, %c0_266] : memref<32x10xbf16, #tpu.memory_space<vmem>>, vector<32x10xbf16>
    %cst_267 = arith.constant dense<0.000000e+00> : vector<2x10xf32>
    %376 = tpu.matmul %374, %375, %cst_267 {dimension_numbers = #tpu.dot_dimension_numbers<[1], [0], [0], [1], [0, 0, 1, 1], [], []>} : vector<2x32xbf16>, vector<32x10xbf16>, vector<2x10xf32> -> vector<2x10xf32>
    %c0_268 = arith.constant 0 : index
    %c0_269 = arith.constant 0 : index
    %377 = vector.load %arg16[%c0_268, %c0_269] : memref<1x10xf32, #tpu.memory_space<vmem>>, vector<1x10xf32>
    %378 = vector.broadcast %377 : vector<1x10xf32> to vector<2x10xf32>
    %379 = arith.addf %376, %378 : vector<2x10xf32>
    %c0_270 = arith.constant 0 : index
    %c0_271 = arith.constant 0 : index
    %380 = vector.load %arg21[%c0_270, %c0_271] : memref<2x10xf32, #tpu.memory_space<vmem>>, vector<2x10xf32>
    tpu.vector_store %arg21[%c0_270, %c0_271], %379 {strides = array<i32>} : memref<2x10xf32, #tpu.memory_space<vmem>>, vector<2x10xf32>,
    return
  }
}

</mosaic_0001>

<llo_original>
// kernel: mini_inception_time.1
$region0: #{mini_inception_time.1}
  #allocation0 [shape = 'u32[]', space=smem, size = 0x4, offset = 0x4, fixed_abs, tag = 'smem constant byte address 0x4 - core index']
  #allocation1 [shape = 'u32[144,128]{1,0:T(1,128)}', space=vmem, size = 0x12000, scoped, tag = 'internal scratch']
  #allocation2 [shape = 'f32[2,32,256]{2,1,0:T(8,128)}', space=vmem, size = 0x10000, scoped, tag = 'scratch operand']
  %s0 = inlined_call_operand.vmem [shape: f32[2,32,1], index: 0, kind: input, shape index: {}]
  %s1 = inlined_call_operand.vmem [shape: f32[1,32], index: 1, kind: input, shape index: {}]
  %s2 = inlined_call_operand.vmem [shape: f32[2,32], index: 2, kind: input, shape index: {}]
  %s3 = inlined_call_operand.vmem [shape: bf16[32,32], index: 3, kind: input, shape index: {}]
  %s4 = inlined_call_operand.vmem [shape: f32[2,32], index: 4, kind: input, shape index: {}]
  %s5 = inlined_call_operand.vmem [shape: bf16[32,32], index: 5, kind: input, shape index: {}]
  %s6 = inlined_call_operand.vmem [shape: f32[2,32], index: 6, kind: input, shape index: {}]
  %s7 = inlined_call_operand.vmem [shape: bf16[256,32], index: 7, kind: input, shape index: {}]
  %s8 = inlined_call_operand.vmem [shape: f32[2,32], index: 8, kind: input, shape index: {}]
  %s9 = inlined_call_operand.vmem [shape: bf16[256,32], index: 9, kind: input, shape index: {}]
  %s10 = inlined_call_operand.vmem [shape: f32[2,32], index: 10, kind: input, shape index: {}]
  %s11 = inlined_call_operand.vmem [shape: bf16[256,32], index: 11, kind: input, shape index: {}]
  %s12 = inlined_call_operand.vmem [shape: f32[2,32], index: 12, kind: input, shape index: {}]
  %s13 = inlined_call_operand.vmem [shape: bf16[256,32], index: 13, kind: input, shape index: {}]
  %s14 = inlined_call_operand.vmem [shape: f32[2,32], index: 14, kind: input, shape index: {}]
  %s15 = inlined_call_operand.vmem [shape: bf16[32,10], index: 15, kind: input, shape index: {}]
  %s16 = inlined_call_operand.vmem [shape: f32[1,10], index: 16, kind: input, shape index: {}]
  %s17 = inlined_call_operand.vmem [shape: f32[32,32], index: 17, kind: input, shape index: {}]
  %s18 = inlined_call_operand.vmem [shape: f32[16,16], index: 18, kind: input, shape index: {}]
  %s19 = inlined_call_operand.vmem [shape: f32[8,8], index: 19, kind: input, shape index: {}]
  %s20 = inlined_call_operand.vmem [shape: f32[4,4], index: 20, kind: input, shape index: {}]
  %s21 = inlined_call_operand.hbm [shape: f32[2,10], index: 21, kind: output, shape index: {}]
  %s22 = sld [smem:[#allocation0]]
  $region94: #{mini_inception_time.1} parent=0
    _
  %s24 = ssub.s32 1, %s22
  %s25 = scalar_select 0, %s24, %s22
  $region1: #{mini_inception_time.1} parent=0
    #allocation3 [shape = 'u8[1024]{0}', space=vmem, size = 0x400, scoped, tag = 'output window, operand 0, single buffered']
    #allocation4 [shape = 's32[1]{0}', space=sflag, size = 0x4, scoped, tag = 'scoped memory for mini_inception_time.1']
    %26 = vsyncpa [#allocation4], 0
    // Predicated region
    $region2: #{mini_inception_time.1} parent=1 // pred_check
      _
    $region3: #{mini_inception_time.1} parent=1 // pred_check_branch
      %28 = sbr.rel (0) target = $region5
    $region4: #{mini_inception_time.1} parent=1 // pred_region
      _
    $region5: #{mini_inception_time.1} parent=1 // pred_fallthru
      _
    // Predicated region
    $region6: #{mini_inception_time.1} parent=1 // pred_check
      _
    $region7: #{mini_inception_time.1} parent=1 // pred_check_branch
      %30 = sbr.rel (0) target = $region9
    $region8: #{mini_inception_time.1} parent=1 // pred_region
      _
    $region9: #{mini_inception_time.1} parent=1 // pred_fallthru
      _
    // Predicated region
    $region10: #{mini_inception_time.1} parent=1 // pred_check
      _
    $region11: #{mini_inception_time.1} parent=1 // pred_check_branch
      %32 = sbr.rel (0) target = $region13
    $region12: #{mini_inception_time.1} parent=1 // pred_region
      _
    $region13: #{mini_inception_time.1} parent=1 // pred_fallthru
      _
    // Predicated region
    $region14: #{mini_inception_time.1} parent=1 // pred_check
      _
    $region15: #{mini_inception_time.1} parent=1 // pred_check_branch
      %34 = sbr.rel (0) target = $region17
    $region16: #{mini_inception_time.1} parent=1 // pred_region
      _
    $region17: #{mini_inception_time.1} parent=1 // pred_fallthru
      _
    // Predicated region
    $region18: #{mini_inception_time.1} parent=1 // pred_check
      _
    $region19: #{mini_inception_time.1} parent=1 // pred_check_branch
      %36 = sbr.rel (0) target = $region21
    $region20: #{mini_inception_time.1} parent=1 // pred_region
      _
    $region21: #{mini_inception_time.1} parent=1 // pred_fallthru
      _
    // Predicated region
    $region22: #{mini_inception_time.1} parent=1 // pred_check
      _
    $region23: #{mini_inception_time.1} parent=1 // pred_check_branch
      %38 = sbr.rel (0) target = $region25
    $region24: #{mini_inception_time.1} parent=1 // pred_region
      _
    $region25: #{mini_inception_time.1} parent=1 // pred_fallthru
      _
    // Predicated region
    $region26: #{mini_inception_time.1} parent=1 // pred_check
      _
    $region27: #{mini_inception_time.1} parent=1 // pred_check_branch
      %40 = sbr.rel (0) target = $region29
    $region28: #{mini_inception_time.1} parent=1 // pred_region
      _
    $region29: #{mini_inception_time.1} parent=1 // pred_fallthru
      _
    // Predicated region
    $region30: #{mini_inception_time.1} parent=1 // pred_check
      _
    $region31: #{mini_inception_time.1} parent=1 // pred_check_branch
      %42 = sbr.rel (0) target = $region33
    $region32: #{mini_inception_time.1} parent=1 // pred_region
      _
    $region33: #{mini_inception_time.1} parent=1 // pred_fallthru
      _
    // Predicated region
    $region34: #{mini_inception_time.1} parent=1 // pred_check
      _
    $region35: #{mini_inception_time.1} parent=1 // pred_check_branch
      %44 = sbr.rel (0) target = $region37
    $region36: #{mini_inception_time.1} parent=1 // pred_region
      _
    $region37: #{mini_inception_time.1} parent=1 // pred_fallthru
      _
    // Predicated region
    $region38: #{mini_inception_time.1} parent=1 // pred_check
      _
    $region39: #{mini_inception_time.1} parent=1 // pred_check_branch
      %46 = sbr.rel (0) target = $region41
    $region40: #{mini_inception_time.1} parent=1 // pred_region
      _
    $region41: #{mini_inception_time.1} parent=1 // pred_fallthru
      _
    // Predicated region
    $region42: #{mini_inception_time.1} parent=1 // pred_check
      _
    $region43: #{mini_inception_time.1} parent=1 // pred_check_branch
      %48 = sbr.rel (0) target = $region45
    $region44: #{mini_inception_time.1} parent=1 // pred_region
      _
    $region45: #{mini_inception_time.1} parent=1 // pred_fallthru
      _
    // Predicated region
    $region46: #{mini_inception_time.1} parent=1 // pred_check
      _
    $region47: #{mini_inception_time.1} parent=1 // pred_check_branch
      %50 = sbr.rel (0) target = $region49
    $region48: #{mini_inception_time.1} parent=1 // pred_region
      _
    $region49: #{mini_inception_time.1} parent=1 // pred_fallthru
      _
    // Predicated region
    $region50: #{mini_inception_time.1} parent=1 // pred_check
      _
    $region51: #{mini_inception_time.1} parent=1 // pred_check_branch
      %52 = sbr.rel (0) target = $region53
    $region52: #{mini_inception_time.1} parent=1 // pred_region
      _
    $region53: #{mini_inception_time.1} parent=1 // pred_fallthru
      _
    // Predicated region
    $region54: #{mini_inception_time.1} parent=1 // pred_check
      _
    $region55: #{mini_inception_time.1} parent=1 // pred_check_branch
      %54 = sbr.rel (0) target = $region57
    $region56: #{mini_inception_time.1} parent=1 // pred_region
      _
    $region57: #{mini_inception_time.1} parent=1 // pred_fallthru
      _
    // Predicated region
    $region58: #{mini_inception_time.1} parent=1 // pred_check
      _
    $region59: #{mini_inception_time.1} parent=1 // pred_check_branch
      %56 = sbr.rel (0) target = $region61
    $region60: #{mini_inception_time.1} parent=1 // pred_region
      _
    $region61: #{mini_inception_time.1} parent=1 // pred_fallthru
      _
    // Predicated region
    $region62: #{mini_inception_time.1} parent=1 // pred_check
      _
    $region63: #{mini_inception_time.1} parent=1 // pred_check_branch
      %58 = sbr.rel (0) target = $region65
    $region64: #{mini_inception_time.1} parent=1 // pred_region
      _
    $region65: #{mini_inception_time.1} parent=1 // pred_fallthru
      _
    // Predicated region
    $region66: #{mini_inception_time.1} parent=1 // pred_check
      _
    $region67: #{mini_inception_time.1} parent=1 // pred_check_branch
      %60 = sbr.rel (0) target = $region69
    $region68: #{mini_inception_time.1} parent=1 // pred_region
      _
    $region69: #{mini_inception_time.1} parent=1 // pred_fallthru
      _
    // Predicated region
    $region70: #{mini_inception_time.1} parent=1 // pred_check
      _
    $region71: #{mini_inception_time.1} parent=1 // pred_check_branch
      %62 = sbr.rel (0) target = $region73
    $region72: #{mini_inception_time.1} parent=1 // pred_region
      _
    $region73: #{mini_inception_time.1} parent=1 // pred_fallthru
      _
    // Predicated region
    $region74: #{mini_inception_time.1} parent=1 // pred_check
      _
    $region75: #{mini_inception_time.1} parent=1 // pred_check_branch
      %64 = sbr.rel (0) target = $region77
    $region76: #{mini_inception_time.1} parent=1 // pred_region
      _
    $region77: #{mini_inception_time.1} parent=1 // pred_fallthru
      _
    // Predicated region
    $region78: #{mini_inception_time.1} parent=1 // pred_check
      _
    $region79: #{mini_inception_time.1} parent=1 // pred_check_branch
      %66 = sbr.rel (0) target = $region81
    $region80: #{mini_inception_time.1} parent=1 // pred_region
      _
    $region81: #{mini_inception_time.1} parent=1 // pred_fallthru
      _
    // Predicated region
    $region82: #{mini_inception_time.1} parent=1 // pred_check
      _
    $region83: #{mini_inception_time.1} parent=1 // pred_check_branch
      %68 = sbr.rel (0) target = $region85
    $region84: #{mini_inception_time.1} parent=1 // pred_region
      _
    $region85: #{mini_inception_time.1} parent=1 // pred_fallthru
      _
    %v70 = vld [vmem:[%s0] sm:$0xff]
    %v71 = vld [vmem:[%s0 + $0x8] sm:$0xff]
    %v72 = vld [vmem:[%s0 + $0x10] sm:$0xff]
    %v73 = vld [vmem:[%s0 + $0x18] sm:$0xff]
    %v74 = vld [vmem:[%s0 + $0x20] sm:$0xff]
    %v75 = vld [vmem:[%s0 + $0x28] sm:$0xff]
    %v76 = vld [vmem:[%s0 + $0x30] sm:$0xff]
    %v77 = vld [vmem:[%s0 + $0x38] sm:$0xff]
    %v78 = vld [vmem:[%s1] sm:$0x1]
    %80 = vset.pattern.permute.xlu0 0
    %81 = vperm.xlu0 %80, %v70
    %v82 = vpop.permute.xlu0 %81
    %85 = vset.pattern.permute.xlu0 0
    %86 = vperm.xlu0 %85, %v71
    %v87 = vpop.permute.xlu0 %86
    %90 = vset.pattern.permute.xlu0 0
    %91 = vperm.xlu0 %90, %v72
    %v92 = vpop.permute.xlu0 %91
    %95 = vset.pattern.permute.xlu0 0
    %96 = vperm.xlu0 %95, %v73
    %v97 = vpop.permute.xlu0 %96
    %100 = vset.pattern.permute.xlu0 0
    %101 = vperm.xlu0 %100, %v74
    %v102 = vpop.permute.xlu0 %101
    %105 = vset.pattern.permute.xlu0 0
    %106 = vperm.xlu0 %105, %v75
    %v107 = vpop.permute.xlu0 %106
    %110 = vset.pattern.permute.xlu0 0
    %111 = vperm.xlu0 %110, %v76
    %v112 = vpop.permute.xlu0 %111
    %115 = vset.pattern.permute.xlu0 0
    %116 = vperm.xlu0 %115, %v77
    %v117 = vpop.permute.xlu0 %116
    %v120 = vlaneseq
    %v121 = vshrl.u32 %v120, 7
    %v122 = vsub.s32 0, %v121
    %v123 = vrot.slane %v78, %v122
    %v125 = vmul.f32 %v82, %v123
    %v126 = vmul.f32 %v87, %v123
    %v127 = vmul.f32 %v92, %v123
    %v128 = vmul.f32 %v97, %v123
    %v129 = vmul.f32 %v102, %v123
    %v130 = vmul.f32 %v107, %v123
    %v131 = vmul.f32 %v112, %v123
    %v132 = vmul.f32 %v117, %v123
    %v133 = vld [vmem:[%s2] sm:$0x1]
    %v134 = vld [vmem:[%s2 + $0x1] sm:$0x1]
    %vm135 = vcmask 261120
    %v136 = vsel %vm135, %v125, 0.0
    %v137 = vsel %vm135, %v126, 0.0
    %v138 = vadd.f32 %v136, %v137
    %v139 = vsel %vm135, %v127, 0.0
    %v140 = vadd.f32 %v138, %v139
    %v141 = vsel %vm135, %v128, 0.0
    %v142 = vadd.f32 %v140, %v141
    %v143 = vsel %vm135, %v129, 0.0
    %v144 = vadd.f32 %v142, %v143
    %v145 = vsel %vm135, %v130, 0.0
    %v146 = vadd.f32 %v144, %v145
    %v147 = vsel %vm135, %v131, 0.0
    %v148 = vadd.f32 %v146, %v147
    %v149 = vsel %vm135, %v132, 0.0
    %v150 = vadd.f32 %v148, %v149
    %v151 = vrot.slane %v150, 4
    %v152 = vadd.f32 %v150, %v151
    %v153 = vrot.slane %v152, 2
    %v154 = vadd.f32 %v152, %v153
    %v155 = vrot.slane %v154, 1
    %v156 = vadd.f32 %v154, %v155
    %v157 = vrcp.pop 64.0
    %v158 = vmul.f32 %v156, %v157
    %v159 = vsub.f32 %v125, %v158
    %v160 = vsub.f32 %v126, %v158
    %v161 = vsub.f32 %v127, %v158
    %v162 = vsub.f32 %v128, %v158
    %v163 = vsub.f32 %v129, %v158
    %v164 = vsub.f32 %v130, %v158
    %v165 = vsub.f32 %v131, %v158
    %v166 = vsub.f32 %v132, %v158
    %v167 = vmul.f32 %v159, %v159
    %v168 = vmul.f32 %v160, %v160
    %v169 = vmul.f32 %v161, %v161
    %v170 = vmul.f32 %v162, %v162
    %v171 = vmul.f32 %v163, %v163
    %v172 = vmul.f32 %v164, %v164
    %v173 = vmul.f32 %v165, %v165
    %v174 = vmul.f32 %v166, %v166
    %v175 = vsel %vm135, %v167, 0.0
    %v176 = vsel %vm135, %v168, 0.0
    %v177 = vadd.f32 %v175, %v176
    %v178 = vsel %vm135, %v169, 0.0
    %v179 = vadd.f32 %v177, %v178
    %v180 = vsel %vm135, %v170, 0.0
    %v181 = vadd.f32 %v179, %v180
    %v182 = vsel %vm135, %v171, 0.0
    %v183 = vadd.f32 %v181, %v182
    %v184 = vsel %vm135, %v172, 0.0
    %v185 = vadd.f32 %v183, %v184
    %v186 = vsel %vm135, %v173, 0.0
    %v187 = vadd.f32 %v185, %v186
    %v188 = vsel %vm135, %v174, 0.0
    %v189 = vadd.f32 %v187, %v188
    %v190 = vrot.slane %v189, 4
    %v191 = vadd.f32 %v189, %v190
    %v192 = vrot.slane %v191, 2
    %v193 = vadd.f32 %v191, %v192
    %v194 = vrot.slane %v193, 1
    %v195 = vadd.f32 %v193, %v194
    %v196 = vmul.f32 %v195, %v157
    %v197 = vadd.f32 %v196, 1e-05
    %v198 = vrsqrt.pop %v197
    %v199 = vmul.f32 %v133, %v198
    %v200 = vlaneseq
    %v201 = vshrl.u32 %v200, 7
    %v202 = vsub.s32 0, %v201
    %v203 = vrot.slane %v199, %v202
    %v204 = vmul.f32 %v159, %v203
    %v205 = vmul.f32 %v160, %v203
    %v206 = vmul.f32 %v161, %v203
    %v207 = vmul.f32 %v162, %v203
    %v208 = vmul.f32 %v163, %v203
    %v209 = vmul.f32 %v164, %v203
    %v210 = vmul.f32 %v165, %v203
    %v211 = vmul.f32 %v166, %v203
    %v212 = vlaneseq
    %v213 = vshrl.u32 %v212, 7
    %v214 = vsub.s32 0, %v213
    %v215 = vrot.slane %v134, %v214
    %v216 = vadd.f32 %v204, %v215
    %v217 = vadd.f32 %v205, %v215
    %v218 = vadd.f32 %v206, %v215
    %v219 = vadd.f32 %v207, %v215
    %v220 = vadd.f32 %v208, %v215
    %v221 = vadd.f32 %v209, %v215
    %v222 = vadd.f32 %v210, %v215
    %v223 = vadd.f32 %v211, %v215
    %v224 = vld [vmem:[%s17] sm:$0xff]
    %v225 = vld [vmem:[%s17 + $0x8] sm:$0xff]
    %v226 = vld [vmem:[%s17 + $0x10] sm:$0xff]
    %v227 = vld [vmem:[%s17 + $0x18] sm:$0xff]
    %v229 = vsel %vm135, %v224, 0
    %v232 = vsel %vm135, %v225, 0
    %v235 = vsel %vm135, %v226, 0
    %v238 = vsel %vm135, %v227, 0
    %240 = vmatprep.subr.mxu0 0.0
    %241 = vmatpush1.msra.mxu0 0.0
    %242 = vmatprep.subr.mxu0 0.0
    %243 = vmatpush1.msra.mxu0 0.0
    %244 = vmatprep.subr.mxu0 0.0
    %245 = vmatpush1.msra.mxu0 0.0
    %246 = vmatprep.subr.mxu0 0.0
    %247 = vmatpush1.msra.mxu0 0.0
    %248 = vmatprep.subr.mxu0 0.0
    %249 = vmatpush1.msra.mxu0 0.0
    %250 = vmatprep.subr.mxu0 0.0
    %251 = vmatpush1.msra.mxu0 0.0
    %252 = vmatprep.subr.mxu0 0.0
    %253 = vmatpush1.msra.mxu0 0.0
    %254 = vmatprep.subr.mxu0 0.0
    %255 = vmatpush1.msra.mxu0 0.0
    %256 = vmatprep.subr.mxu0 0.0
    %257 = vmatpush1.msra.mxu0 0.0
    %258 = vmatprep.subr.mxu0 0.0
    %259 = vmatpush1.msra.mxu0 0.0
    %260 = vmatprep.subr.mxu0 0.0
    %261 = vmatpush1.msra.mxu0 0.0
    %262 = vmatprep.subr.mxu0 0.0
    %263 = vmatpush1.msra.mxu0 0.0
    %264 = vmatprep.subr.mxu0 0.0
    %265 = vmatpush1.msra.mxu0 %v219
    %266 = vmatprep.subr.mxu0 0.0
    %267 = vmatpush1.msra.mxu0 %v218
    %268 = vmatprep.subr.mxu0 0.0
    %269 = vmatpush1.msra.mxu0 %v217
    %270 = vmatprep.subr.mxu0 0.0
    %271 = vmatpush1.msra.mxu0 %v216
    %272 = vmatprep.subr.mxu0 0.0
    %273 = vmatpush2.msra.mxu0 0.0
    %274 = vmatprep.subr.mxu0 0.0
    %275 = vmatpush2.msra.mxu0 0.0
    %276 = vmatprep.subr.mxu0 0.0
    %277 = vmatpush2.msra.mxu0 0.0
    %278 = vmatprep.subr.mxu0 0.0
    %279 = vmatpush2.msra.mxu0 0.0
    %280 = vmatprep.subr.mxu0 0.0
    %281 = vmatpush2.msra.mxu0 0.0
    %282 = vmatprep.subr.mxu0 0.0
    %283 = vmatpush2.msra.mxu0 0.0
    %284 = vmatprep.subr.mxu0 0.0
    %285 = vmatpush2.msra.mxu0 0.0
    %286 = vmatprep.subr.mxu0 0.0
    %287 = vmatpush2.msra.mxu0 0.0
    %288 = vmatprep.subr.mxu0 0.0
    %289 = vmatpush2.msra.mxu0 0.0
    %290 = vmatprep.subr.mxu0 0.0
    %291 = vmatpush2.msra.mxu0 0.0
    %292 = vmatprep.subr.mxu0 0.0
    %293 = vmatpush2.msra.mxu0 0.0
    %294 = vmatprep.subr.mxu0 0.0
    %295 = vmatpush2.msra.mxu0 0.0
    %296 = vmatprep.subr.mxu0 0.0
    %297 = vmatpush2.msra.mxu0 0.0
    %298 = vmatprep.subr.mxu0 0.0
    %299 = vmatpush2.msra.mxu0 0.0
    %300 = vmatprep.subr.mxu0 0.0
    %301 = vmatpush2.msra.mxu0 0.0
    %302 = vmatprep.subr.mxu0 0.0
    %303 = vmatpush2.msra.mxu0 0.0
    %304 = vmatprep.mubr.f32.mxu0 0.0
    %305 = vmatmul.mubr.f32.gmra.mxu0 %v229
    %v306 = vpop.f32.mrf.mxu0
    %v307 = vadd.f32 0.0, %v306
    %v308 = vpop.f32.mrf.mxu0
    %309 = vmatprep.mubr.f32.mxu0 0.0
    %310 = vmatmul.mubr.f32.gmra.mxu0 %v232
    %v311 = vpop.f32.mrf.mxu0
    %v312 = vadd.f32 0.0, %v311
    %v313 = vpop.f32.mrf.mxu0
    %314 = vmatprep.mubr.f32.mxu0 0.0
    %315 = vmatmul.mubr.f32.gmra.mxu0 %v235
    %v316 = vpop.f32.mrf.mxu0
    %v317 = vpop.f32.mrf.mxu0
    %318 = vmatprep.mubr.f32.mxu0 0.0
    %319 = vmatmul.mubr.f32.gmra.mxu0 %v238
    %v320 = vpop.f32.mrf.mxu0
    %v321 = vpop.f32.mrf.mxu0
    %322 = vdwg.mxu0
    %323 = vmatprep.subr.mxu0 0.0
    %324 = vmatpush1.msra.mxu0 0.0
    %325 = vmatprep.subr.mxu0 0.0
    %326 = vmatpush1.msra.mxu0 0.0
    %327 = vmatprep.subr.mxu0 0.0
    %328 = vmatpush1.msra.mxu0 0.0
    %329 = vmatprep.subr.mxu0 0.0
    %330 = vmatpush1.msra.mxu0 0.0
    %331 = vmatprep.subr.mxu0 0.0
    %332 = vmatpush1.msra.mxu0 0.0
    %333 = vmatprep.subr.mxu0 0.0
    %334 = vmatpush1.msra.mxu0 0.0
    %335 = vmatprep.subr.mxu0 0.0
    %336 = vmatpush1.msra.mxu0 0.0
    %337 = vmatprep.subr.mxu0 0.0
    %338 = vmatpush1.msra.mxu0 0.0
    %339 = vmatprep.subr.mxu0 0.0
    %340 = vmatpush1.msra.mxu0 0.0
    %341 = vmatprep.subr.mxu0 0.0
    %342 = vmatpush1.msra.mxu0 0.0
    %343 = vmatprep.subr.mxu0 0.0
    %344 = vmatpush1.msra.mxu0 0.0
    %345 = vmatprep.subr.mxu0 0.0
    %346 = vmatpush1.msra.mxu0 0.0
    %347 = vmatprep.subr.mxu0 0.0
    %348 = vmatpush1.msra.mxu0 %v223
    %349 = vmatprep.subr.mxu0 0.0
    %350 = vmatpush1.msra.mxu0 %v222
    %351 = vmatprep.subr.mxu0 0.0
    %352 = vmatpush1.msra.mxu0 %v221
    %353 = vmatprep.subr.mxu0 0.0
    %354 = vmatpush1.msra.mxu0 %v220
    %355 = vmatprep.subr.mxu0 0.0
    %356 = vmatpush2.msra.mxu0 0.0
    %357 = vmatprep.subr.mxu0 0.0
    %358 = vmatpush2.msra.mxu0 0.0
    %359 = vmatprep.subr.mxu0 0.0
    %360 = vmatpush2.msra.mxu0 0.0
    %361 = vmatprep.subr.mxu0 0.0
    %362 = vmatpush2.msra.mxu0 0.0
    %363 = vmatprep.subr.mxu0 0.0
    %364 = vmatpush2.msra.mxu0 0.0
    %365 = vmatprep.subr.mxu0 0.0
    %366 = vmatpush2.msra.mxu0 0.0
    %367 = vmatprep.subr.mxu0 0.0
    %368 = vmatpush2.msra.mxu0 0.0
    %369 = vmatprep.subr.mxu0 0.0
    %370 = vmatpush2.msra.mxu0 0.0
    %371 = vmatprep.subr.mxu0 0.0
    %372 = vmatpush2.msra.mxu0 0.0
    %373 = vmatprep.subr.mxu0 0.0
    %374 = vmatpush2.msra.mxu0 0.0
    %375 = vmatprep.subr.mxu0 0.0
    %376 = vmatpush2.msra.mxu0 0.0
    %377 = vmatprep.subr.mxu0 0.0
    %378 = vmatpush2.msra.mxu0 0.0
    %379 = vmatprep.subr.mxu0 0.0
    %380 = vmatpush2.msra.mxu0 0.0
    %381 = vmatprep.subr.mxu0 0.0
    %382 = vmatpush2.msra.mxu0 0.0
    %383 = vmatprep.subr.mxu0 0.0
    %384 = vmatpush2.msra.mxu0 0.0
    %385 = vmatprep.subr.mxu0 0.0
    %386 = vmatpush2.msra.mxu0 0.0
    %387 = vmatprep.mubr.f32.mxu0 0.0
    %388 = vmatmul.mubr.f32.gmra.mxu0 %v229
    %v389 = vpop.f32.mrf.mxu0
    %v390 = vadd.f32 0.0, %v389
    %v391 = vpop.f32.mrf.mxu0
    %392 = vmatprep.mubr.f32.mxu0 0.0
    %393 = vmatmul.mubr.f32.gmra.mxu0 %v232
    %v394 = vpop.f32.mrf.mxu0
    %v395 = vadd.f32 0.0, %v394
    %v396 = vpop.f32.mrf.mxu0
    %397 = vmatprep.mubr.f32.mxu0 0.0
    %398 = vmatmul.mubr.f32.gmra.mxu0 %v235
    %v399 = vpop.f32.mrf.mxu0
    %v400 = vpop.f32.mrf.mxu0
    %401 = vmatprep.mubr.f32.mxu0 0.0
    %402 = vmatmul.mubr.f32.gmra.mxu0 %v238
    %v403 = vpop.f32.mrf.mxu0
    %v404 = vpop.f32.mrf.mxu0
    %405 = vdwg.mxu0
    %v406 = vpack.c.bf16 %v312, %v307
    %v407 = vpack.c.bf16 %v395, %v390
    %v408 = vld [vmem:[%s3] sm:$0xf]
    %v409 = vld [vmem:[%s3 + $0x4] sm:$0xf]
    %v410 = vld [vmem:[%s3 + $0x8] sm:$0xf]
    %v411 = vld [vmem:[%s3 + $0xc] sm:$0xf]
    %v416 = vunpack.c.l.b16 %v408
    %v417 = vunpack.c.l.b16 %v409
    %v418 = vunpack.c.l.b16 %v410
    %v419 = vunpack.c.l.b16 %v411
    %v420 = vpack.c.b16 %v417, %v416
    %v421 = vpack.c.b16 %v419, %v418
    %v425 = vsel %vm135, %v406, 0
    %v428 = vsel %vm135, %v407, 0
    %430 = vmatprep.subr.bf16.mxu0 0
    %431 = vmatpush1.bf16.msra.mxu0 0
    %432 = vmatprep.subr.bf16.mxu0 0
    %433 = vmatpush1.bf16.msra.mxu0 0
    %434 = vmatprep.subr.bf16.mxu0 0
    %435 = vmatpush1.bf16.msra.mxu0 0
    %436 = vmatprep.subr.bf16.mxu0 0
    %437 = vmatpush1.bf16.msra.mxu0 0
    %438 = vmatprep.subr.bf16.mxu0 0
    %439 = vmatpush1.bf16.msra.mxu0 0
    %440 = vmatprep.subr.bf16.mxu0 0
    %441 = vmatpush1.bf16.msra.mxu0 0
    %442 = vmatprep.subr.bf16.mxu0 0
    %443 = vmatpush1.bf16.msra.mxu0 %v421
    %444 = vmatprep.subr.bf16.mxu0 0
    %445 = vmatpush1.bf16.msra.mxu0 %v420
    %446 = vmatprep.subr.bf16.mxu0 0
    %447 = vmatpush2.bf16.msra.mxu0 0
    %448 = vmatprep.subr.bf16.mxu0 0
    %449 = vmatpush2.bf16.msra.mxu0 0
    %450 = vmatprep.subr.bf16.mxu0 0
    %451 = vmatpush2.bf16.msra.mxu0 0
    %452 = vmatprep.subr.bf16.mxu0 0
    %453 = vmatpush2.bf16.msra.mxu0 0
    %454 = vmatprep.subr.bf16.mxu0 0
    %455 = vmatpush2.bf16.msra.mxu0 0
    %456 = vmatprep.subr.bf16.mxu0 0
    %457 = vmatpush2.bf16.msra.mxu0 0
    %458 = vmatprep.subr.bf16.mxu0 0
    %459 = vmatpush2.bf16.msra.mxu0 0
    %460 = vmatprep.subr.bf16.mxu0 0
    %461 = vmatpush2.bf16.msra.mxu0 0
    %462 = vmatprep.mubr.bf16.mxu0 0
    %463 = vmatmul.mubr.bf16.gmra.mxu0 %v425
    %v464 = vpop.f32.mrf.mxu0
    %v465 = vadd.f32 0.0, %v464
    %v466 = vpop.f32.mrf.mxu0
    %v467 = vpop.f32.mrf.mxu0
    %v468 = vadd.f32 0.0, %v467
    %v469 = vpop.f32.mrf.mxu0
    %470 = vmatprep.mubr.bf16.mxu0 0
    %471 = vmatmul.mubr.bf16.gmra.mxu0 %v428
    %v472 = vpop.f32.mrf.mxu0
    %v473 = vadd.f32 0.0, %v472
    %v474 = vpop.f32.mrf.mxu0
    %v475 = vpop.f32.mrf.mxu0
    %v476 = vadd.f32 0.0, %v475
    %v477 = vpop.f32.mrf.mxu0
    %478 = vdwg.mxu0
    %v479 = vld [vmem:[%s4] sm:$0x1]
    %v480 = vld [vmem:[%s4 + $0x1] sm:$0x1]
    %v481 = vsel %vm135, %v465, 0.0
    %v482 = vsel %vm135, %v468, 0.0
    %v483 = vadd.f32 %v481, %v482
    %v484 = vsel %vm135, %v473, 0.0
    %v485 = vadd.f32 %v483, %v484
    %v486 = vsel %vm135, %v476, 0.0
    %v487 = vadd.f32 %v485, %v486
    %v488 = vrot.slane %v487, 4
    %v489 = vadd.f32 %v487, %v488
    %v490 = vrot.slane %v489, 2
    %v491 = vadd.f32 %v489, %v490
    %v492 = vrot.slane %v491, 1
    %v493 = vadd.f32 %v491, %v492
    %v494 = vrcp.pop 32.0
    %v495 = vmul.f32 %v493, %v494
    %v496 = vsub.f32 %v465, %v495
    %v497 = vsub.f32 %v468, %v495
    %v498 = vsub.f32 %v473, %v495
    %v499 = vsub.f32 %v476, %v495
    %v500 = vmul.f32 %v496, %v496
    %v501 = vmul.f32 %v497, %v497
    %v502 = vmul.f32 %v498, %v498
    %v503 = vmul.f32 %v499, %v499
    %v504 = vsel %vm135, %v500, 0.0
    %v505 = vsel %vm135, %v501, 0.0
    %v506 = vadd.f32 %v504, %v505
    %v507 = vsel %vm135, %v502, 0.0
    %v508 = vadd.f32 %v506, %v507
    %v509 = vsel %vm135, %v503, 0.0
    %v510 = vadd.f32 %v508, %v509
    %v511 = vrot.slane %v510, 4
    %v512 = vadd.f32 %v510, %v511
    %v513 = vrot.slane %v512, 2
    %v514 = vadd.f32 %v512, %v513
    %v515 = vrot.slane %v514, 1
    %v516 = vadd.f32 %v514, %v515
    %v517 = vmul.f32 %v516, %v494
    %v518 = vadd.f32 %v517, 1e-05
    %v519 = vrsqrt.pop %v518
    %v520 = vmul.f32 %v479, %v519
    %v521 = vlaneseq
    %v522 = vshrl.u32 %v521, 7
    %v523 = vsub.s32 0, %v522
    %v524 = vrot.slane %v520, %v523
    %v525 = vmul.f32 %v496, %v524
    %v526 = vmul.f32 %v497, %v524
    %v527 = vmul.f32 %v498, %v524
    %v528 = vmul.f32 %v499, %v524
    %v529 = vlaneseq
    %v530 = vshrl.u32 %v529, 7
    %v531 = vsub.s32 0, %v530
    %v532 = vrot.slane %v480, %v531
    %v533 = vadd.f32 %v525, %v532
    %v534 = vadd.f32 %v526, %v532
    %v535 = vadd.f32 %v527, %v532
    %v536 = vadd.f32 %v528, %v532
    %v537 = vmax.f32 %v533, 0.0
    %v538 = vmax.f32 %v534, 0.0
    %v539 = vmax.f32 %v535, 0.0
    %v540 = vmax.f32 %v536, 0.0
    %v541 = vld [vmem:[%s18] sm:$0xff]
    %v542 = vld [vmem:[%s18 + $0x8] sm:$0xff]
    %vm543 = vcmask 130048
    %v545 = vsel %vm543, %v541, 0
    %v548 = vsel %vm543, %v542, 0
    %550 = vmatprep.subr.mxu0 0.0
    %551 = vmatpush1.msra.mxu0 0.0
    %552 = vmatprep.subr.mxu0 0.0
    %553 = vmatpush1.msra.mxu0 0.0
    %554 = vmatprep.subr.mxu0 0.0
    %555 = vmatpush1.msra.mxu0 0.0
    %556 = vmatprep.subr.mxu0 0.0
    %557 = vmatpush1.msra.mxu0 0.0
    %558 = vmatprep.subr.mxu0 0.0
    %559 = vmatpush1.msra.mxu0 0.0
    %560 = vmatprep.subr.mxu0 0.0
    %561 = vmatpush1.msra.mxu0 0.0
    %562 = vmatprep.subr.mxu0 0.0
    %563 = vmatpush1.msra.mxu0 0.0
    %564 = vmatprep.subr.mxu0 0.0
    %565 = vmatpush1.msra.mxu0 0.0
    %566 = vmatprep.subr.mxu0 0.0
    %567 = vmatpush1.msra.mxu0 0.0
    %568 = vmatprep.subr.mxu0 0.0
    %569 = vmatpush1.msra.mxu0 0.0
    %570 = vmatprep.subr.mxu0 0.0
    %571 = vmatpush1.msra.mxu0 0.0
    %572 = vmatprep.subr.mxu0 0.0
    %573 = vmatpush1.msra.mxu0 0.0
    %574 = vmatprep.subr.mxu0 0.0
    %575 = vmatpush1.msra.mxu0 0.0
    %576 = vmatprep.subr.mxu0 0.0
    %577 = vmatpush1.msra.mxu0 0.0
    %578 = vmatprep.subr.mxu0 0.0
    %579 = vmatpush1.msra.mxu0 %v538
    %580 = vmatprep.subr.mxu0 0.0
    %581 = vmatpush1.msra.mxu0 %v537
    %582 = vmatprep.subr.mxu0 0.0
    %583 = vmatpush2.msra.mxu0 0.0
    %584 = vmatprep.subr.mxu0 0.0
    %585 = vmatpush2.msra.mxu0 0.0
    %586 = vmatprep.subr.mxu0 0.0
    %587 = vmatpush2.msra.mxu0 0.0
    %588 = vmatprep.subr.mxu0 0.0
    %589 = vmatpush2.msra.mxu0 0.0
    %590 = vmatprep.subr.mxu0 0.0
    %591 = vmatpush2.msra.mxu0 0.0
    %592 = vmatprep.subr.mxu0 0.0
    %593 = vmatpush2.msra.mxu0 0.0
    %594 = vmatprep.subr.mxu0 0.0
    %595 = vmatpush2.msra.mxu0 0.0
    %596 = vmatprep.subr.mxu0 0.0
    %597 = vmatpush2.msra.mxu0 0.0
    %598 = vmatprep.subr.mxu0 0.0
    %599 = vmatpush2.msra.mxu0 0.0
    %600 = vmatprep.subr.mxu0 0.0
    %601 = vmatpush2.msra.mxu0 0.0
    %602 = vmatprep.subr.mxu0 0.0
    %603 = vmatpush2.msra.mxu0 0.0
    %604 = vmatprep.subr.mxu0 0.0
    %605 = vmatpush2.msra.mxu0 0.0
    %606 = vmatprep.subr.mxu0 0.0
    %607 = vmatpush2.msra.mxu0 0.0
    %608 = vmatprep.subr.mxu0 0.0
    %609 = vmatpush2.msra.mxu0 0.0
    %610 = vmatprep.subr.mxu0 0.0
    %611 = vmatpush2.msra.mxu0 0.0
    %612 = vmatprep.subr.mxu0 0.0
    %613 = vmatpush2.msra.mxu0 0.0
    %614 = vmatprep.mubr.f32.mxu0 0.0
    %615 = vmatmul.mubr.f32.gmra.mxu0 %v545
    %v616 = vpop.f32.mrf.mxu0
    %v617 = vadd.f32 0.0, %v616
    %v618 = vpop.f32.mrf.mxu0
    %619 = vmatprep.mubr.f32.mxu0 0.0
    %620 = vmatmul.mubr.f32.gmra.mxu0 %v548
    %v621 = vpop.f32.mrf.mxu0
    %v622 = vadd.f32 0.0, %v621
    %v623 = vpop.f32.mrf.mxu0
    %624 = vdwg.mxu0
    %625 = vmatprep.subr.mxu0 0.0
    %626 = vmatpush1.msra.mxu0 0.0
    %627 = vmatprep.subr.mxu0 0.0
    %628 = vmatpush1.msra.mxu0 0.0
    %629 = vmatprep.subr.mxu0 0.0
    %630 = vmatpush1.msra.mxu0 0.0
    %631 = vmatprep.subr.mxu0 0.0
    %632 = vmatpush1.msra.mxu0 0.0
    %633 = vmatprep.subr.mxu0 0.0
    %634 = vmatpush1.msra.mxu0 0.0
    %635 = vmatprep.subr.mxu0 0.0
    %636 = vmatpush1.msra.mxu0 0.0
    %637 = vmatprep.subr.mxu0 0.0
    %638 = vmatpush1.msra.mxu0 0.0
    %639 = vmatprep.subr.mxu0 0.0
    %640 = vmatpush1.msra.mxu0 0.0
    %641 = vmatprep.subr.mxu0 0.0
    %642 = vmatpush1.msra.mxu0 0.0
    %643 = vmatprep.subr.mxu0 0.0
    %644 = vmatpush1.msra.mxu0 0.0
    %645 = vmatprep.subr.mxu0 0.0
    %646 = vmatpush1.msra.mxu0 0.0
    %647 = vmatprep.subr.mxu0 0.0
    %648 = vmatpush1.msra.mxu0 0.0
    %649 = vmatprep.subr.mxu0 0.0
    %650 = vmatpush1.msra.mxu0 0.0
    %651 = vmatprep.subr.mxu0 0.0
    %652 = vmatpush1.msra.mxu0 0.0
    %653 = vmatprep.subr.mxu0 0.0
    %654 = vmatpush1.msra.mxu0 %v540
    %655 = vmatprep.subr.mxu0 0.0
    %656 = vmatpush1.msra.mxu0 %v539
    %657 = vmatprep.subr.mxu0 0.0
    %658 = vmatpush2.msra.mxu0 0.0
    %659 = vmatprep.subr.mxu0 0.0
    %660 = vmatpush2.msra.mxu0 0.0
    %661 = vmatprep.subr.mxu0 0.0
    %662 = vmatpush2.msra.mxu0 0.0
    %663 = vmatprep.subr.mxu0 0.0
    %664 = vmatpush2.msra.mxu0 0.0
    %665 = vmatprep.subr.mxu0 0.0
    %666 = vmatpush2.msra.mxu0 0.0
    %667 = vmatprep.subr.mxu0 0.0
    %668 = vmatpush2.msra.mxu0 0.0
    %669 = vmatprep.subr.mxu0 0.0
    %670 = vmatpush2.msra.mxu0 0.0
    %671 = vmatprep.subr.mxu0 0.0
    %672 = vmatpush2.msra.mxu0 0.0
    %673 = vmatprep.subr.mxu0 0.0
    %674 = vmatpush2.msra.mxu0 0.0
    %675 = vmatprep.subr.mxu0 0.0
    %676 = vmatpush2.msra.mxu0 0.0
    %677 = vmatprep.subr.mxu0 0.0
    %678 = vmatpush2.msra.mxu0 0.0
    %679 = vmatprep.subr.mxu0 0.0
    %680 = vmatpush2.msra.mxu0 0.0
    %681 = vmatprep.subr.mxu0 0.0
    %682 = vmatpush2.msra.mxu0 0.0
    %683 = vmatprep.subr.mxu0 0.0
    %684 = vmatpush2.msra.mxu0 0.0
    %685 = vmatprep.subr.mxu0 0.0
    %686 = vmatpush2.msra.mxu0 0.0
    %687 = vmatprep.subr.mxu0 0.0
    %688 = vmatpush2.msra.mxu0 0.0
    %689 = vmatprep.mubr.f32.mxu0 0.0
    %690 = vmatmul.mubr.f32.gmra.mxu0 %v545
    %v691 = vpop.f32.mrf.mxu0
    %v692 = vadd.f32 0.0, %v691
    %v693 = vpop.f32.mrf.mxu0
    %694 = vmatprep.mubr.f32.mxu0 0.0
    %695 = vmatmul.mubr.f32.gmra.mxu0 %v548
    %v696 = vpop.f32.mrf.mxu0
    %v697 = vadd.f32 0.0, %v696
    %v698 = vpop.f32.mrf.mxu0
    %699 = vdwg.mxu0
    %v700 = vmax.f32 %v617, %v622
    %v701 = vmax.f32 %v692, %v697
    %702 = vst [vmem:[#allocation2] sm:$0xff] 0.0
    %703 = vst [vmem:[#allocation2 + $0x8] sm:$0xff] 0.0
    %704 = vst [vmem:[#allocation2 + $0x10] sm:$0xff] 0.0
    %705 = vst [vmem:[#allocation2 + $0x18] sm:$0xff] 0.0
    %706 = vst [vmem:[#allocation2 + $0x20] sm:$0xff] 0.0
    %707 = vst [vmem:[#allocation2 + $0x28] sm:$0xff] 0.0
    %708 = vst [vmem:[#allocation2 + $0x30] sm:$0xff] 0.0
    %709 = vst [vmem:[#allocation2 + $0x38] sm:$0xff] 0.0
    %710 = vst [vmem:[#allocation2 + $0x40] sm:$0xff] 0.0
    %711 = vst [vmem:[#allocation2 + $0x48] sm:$0xff] 0.0
    %712 = vst [vmem:[#allocation2 + $0x50] sm:$0xff] 0.0
    %713 = vst [vmem:[#allocation2 + $0x58] sm:$0xff] 0.0
    %714 = vst [vmem:[#allocation2 + $0x60] sm:$0xff] 0.0
    %715 = vst [vmem:[#allocation2 + $0x68] sm:$0xff] 0.0
    %716 = vst [vmem:[#allocation2 + $0x70] sm:$0xff] 0.0
    %717 = vst [vmem:[#allocation2 + $0x78] sm:$0xff] 0.0
    %vm726 = vcmask 1042432
    %v727 = vrot.slane %v216, 5
    %v728 = vrot.slane %v217, 5
    %v729 = vsel %vm726, %v727, %v728
    %v730 = vrot.slane %v218, 5
    %v731 = vsel %vm726, %v728, %v730
    %v732 = vrot.slane %v219, 5
    %v733 = vsel %vm726, %v730, %v732
    %v734 = vrot.slane %v220, 5
    %v735 = vrot.slane %v221, 5
    %v736 = vsel %vm726, %v734, %v735
    %v737 = vrot.slane %v222, 5
    %v738 = vsel %vm726, %v735, %v737
    %v739 = vrot.slane %v223, 5
    %v740 = vsel %vm726, %v737, %v739
    %741 = vrot.lane.b32.xlu0 %v727, 32
    %v742 = vpop.permute.xlu0 %741
    %743 = vrot.lane.b32.xlu0 %v729, 32
    %v744 = vpop.permute.xlu0 %743
    %745 = vrot.lane.b32.xlu0 %v731, 32
    %v746 = vpop.permute.xlu0 %745
    %747 = vrot.lane.b32.xlu0 %v733, 32
    %v748 = vpop.permute.xlu0 %747
    %749 = vrot.lane.b32.xlu0 %v734, 32
    %v750 = vpop.permute.xlu0 %749
    %751 = vrot.lane.b32.xlu0 %v736, 32
    %v752 = vpop.permute.xlu0 %751
    %753 = vrot.lane.b32.xlu0 %v738, 32
    %v754 = vpop.permute.xlu0 %753
    %755 = vrot.lane.b32.xlu0 %v740, 32
    %v756 = vpop.permute.xlu0 %755
    %vm765 = vcmask 523523
    %766 = vst.msk [vmem:[#allocation2] sm:$0xf8] %vm765, %v742
    %vm767 = vcmask 523520
    %768 = vst.msk [vmem:[#allocation2 + $0x10] sm:$0xff] %vm767, %v744
    %769 = vst.msk [vmem:[#allocation2 + $0x20] sm:$0xff] %vm767, %v746
    %770 = vst.msk [vmem:[#allocation2 + $0x30] sm:$0xff] %vm767, %v748
    %771 = vst.msk [vmem:[#allocation2 + $0x40] sm:$0xf8] %vm765, %v750
    %772 = vst.msk [vmem:[#allocation2 + $0x50] sm:$0xff] %vm767, %v752
    %773 = vst.msk [vmem:[#allocation2 + $0x60] sm:$0xff] %vm767, %v754
    %774 = vst.msk [vmem:[#allocation2 + $0x70] sm:$0xff] %vm767, %v756
    %vm775 = vcmask 1041408
    %v776 = vrot.slane %v216, 6
    %v777 = vrot.slane %v217, 6
    %v778 = vsel %vm775, %v776, %v777
    %v779 = vrot.slane %v218, 6
    %v780 = vsel %vm775, %v777, %v779
    %v781 = vrot.slane %v219, 6
    %v782 = vsel %vm775, %v779, %v781
    %v783 = vrot.slane %v220, 6
    %v784 = vrot.slane %v221, 6
    %v785 = vsel %vm775, %v783, %v784
    %v786 = vrot.slane %v222, 6
    %v787 = vsel %vm775, %v784, %v786
    %v788 = vrot.slane %v223, 6
    %v789 = vsel %vm775, %v786, %v788
    %790 = vrot.lane.b32.xlu0 %v776, 64
    %v791 = vpop.permute.xlu0 %790
    %792 = vrot.lane.b32.xlu0 %v778, 64
    %v793 = vpop.permute.xlu0 %792
    %794 = vrot.lane.b32.xlu0 %v780, 64
    %v795 = vpop.permute.xlu0 %794
    %796 = vrot.lane.b32.xlu0 %v782, 64
    %v797 = vpop.permute.xlu0 %796
    %798 = vrot.lane.b32.xlu0 %v783, 64
    %v799 = vpop.permute.xlu0 %798
    %800 = vrot.lane.b32.xlu0 %v785, 64
    %v801 = vpop.permute.xlu0 %800
    %802 = vrot.lane.b32.xlu0 %v787, 64
    %v803 = vpop.permute.xlu0 %802
    %804 = vrot.lane.b32.xlu0 %v789, 64
    %v805 = vpop.permute.xlu0 %804
    %vm814 = vcmask 785922
    %815 = vst.msk [vmem:[#allocation2] sm:$0xfc] %vm814, %v791
    %vm816 = vcmask 785920
    %817 = vst.msk [vmem:[#allocation2 + $0x10] sm:$0xff] %vm816, %v793
    %818 = vst.msk [vmem:[#allocation2 + $0x20] sm:$0xff] %vm816, %v795
    %819 = vst.msk [vmem:[#allocation2 + $0x30] sm:$0xff] %vm816, %v797
    %820 = vst.msk [vmem:[#allocation2 + $0x40] sm:$0xfc] %vm814, %v799
    %821 = vst.msk [vmem:[#allocation2 + $0x50] sm:$0xff] %vm816, %v801
    %822 = vst.msk [vmem:[#allocation2 + $0x60] sm:$0xff] %vm816, %v803
    %823 = vst.msk [vmem:[#allocation2 + $0x70] sm:$0xff] %vm816, %v805
    %vm824 = vcmask 1040384
    %v825 = vrot.slane %v216, 7
    %v826 = vrot.slane %v217, 7
    %v827 = vsel %vm824, %v825, %v826
    %v828 = vrot.slane %v218, 7
    %v829 = vsel %vm824, %v826, %v828
    %v830 = vrot.slane %v219, 7
    %v831 = vsel %vm824, %v828, %v830
    %v832 = vrot.slane %v220, 7
    %v833 = vrot.slane %v221, 7
    %v834 = vsel %vm824, %v832, %v833
    %v835 = vrot.slane %v222, 7
    %v836 = vsel %vm824, %v833, %v835
    %v837 = vrot.slane %v223, 7
    %v838 = vsel %vm824, %v835, %v837
    %839 = vrot.lane.b32.xlu0 %v825, 96
    %v840 = vpop.permute.xlu0 %839
    %841 = vrot.lane.b32.xlu0 %v827, 96
    %v842 = vpop.permute.xlu0 %841
    %843 = vrot.lane.b32.xlu0 %v829, 96
    %v844 = vpop.permute.xlu0 %843
    %845 = vrot.lane.b32.xlu0 %v831, 96
    %v846 = vpop.permute.xlu0 %845
    %847 = vrot.lane.b32.xlu0 %v832, 96
    %v848 = vpop.permute.xlu0 %847
    %849 = vrot.lane.b32.xlu0 %v834, 96
    %v850 = vpop.permute.xlu0 %849
    %851 = vrot.lane.b32.xlu0 %v836, 96
    %v852 = vpop.permute.xlu0 %851
    %853 = vrot.lane.b32.xlu0 %v838, 96
    %v854 = vpop.permute.xlu0 %853
    %vm863 = vcmask 1048321
    %864 = vst.msk [vmem:[#allocation2] sm:$0xfe] %vm863, %v840
    %vm865 = vcmask 1048320
    %866 = vst.msk [vmem:[#allocation2 + $0x10] sm:$0xff] %vm865, %v842
    %867 = vst.msk [vmem:[#allocation2 + $0x20] sm:$0xff] %vm865, %v844
    %868 = vst.msk [vmem:[#allocation2 + $0x30] sm:$0xff] %vm865, %v846
    %869 = vst.msk [vmem:[#allocation2 + $0x40] sm:$0xfe] %vm863, %v848
    %870 = vst.msk [vmem:[#allocation2 + $0x50] sm:$0xff] %vm865, %v850
    %871 = vst.msk [vmem:[#allocation2 + $0x60] sm:$0xff] %vm865, %v852
    %872 = vst.msk [vmem:[#allocation2 + $0x70] sm:$0xff] %vm865, %v854
    %873 = vst.msk [vmem:[#allocation2 + $0x8] sm:$0xff] %vm135, %v216
    %874 = vst.msk [vmem:[#allocation2 + $0x18] sm:$0xff] %vm135, %v217
    %875 = vst.msk [vmem:[#allocation2 + $0x28] sm:$0xff] %vm135, %v218
    %876 = vst.msk [vmem:[#allocation2 + $0x38] sm:$0xff] %vm135, %v219
    %877 = vst.msk [vmem:[#allocation2 + $0x48] sm:$0xff] %vm135, %v220
    %878 = vst.msk [vmem:[#allocation2 + $0x58] sm:$0xff] %vm135, %v221
    %879 = vst.msk [vmem:[#allocation2 + $0x68] sm:$0xff] %vm135, %v222
    %880 = vst.msk [vmem:[#allocation2 + $0x78] sm:$0xff] %vm135, %v223
    %vm881 = vcmask 1046528
    %v882 = vrot.slane %v216, 1
    %v883 = vrot.slane %v217, 1
    %v884 = vsel %vm881, %v882, %v883
    %v885 = vrot.slane %v218, 1
    %v886 = vsel %vm881, %v883, %v885
    %v887 = vrot.slane %v219, 1
    %v888 = vsel %vm881, %v885, %v887
    %v889 = vrot.slane %v220, 1
    %v890 = vrot.slane %v221, 1
    %v891 = vsel %vm881, %v889, %v890
    %v892 = vrot.slane %v222, 1
    %v893 = vsel %vm881, %v890, %v892
    %v894 = vrot.slane %v223, 1
    %v895 = vsel %vm881, %v892, %v894
    %896 = vrot.lane.b32.xlu0 %v884, 32
    %v897 = vpop.permute.xlu0 %896
    %898 = vrot.lane.b32.xlu0 %v886, 32
    %v899 = vpop.permute.xlu0 %898
    %900 = vrot.lane.b32.xlu0 %v888, 32
    %v901 = vpop.permute.xlu0 %900
    %902 = vrot.lane.b32.xlu0 %v887, 32
    %v903 = vpop.permute.xlu0 %902
    %904 = vrot.lane.b32.xlu0 %v891, 32
    %v905 = vpop.permute.xlu0 %904
    %906 = vrot.lane.b32.xlu0 %v893, 32
    %v907 = vpop.permute.xlu0 %906
    %908 = vrot.lane.b32.xlu0 %v895, 32
    %v909 = vpop.permute.xlu0 %908
    %910 = vrot.lane.b32.xlu0 %v894, 32
    %v911 = vpop.permute.xlu0 %910
    %920 = vst.msk [vmem:[#allocation2 + $0x8] sm:$0xff] %vm767, %v897
    %921 = vst.msk [vmem:[#allocation2 + $0x18] sm:$0xff] %vm767, %v899
    %922 = vst.msk [vmem:[#allocation2 + $0x28] sm:$0xff] %vm767, %v901
    %vm923 = vcmask 522496
    %924 = vst.msk [vmem:[#allocation2 + $0x38] sm:$0x7f] %vm923, %v903
    %925 = vst.msk [vmem:[#allocation2 + $0x48] sm:$0xff] %vm767, %v905
    %926 = vst.msk [vmem:[#allocation2 + $0x58] sm:$0xff] %vm767, %v907
    %927 = vst.msk [vmem:[#allocation2 + $0x68] sm:$0xff] %vm767, %v909
    %928 = vst.msk [vmem:[#allocation2 + $0x78] sm:$0x7f] %vm923, %v911
    %vm929 = vcmask 1045504
    %v930 = vrot.slane %v216, 2
    %v931 = vrot.slane %v217, 2
    %v932 = vsel %vm929, %v930, %v931
    %v933 = vrot.slane %v218, 2
    %v934 = vsel %vm929, %v931, %v933
    %v935 = vrot.slane %v219, 2
    %v936 = vsel %vm929, %v933, %v935
    %v937 = vrot.slane %v220, 2
    %v938 = vrot.slane %v221, 2
    %v939 = vsel %vm929, %v937, %v938
    %v940 = vrot.slane %v222, 2
    %v941 = vsel %vm929, %v938, %v940
    %v942 = vrot.slane %v223, 2
    %v943 = vsel %vm929, %v940, %v942
    %944 = vrot.lane.b32.xlu0 %v932, 64
    %v945 = vpop.permute.xlu0 %944
    %946 = vrot.lane.b32.xlu0 %v934, 64
    %v947 = vpop.permute.xlu0 %946
    %948 = vrot.lane.b32.xlu0 %v936, 64
    %v949 = vpop.permute.xlu0 %948
    %950 = vrot.lane.b32.xlu0 %v935, 64
    %v951 = vpop.permute.xlu0 %950
    %952 = vrot.lane.b32.xlu0 %v939, 64
    %v953 = vpop.permute.xlu0 %952
    %954 = vrot.lane.b32.xlu0 %v941, 64
    %v955 = vpop.permute.xlu0 %954
    %956 = vrot.lane.b32.xlu0 %v943, 64
    %v957 = vpop.permute.xlu0 %956
    %958 = vrot.lane.b32.xlu0 %v942, 64
    %v959 = vpop.permute.xlu0 %958
    %968 = vst.msk [vmem:[#allocation2 + $0x8] sm:$0xff] %vm816, %v945
    %969 = vst.msk [vmem:[#allocation2 + $0x18] sm:$0xff] %vm816, %v947
    %970 = vst.msk [vmem:[#allocation2 + $0x28] sm:$0xff] %vm816, %v949
    %vm971 = vcmask 783872
    %972 = vst.msk [vmem:[#allocation2 + $0x38] sm:$0x3f] %vm971, %v951
    %973 = vst.msk [vmem:[#allocation2 + $0x48] sm:$0xff] %vm816, %v953
    %974 = vst.msk [vmem:[#allocation2 + $0x58] sm:$0xff] %vm816, %v955
    %975 = vst.msk [vmem:[#allocation2 + $0x68] sm:$0xff] %vm816, %v957
    %976 = vst.msk [vmem:[#allocation2 + $0x78] sm:$0x3f] %vm971, %v959
    %vm977 = vcmask 1044480
    %v978 = vrot.slane %v216, 3
    %v979 = vrot.slane %v217, 3
    %v980 = vsel %vm977, %v978, %v979
    %v981 = vrot.slane %v218, 3
    %v982 = vsel %vm977, %v979, %v981
    %v983 = vrot.slane %v219, 3
    %v984 = vsel %vm977, %v981, %v983
    %v985 = vrot.slane %v220, 3
    %v986 = vrot.slane %v221, 3
    %v987 = vsel %vm977, %v985, %v986
    %v988 = vrot.slane %v222, 3
    %v989 = vsel %vm977, %v986, %v988
    %v990 = vrot.slane %v223, 3
    %v991 = vsel %vm977, %v988, %v990
    %992 = vrot.lane.b32.xlu0 %v980, 96
    %v993 = vpop.permute.xlu0 %992
    %994 = vrot.lane.b32.xlu0 %v982, 96
    %v995 = vpop.permute.xlu0 %994
    %996 = vrot.lane.b32.xlu0 %v984, 96
    %v997 = vpop.permute.xlu0 %996
    %998 = vrot.lane.b32.xlu0 %v983, 96
    %v999 = vpop.permute.xlu0 %998
    %1000 = vrot.lane.b32.xlu0 %v987, 96
    %v1001 = vpop.permute.xlu0 %1000
    %1002 = vrot.lane.b32.xlu0 %v989, 96
    %v1003 = vpop.permute.xlu0 %1002
    %1004 = vrot.lane.b32.xlu0 %v991, 96
    %v1005 = vpop.permute.xlu0 %1004
    %1006 = vrot.lane.b32.xlu0 %v990, 96
    %v1007 = vpop.permute.xlu0 %1006
    %1016 = vst.msk [vmem:[#allocation2 + $0x8] sm:$0xff] %vm865, %v993
    %1017 = vst.msk [vmem:[#allocation2 + $0x18] sm:$0xff] %vm865, %v995
    %1018 = vst.msk [vmem:[#allocation2 + $0x28] sm:$0xff] %vm865, %v997
    %vm1019 = vcmask 1045248
    %1020 = vst.msk [vmem:[#allocation2 + $0x38] sm:$0x1f] %vm1019, %v999
    %1021 = vst.msk [vmem:[#allocation2 + $0x48] sm:$0xff] %vm865, %v1001
    %1022 = vst.msk [vmem:[#allocation2 + $0x58] sm:$0xff] %vm865, %v1003
    %1023 = vst.msk [vmem:[#allocation2 + $0x68] sm:$0xff] %vm865, %v1005
    %1024 = vst.msk [vmem:[#allocation2 + $0x78] sm:$0x1f] %vm1019, %v1007
    %v1025 = vlaneseq
    %v1026 = vshrl.u32 %v1025, 7
    %v1027 = vadd.s32 %v1026, 8
    %v1028 = vadd.s32 %v1026, 16
    %v1029 = vadd.s32 %v1026, 24
    %vm1030 = vcmp.eq.s32.totalorder %v1026, 0
    %vm1031 = vcmp.eq.s32.totalorder %v1027, 0
    %vm1032 = vcmp.eq.s32.totalorder %v1028, 0
    %vm1033 = vcmp.eq.s32.totalorder %v1029, 0
    %v1034 = vld [vmem:[#allocation2] sm:$0xff]
    %v1035 = vld [vmem:[#allocation2 + $0x10] sm:$0xff]
    %v1036 = vld [vmem:[#allocation2 + $0x20] sm:$0xff]
    %v1037 = vld [vmem:[#allocation2 + $0x30] sm:$0xff]
    %v1038 = vld [vmem:[#allocation2 + $0x40] sm:$0xff]
    %v1039 = vld [vmem:[#allocation2 + $0x50] sm:$0xff]
    %v1040 = vld [vmem:[#allocation2 + $0x60] sm:$0xff]
    %v1041 = vld [vmem:[#allocation2 + $0x70] sm:$0xff]
    %v1042 = vsel %vm1030, -inf, %v1034
    %v1043 = vsel %vm1031, -inf, %v1035
    %v1044 = vsel %vm1032, -inf, %v1036
    %v1045 = vsel %vm1033, -inf, %v1037
    %v1046 = vsel %vm1030, -inf, %v1038
    %v1047 = vsel %vm1031, -inf, %v1039
    %v1048 = vsel %vm1032, -inf, %v1040
    %v1049 = vsel %vm1033, -inf, %v1041
    %vm1050 = vcmp.eq.s32.totalorder %v1026, 31
    %vm1051 = vcmp.eq.s32.totalorder %v1027, 31
    %vm1052 = vcmp.eq.s32.totalorder %v1028, 31
    %vm1053 = vcmp.eq.s32.totalorder %v1029, 31
    %v1054 = vld [vmem:[#allocation2 + $0x8] sm:$0xff]
    %v1055 = vld [vmem:[#allocation2 + $0x18] sm:$0xff]
    %v1056 = vld [vmem:[#allocation2 + $0x28] sm:$0xff]
    %v1057 = vld [vmem:[#allocation2 + $0x38] sm:$0xff]
    %v1058 = vld [vmem:[#allocation2 + $0x48] sm:$0xff]
    %v1059 = vld [vmem:[#allocation2 + $0x58] sm:$0xff]
    %v1060 = vld [vmem:[#allocation2 + $0x68] sm:$0xff]
    %v1061 = vld [vmem:[#allocation2 + $0x78] sm:$0xff]
    %v1062 = vsel %vm1050, -inf, %v1054
    %v1063 = vsel %vm1051, -inf, %v1055
    %v1064 = vsel %vm1052, -inf, %v1056
    %v1065 = vsel %vm1053, -inf, %v1057
    %v1066 = vsel %vm1050, -inf, %v1058
    %v1067 = vsel %vm1051, -inf, %v1059
    %v1068 = vsel %vm1052, -inf, %v1060
    %v1069 = vsel %vm1053, -inf, %v1061
    %1070 = vrot.lane.b32.xlu0 %v216, 96
    %v1071 = vpop.permute.xlu0 %1070
    %1072 = vrot.lane.b32.xlu0 %v217, 96
    %v1073 = vpop.permute.xlu0 %1072
    %1074 = vrot.lane.b32.xlu0 %v218, 96
    %v1075 = vpop.permute.xlu0 %1074
    %1076 = vrot.lane.b32.xlu0 %v219, 96
    %v1077 = vpop.permute.xlu0 %1076
    %1078 = vrot.lane.b32.xlu0 %v220, 96
    %v1079 = vpop.permute.xlu0 %1078
    %1080 = vrot.lane.b32.xlu0 %v221, 96
    %v1081 = vpop.permute.xlu0 %1080
    %1082 = vrot.lane.b32.xlu0 %v222, 96
    %v1083 = vpop.permute.xlu0 %1082
    %1084 = vrot.lane.b32.xlu0 %v223, 96
    %v1085 = vpop.permute.xlu0 %1084
    %v1094 = vmax.f32 %v1042, %v1071
    %v1095 = vmax.f32 %v1043, %v1073
    %v1096 = vmax.f32 %v1044, %v1075
    %v1097 = vmax.f32 %v1045, %v1077
    %v1098 = vmax.f32 %v1046, %v1079
    %v1099 = vmax.f32 %v1047, %v1081
    %v1100 = vmax.f32 %v1048, %v1083
    %v1101 = vmax.f32 %v1049, %v1085
    %1110 = vrot.lane.b32.xlu0 %v1062, 64
    %v1111 = vpop.permute.xlu0 %1110
    %1112 = vrot.lane.b32.xlu0 %v1063, 64
    %v1113 = vpop.permute.xlu0 %1112
    %1114 = vrot.lane.b32.xlu0 %v1064, 64
    %v1115 = vpop.permute.xlu0 %1114
    %1116 = vrot.lane.b32.xlu0 %v1065, 64
    %v1117 = vpop.permute.xlu0 %1116
    %1118 = vrot.lane.b32.xlu0 %v1066, 64
    %v1119 = vpop.permute.xlu0 %1118
    %1120 = vrot.lane.b32.xlu0 %v1067, 64
    %v1121 = vpop.permute.xlu0 %1120
    %1122 = vrot.lane.b32.xlu0 %v1068, 64
    %v1123 = vpop.permute.xlu0 %1122
    %1124 = vrot.lane.b32.xlu0 %v1069, 64
    %v1125 = vpop.permute.xlu0 %1124
    %v1134 = vmax.f32 %v1094, %v1111
    %v1135 = vmax.f32 %v1095, %v1113
    %v1136 = vmax.f32 %v1096, %v1115
    %v1137 = vmax.f32 %v1097, %v1117
    %v1138 = vmax.f32 %v1098, %v1119
    %v1139 = vmax.f32 %v1099, %v1121
    %v1140 = vmax.f32 %v1100, %v1123
    %v1141 = vmax.f32 %v1101, %v1125
    %1150 = vrot.lane.b32.xlu0 %v1134, 32
    %v1151 = vpop.permute.xlu0 %1150
    %1152 = vrot.lane.b32.xlu0 %v1135, 32
    %v1153 = vpop.permute.xlu0 %1152
    %1154 = vrot.lane.b32.xlu0 %v1136, 32
    %v1155 = vpop.permute.xlu0 %1154
    %1156 = vrot.lane.b32.xlu0 %v1137, 32
    %v1157 = vpop.permute.xlu0 %1156
    %1158 = vrot.lane.b32.xlu0 %v1138, 32
    %v1159 = vpop.permute.xlu0 %1158
    %1160 = vrot.lane.b32.xlu0 %v1139, 32
    %v1161 = vpop.permute.xlu0 %1160
    %1162 = vrot.lane.b32.xlu0 %v1140, 32
    %v1163 = vpop.permute.xlu0 %1162
    %1164 = vrot.lane.b32.xlu0 %v1141, 32
    %v1165 = vpop.permute.xlu0 %1164
    %1174 = vst.msk [vmem:[#allocation2] sm:$0xff] %vm135, %v1151
    %1175 = vst.msk [vmem:[#allocation2 + $0x10] sm:$0xff] %vm135, %v1153
    %1176 = vst.msk [vmem:[#allocation2 + $0x20] sm:$0xff] %vm135, %v1155
    %1177 = vst.msk [vmem:[#allocation2 + $0x30] sm:$0xff] %vm135, %v1157
    %1178 = vst.msk [vmem:[#allocation2 + $0x40] sm:$0xff] %vm135, %v1159
    %1179 = vst.msk [vmem:[#allocation2 + $0x50] sm:$0xff] %vm135, %v1161
    %1180 = vst.msk [vmem:[#allocation2 + $0x60] sm:$0xff] %vm135, %v1163
    %1181 = vst.msk [vmem:[#allocation2 + $0x70] sm:$0xff] %vm135, %v1165
    %v1182 = vld [vmem:[#allocation2] sm:$0xff]
    %v1183 = vld [vmem:[#allocation2 + $0x8] sm:$0xff]
    %v1184 = vld [vmem:[#allocation2 + $0x10] sm:$0xff]
    %v1185 = vld [vmem:[#allocation2 + $0x18] sm:$0xff]
    %v1186 = vld [vmem:[#allocation2 + $0x20] sm:$0xff]
    %v1187 = vld [vmem:[#allocation2 + $0x28] sm:$0xff]
    %v1188 = vld [vmem:[#allocation2 + $0x30] sm:$0xff]
    %v1189 = vld [vmem:[#allocation2 + $0x38] sm:$0xff]
    %v1190 = vld [vmem:[#allocation2 + $0x40] sm:$0xff]
    %v1191 = vld [vmem:[#allocation2 + $0x48] sm:$0xff]
    %v1192 = vld [vmem:[#allocation2 + $0x50] sm:$0xff]
    %v1193 = vld [vmem:[#allocation2 + $0x58] sm:$0xff]
    %v1194 = vld [vmem:[#allocation2 + $0x60] sm:$0xff]
    %v1195 = vld [vmem:[#allocation2 + $0x68] sm:$0xff]
    %v1196 = vld [vmem:[#allocation2 + $0x70] sm:$0xff]
    %v1197 = vld [vmem:[#allocation2 + $0x78] sm:$0xff]
    %v1198 = vpack.c.bf16 %v1184, %v1182
    %v1199 = vpack.c.bf16 %v1185, %v1183
    %v1200 = vpack.c.bf16 %v1188, %v1186
    %v1201 = vpack.c.bf16 %v1189, %v1187
    %v1202 = vpack.c.bf16 %v1192, %v1190
    %v1203 = vpack.c.bf16 %v1193, %v1191
    %v1204 = vpack.c.bf16 %v1196, %v1194
    %v1205 = vpack.c.bf16 %v1197, %v1195
    %v1206 = vld [vmem:[%s7] sm:$0xf]
    %v1207 = vld [vmem:[%s7 + $0x4] sm:$0xf]
    %v1208 = vld [vmem:[%s7 + $0x8] sm:$0xf]
    %v1209 = vld [vmem:[%s7 + $0xc] sm:$0xf]
    %v1210 = vld [vmem:[%s7 + $0x10] sm:$0xf]
    %v1211 = vld [vmem:[%s7 + $0x14] sm:$0xf]
    %v1212 = vld [vmem:[%s7 + $0x18] sm:$0xf]
    %v1213 = vld [vmem:[%s7 + $0x1c] sm:$0xf]
    %v1214 = vld [vmem:[%s7 + $0x20] sm:$0xf]
    %v1215 = vld [vmem:[%s7 + $0x24] sm:$0xf]
    %v1216 = vld [vmem:[%s7 + $0x28] sm:$0xf]
    %v1217 = vld [vmem:[%s7 + $0x2c] sm:$0xf]
    %v1218 = vld [vmem:[%s7 + $0x30] sm:$0xf]
    %v1219 = vld [vmem:[%s7 + $0x34] sm:$0xf]
    %v1220 = vld [vmem:[%s7 + $0x38] sm:$0xf]
    %v1221 = vld [vmem:[%s7 + $0x3c] sm:$0xf]
    %v1222 = vld [vmem:[%s7 + $0x40] sm:$0xf]
    %v1223 = vld [vmem:[%s7 + $0x44] sm:$0xf]
    %v1224 = vld [vmem:[%s7 + $0x48] sm:$0xf]
    %v1225 = vld [vmem:[%s7 + $0x4c] sm:$0xf]
    %v1226 = vld [vmem:[%s7 + $0x50] sm:$0xf]
    %v1227 = vld [vmem:[%s7 + $0x54] sm:$0xf]
    %v1228 = vld [vmem:[%s7 + $0x58] sm:$0xf]
    %v1229 = vld [vmem:[%s7 + $0x5c] sm:$0xf]
    %v1230 = vld [vmem:[%s7 + $0x60] sm:$0xf]
    %v1231 = vld [vmem:[%s7 + $0x64] sm:$0xf]
    %v1232 = vld [vmem:[%s7 + $0x68] sm:$0xf]
    %v1233 = vld [vmem:[%s7 + $0x6c] sm:$0xf]
    %v1234 = vld [vmem:[%s7 + $0x70] sm:$0xf]
    %v1235 = vld [vmem:[%s7 + $0x74] sm:$0xf]
    %v1236 = vld [vmem:[%s7 + $0x78] sm:$0xf]
    %v1237 = vld [vmem:[%s7 + $0x7c] sm:$0xf]
    %v1270 = vunpack.c.l.b16 %v1206
    %v1271 = vunpack.c.l.b16 %v1207
    %v1272 = vunpack.c.l.b16 %v1208
    %v1273 = vunpack.c.l.b16 %v1209
    %v1274 = vunpack.c.l.b16 %v1210
    %v1275 = vunpack.c.l.b16 %v1211
    %v1276 = vunpack.c.l.b16 %v1212
    %v1277 = vunpack.c.l.b16 %v1213
    %v1278 = vunpack.c.l.b16 %v1214
    %v1279 = vunpack.c.l.b16 %v1215
    %v1280 = vunpack.c.l.b16 %v1216
    %v1281 = vunpack.c.l.b16 %v1217
    %v1282 = vunpack.c.l.b16 %v1218
    %v1283 = vunpack.c.l.b16 %v1219
    %v1284 = vunpack.c.l.b16 %v1220
    %v1285 = vunpack.c.l.b16 %v1221
    %v1286 = vunpack.c.l.b16 %v1222
    %v1287 = vunpack.c.l.b16 %v1223
    %v1288 = vunpack.c.l.b16 %v1224
    %v1289 = vunpack.c.l.b16 %v1225
    %v1290 = vunpack.c.l.b16 %v1226
    %v1291 = vunpack.c.l.b16 %v1227
    %v1292 = vunpack.c.l.b16 %v1228
    %v1293 = vunpack.c.l.b16 %v1229
    %v1294 = vunpack.c.l.b16 %v1230
    %v1295 = vunpack.c.l.b16 %v1231
    %v1296 = vunpack.c.l.b16 %v1232
    %v1297 = vunpack.c.l.b16 %v1233
    %v1298 = vunpack.c.l.b16 %v1234
    %v1299 = vunpack.c.l.b16 %v1235
    %v1300 = vunpack.c.l.b16 %v1236
    %v1301 = vunpack.c.l.b16 %v1237
    %v1302 = vpack.c.b16 %v1271, %v1270
    %v1303 = vpack.c.b16 %v1273, %v1272
    %v1304 = vpack.c.b16 %v1275, %v1274
    %v1305 = vpack.c.b16 %v1277, %v1276
    %v1306 = vpack.c.b16 %v1279, %v1278
    %v1307 = vpack.c.b16 %v1281, %v1280
    %v1308 = vpack.c.b16 %v1283, %v1282
    %v1309 = vpack.c.b16 %v1285, %v1284
    %v1310 = vpack.c.b16 %v1287, %v1286
    %v1311 = vpack.c.b16 %v1289, %v1288
    %v1312 = vpack.c.b16 %v1291, %v1290
    %v1313 = vpack.c.b16 %v1293, %v1292
    %v1314 = vpack.c.b16 %v1295, %v1294
    %v1315 = vpack.c.b16 %v1297, %v1296
    %v1316 = vpack.c.b16 %v1299, %v1298
    %v1317 = vpack.c.b16 %v1301, %v1300
    %1334 = vmatprep.subr.bf16.mxu0 0
    %1335 = vmatpush1.bf16.msra.mxu0 %v1309
    %1336 = vmatprep.subr.bf16.mxu0 0
    %1337 = vmatpush1.bf16.msra.mxu0 %v1308
    %1338 = vmatprep.subr.bf16.mxu0 0
    %1339 = vmatpush1.bf16.msra.mxu0 %v1307
    %1340 = vmatprep.subr.bf16.mxu0 0
    %1341 = vmatpush1.bf16.msra.mxu0 %v1306
    %1342 = vmatprep.subr.bf16.mxu0 0
    %1343 = vmatpush1.bf16.msra.mxu0 %v1305
    %1344 = vmatprep.subr.bf16.mxu0 0
    %1345 = vmatpush1.bf16.msra.mxu0 %v1304
    %1346 = vmatprep.subr.bf16.mxu0 0
    %1347 = vmatpush1.bf16.msra.mxu0 %v1303
    %1348 = vmatprep.subr.bf16.mxu0 0
    %1349 = vmatpush1.bf16.msra.mxu0 %v1302
    %1350 = vmatprep.subr.bf16.mxu0 0
    %1351 = vmatpush2.bf16.msra.mxu0 %v1317
    %1352 = vmatprep.subr.bf16.mxu0 0
    %1353 = vmatpush2.bf16.msra.mxu0 %v1316
    %1354 = vmatprep.subr.bf16.mxu0 0
    %1355 = vmatpush2.bf16.msra.mxu0 %v1315
    %1356 = vmatprep.subr.bf16.mxu0 0
    %1357 = vmatpush2.bf16.msra.mxu0 %v1314
    %1358 = vmatprep.subr.bf16.mxu0 0
    %1359 = vmatpush2.bf16.msra.mxu0 %v1313
    %1360 = vmatprep.subr.bf16.mxu0 0
    %1361 = vmatpush2.bf16.msra.mxu0 %v1312
    %1362 = vmatprep.subr.bf16.mxu0 0
    %1363 = vmatpush2.bf16.msra.mxu0 %v1311
    %1364 = vmatprep.subr.bf16.mxu0 0
    %1365 = vmatpush2.bf16.msra.mxu0 %v1310
    %1366 = vmatprep.mubr.bf16.mxu0 %v1199
    %1367 = vmatmul.mubr.bf16.gmra.mxu0 %v1198
    %v1368 = vpop.f32.mrf.mxu0
    %v1369 = vadd.f32 0.0, %v1368
    %v1370 = vpop.f32.mrf.mxu0
    %v1371 = vpop.f32.mrf.mxu0
    %v1372 = vadd.f32 0.0, %v1371
    %v1373 = vpop.f32.mrf.mxu0
    %1374 = vmatprep.mubr.bf16.mxu0 %v1201
    %1375 = vmatmul.mubr.bf16.gmra.mxu0 %v1200
    %v1376 = vpop.f32.mrf.mxu0
    %v1377 = vadd.f32 0.0, %v1376
    %v1378 = vpop.f32.mrf.mxu0
    %v1379 = vpop.f32.mrf.mxu0
    %v1380 = vadd.f32 0.0, %v1379
    %v1381 = vpop.f32.mrf.mxu0
    %1382 = vmatprep.mubr.bf16.mxu0 %v1203
    %1383 = vmatmul.mubr.bf16.gmra.mxu0 %v1202
    %v1384 = vpop.f32.mrf.mxu0
    %v1385 = vadd.f32 0.0, %v1384
    %v1386 = vpop.f32.mrf.mxu0
    %v1387 = vpop.f32.mrf.mxu0
    %v1388 = vadd.f32 0.0, %v1387
    %v1389 = vpop.f32.mrf.mxu0
    %1390 = vmatprep.mubr.bf16.mxu0 %v1205
    %1391 = vmatmul.mubr.bf16.gmra.mxu0 %v1204
    %v1392 = vpop.f32.mrf.mxu0
    %v1393 = vadd.f32 0.0, %v1392
    %v1394 = vpop.f32.mrf.mxu0
    %v1395 = vpop.f32.mrf.mxu0
    %v1396 = vadd.f32 0.0, %v1395
    %v1397 = vpop.f32.mrf.mxu0
    %1398 = vdwg.mxu0
    %v1399 = vld [vmem:[%s8] sm:$0x1]
    %v1400 = vld [vmem:[%s8 + $0x1] sm:$0x1]
    %v1401 = vsel %vm135, %v1369, 0.0
    %v1402 = vsel %vm135, %v1372, 0.0
    %v1403 = vadd.f32 %v1401, %v1402
    %v1404 = vsel %vm135, %v1377, 0.0
    %v1405 = vadd.f32 %v1403, %v1404
    %v1406 = vsel %vm135, %v1380, 0.0
    %v1407 = vadd.f32 %v1405, %v1406
    %v1408 = vsel %vm135, %v1385, 0.0
    %v1409 = vadd.f32 %v1407, %v1408
    %v1410 = vsel %vm135, %v1388, 0.0
    %v1411 = vadd.f32 %v1409, %v1410
    %v1412 = vsel %vm135, %v1393, 0.0
    %v1413 = vadd.f32 %v1411, %v1412
    %v1414 = vsel %vm135, %v1396, 0.0
    %v1415 = vadd.f32 %v1413, %v1414
    %v1416 = vrot.slane %v1415, 4
    %v1417 = vadd.f32 %v1415, %v1416
    %v1418 = vrot.slane %v1417, 2
    %v1419 = vadd.f32 %v1417, %v1418
    %v1420 = vrot.slane %v1419, 1
    %v1421 = vadd.f32 %v1419, %v1420
    %v1422 = vmul.f32 %v1421, %v157
    %v1423 = vsub.f32 %v1369, %v1422
    %v1424 = vsub.f32 %v1372, %v1422
    %v1425 = vsub.f32 %v1377, %v1422
    %v1426 = vsub.f32 %v1380, %v1422
    %v1427 = vsub.f32 %v1385, %v1422
    %v1428 = vsub.f32 %v1388, %v1422
    %v1429 = vsub.f32 %v1393, %v1422
    %v1430 = vsub.f32 %v1396, %v1422
    %v1431 = vmul.f32 %v1423, %v1423
    %v1432 = vmul.f32 %v1424, %v1424
    %v1433 = vmul.f32 %v1425, %v1425
    %v1434 = vmul.f32 %v1426, %v1426
    %v1435 = vmul.f32 %v1427, %v1427
    %v1436 = vmul.f32 %v1428, %v1428
    %v1437 = vmul.f32 %v1429, %v1429
    %v1438 = vmul.f32 %v1430, %v1430
    %v1439 = vsel %vm135, %v1431, 0.0
    %v1440 = vsel %vm135, %v1432, 0.0
    %v1441 = vadd.f32 %v1439, %v1440
    %v1442 = vsel %vm135, %v1433, 0.0
    %v1443 = vadd.f32 %v1441, %v1442
    %v1444 = vsel %vm135, %v1434, 0.0
    %v1445 = vadd.f32 %v1443, %v1444
    %v1446 = vsel %vm135, %v1435, 0.0
    %v1447 = vadd.f32 %v1445, %v1446
    %v1448 = vsel %vm135, %v1436, 0.0
    %v1449 = vadd.f32 %v1447, %v1448
    %v1450 = vsel %vm135, %v1437, 0.0
    %v1451 = vadd.f32 %v1449, %v1450
    %v1452 = vsel %vm135, %v1438, 0.0
    %v1453 = vadd.f32 %v1451, %v1452
    %v1454 = vrot.slane %v1453, 4
    %v1455 = vadd.f32 %v1453, %v1454
    %v1456 = vrot.slane %v1455, 2
    %v1457 = vadd.f32 %v1455, %v1456
    %v1458 = vrot.slane %v1457, 1
    %v1459 = vadd.f32 %v1457, %v1458
    %v1460 = vmul.f32 %v1459, %v157
    %v1461 = vadd.f32 %v1460, 1e-05
    %v1462 = vrsqrt.pop %v1461
    %v1463 = vmul.f32 %v1399, %v1462
    %v1464 = vlaneseq
    %v1465 = vshrl.u32 %v1464, 7
    %v1466 = vsub.s32 0, %v1465
    %v1467 = vrot.slane %v1463, %v1466
    %v1468 = vmul.f32 %v1423, %v1467
    %v1469 = vmul.f32 %v1424, %v1467
    %v1470 = vmul.f32 %v1425, %v1467
    %v1471 = vmul.f32 %v1426, %v1467
    %v1472 = vmul.f32 %v1427, %v1467
    %v1473 = vmul.f32 %v1428, %v1467
    %v1474 = vmul.f32 %v1429, %v1467
    %v1475 = vmul.f32 %v1430, %v1467
    %v1476 = vlaneseq
    %v1477 = vshrl.u32 %v1476, 7
    %v1478 = vsub.s32 0, %v1477
    %v1479 = vrot.slane %v1400, %v1478
    %v1480 = vadd.f32 %v1468, %v1479
    %v1481 = vadd.f32 %v1469, %v1479
    %v1482 = vadd.f32 %v1470, %v1479
    %v1483 = vadd.f32 %v1471, %v1479
    %v1484 = vadd.f32 %v1472, %v1479
    %v1485 = vadd.f32 %v1473, %v1479
    %v1486 = vadd.f32 %v1474, %v1479
    %v1487 = vadd.f32 %v1475, %v1479
    %v1488 = vmax.f32 %v1480, 0.0
    %v1489 = vmax.f32 %v1481, 0.0
    %v1490 = vmax.f32 %v1482, 0.0
    %v1491 = vmax.f32 %v1483, 0.0
    %v1492 = vmax.f32 %v1484, 0.0
    %v1493 = vmax.f32 %v1485, 0.0
    %v1494 = vmax.f32 %v1486, 0.0
    %v1495 = vmax.f32 %v1487, 0.0
    %v1496 = vld [vmem:[%s17] sm:$0xff]
    %v1497 = vld [vmem:[%s17 + $0x8] sm:$0xff]
    %v1498 = vld [vmem:[%s17 + $0x10] sm:$0xff]
    %v1499 = vld [vmem:[%s17 + $0x18] sm:$0xff]
    %v1501 = vsel %vm135, %v1496, 0
    %v1504 = vsel %vm135, %v1497, 0
    %v1507 = vsel %vm135, %v1498, 0
    %v1510 = vsel %vm135, %v1499, 0
    %1512 = vmatprep.subr.mxu0 0.0
    %1513 = vmatpush1.msra.mxu0 0.0
    %1514 = vmatprep.subr.mxu0 0.0
    %1515 = vmatpush1.msra.mxu0 0.0
    %1516 = vmatprep.subr.mxu0 0.0
    %1517 = vmatpush1.msra.mxu0 0.0
    %1518 = vmatprep.subr.mxu0 0.0
    %1519 = vmatpush1.msra.mxu0 0.0
    %1520 = vmatprep.subr.mxu0 0.0
    %1521 = vmatpush1.msra.mxu0 0.0
    %1522 = vmatprep.subr.mxu0 0.0
    %1523 = vmatpush1.msra.mxu0 0.0
    %1524 = vmatprep.subr.mxu0 0.0
    %1525 = vmatpush1.msra.mxu0 0.0
    %1526 = vmatprep.subr.mxu0 0.0
    %1527 = vmatpush1.msra.mxu0 0.0
    %1528 = vmatprep.subr.mxu0 0.0
    %1529 = vmatpush1.msra.mxu0 0.0
    %1530 = vmatprep.subr.mxu0 0.0
    %1531 = vmatpush1.msra.mxu0 0.0
    %1532 = vmatprep.subr.mxu0 0.0
    %1533 = vmatpush1.msra.mxu0 0.0
    %1534 = vmatprep.subr.mxu0 0.0
    %1535 = vmatpush1.msra.mxu0 0.0
    %1536 = vmatprep.subr.mxu0 0.0
    %1537 = vmatpush1.msra.mxu0 %v1491
    %1538 = vmatprep.subr.mxu0 0.0
    %1539 = vmatpush1.msra.mxu0 %v1490
    %1540 = vmatprep.subr.mxu0 0.0
    %1541 = vmatpush1.msra.mxu0 %v1489
    %1542 = vmatprep.subr.mxu0 0.0
    %1543 = vmatpush1.msra.mxu0 %v1488
    %1544 = vmatprep.subr.mxu0 0.0
    %1545 = vmatpush2.msra.mxu0 0.0
    %1546 = vmatprep.subr.mxu0 0.0
    %1547 = vmatpush2.msra.mxu0 0.0
    %1548 = vmatprep.subr.mxu0 0.0
    %1549 = vmatpush2.msra.mxu0 0.0
    %1550 = vmatprep.subr.mxu0 0.0
    %1551 = vmatpush2.msra.mxu0 0.0
    %1552 = vmatprep.subr.mxu0 0.0
    %1553 = vmatpush2.msra.mxu0 0.0
    %1554 = vmatprep.subr.mxu0 0.0
    %1555 = vmatpush2.msra.mxu0 0.0
    %1556 = vmatprep.subr.mxu0 0.0
    %1557 = vmatpush2.msra.mxu0 0.0
    %1558 = vmatprep.subr.mxu0 0.0
    %1559 = vmatpush2.msra.mxu0 0.0
    %1560 = vmatprep.subr.mxu0 0.0
    %1561 = vmatpush2.msra.mxu0 0.0
    %1562 = vmatprep.subr.mxu0 0.0
    %1563 = vmatpush2.msra.mxu0 0.0
    %1564 = vmatprep.subr.mxu0 0.0
    %1565 = vmatpush2.msra.mxu0 0.0
    %1566 = vmatprep.subr.mxu0 0.0
    %1567 = vmatpush2.msra.mxu0 0.0
    %1568 = vmatprep.subr.mxu0 0.0
    %1569 = vmatpush2.msra.mxu0 0.0
    %1570 = vmatprep.subr.mxu0 0.0
    %1571 = vmatpush2.msra.mxu0 0.0
    %1572 = vmatprep.subr.mxu0 0.0
    %1573 = vmatpush2.msra.mxu0 0.0
    %1574 = vmatprep.subr.mxu0 0.0
    %1575 = vmatpush2.msra.mxu0 0.0
    %1576 = vmatprep.mubr.f32.mxu0 0.0
    %1577 = vmatmul.mubr.f32.gmra.mxu0 %v1501
    %v1578 = vpop.f32.mrf.mxu0
    %v1579 = vadd.f32 0.0, %v1578
    %v1580 = vpop.f32.mrf.mxu0
    %1581 = vmatprep.mubr.f32.mxu0 0.0
    %1582 = vmatmul.mubr.f32.gmra.mxu0 %v1504
    %v1583 = vpop.f32.mrf.mxu0
    %v1584 = vadd.f32 0.0, %v1583
    %v1585 = vpop.f32.mrf.mxu0
    %1586 = vmatprep.mubr.f32.mxu0 0.0
    %1587 = vmatmul.mubr.f32.gmra.mxu0 %v1507
    %v1588 = vpop.f32.mrf.mxu0
    %v1589 = vadd.f32 0.0, %v1588
    %v1590 = vpop.f32.mrf.mxu0
    %1591 = vmatprep.mubr.f32.mxu0 0.0
    %1592 = vmatmul.mubr.f32.gmra.mxu0 %v1510
    %v1593 = vpop.f32.mrf.mxu0
    %v1594 = vadd.f32 0.0, %v1593
    %v1595 = vpop.f32.mrf.mxu0
    %1596 = vdwg.mxu0
    %1597 = vmatprep.subr.mxu0 0.0
    %1598 = vmatpush1.msra.mxu0 0.0
    %1599 = vmatprep.subr.mxu0 0.0
    %1600 = vmatpush1.msra.mxu0 0.0
    %1601 = vmatprep.subr.mxu0 0.0
    %1602 = vmatpush1.msra.mxu0 0.0
    %1603 = vmatprep.subr.mxu0 0.0
    %1604 = vmatpush1.msra.mxu0 0.0
    %1605 = vmatprep.subr.mxu0 0.0
    %1606 = vmatpush1.msra.mxu0 0.0
    %1607 = vmatprep.subr.mxu0 0.0
    %1608 = vmatpush1.msra.mxu0 0.0
    %1609 = vmatprep.subr.mxu0 0.0
    %1610 = vmatpush1.msra.mxu0 0.0
    %1611 = vmatprep.subr.mxu0 0.0
    %1612 = vmatpush1.msra.mxu0 0.0
    %1613 = vmatprep.subr.mxu0 0.0
    %1614 = vmatpush1.msra.mxu0 0.0
    %1615 = vmatprep.subr.mxu0 0.0
    %1616 = vmatpush1.msra.mxu0 0.0
    %1617 = vmatprep.subr.mxu0 0.0
    %1618 = vmatpush1.msra.mxu0 0.0
    %1619 = vmatprep.subr.mxu0 0.0
    %1620 = vmatpush1.msra.mxu0 0.0
    %1621 = vmatprep.subr.mxu0 0.0
    %1622 = vmatpush1.msra.mxu0 %v1495
    %1623 = vmatprep.subr.mxu0 0.0
    %1624 = vmatpush1.msra.mxu0 %v1494
    %1625 = vmatprep.subr.mxu0 0.0
    %1626 = vmatpush1.msra.mxu0 %v1493
    %1627 = vmatprep.subr.mxu0 0.0
    %1628 = vmatpush1.msra.mxu0 %v1492
    %1629 = vmatprep.subr.mxu0 0.0
    %1630 = vmatpush2.msra.mxu0 0.0
    %1631 = vmatprep.subr.mxu0 0.0
    %1632 = vmatpush2.msra.mxu0 0.0
    %1633 = vmatprep.subr.mxu0 0.0
    %1634 = vmatpush2.msra.mxu0 0.0
    %1635 = vmatprep.subr.mxu0 0.0
    %1636 = vmatpush2.msra.mxu0 0.0
    %1637 = vmatprep.subr.mxu0 0.0
    %1638 = vmatpush2.msra.mxu0 0.0
    %1639 = vmatprep.subr.mxu0 0.0
    %1640 = vmatpush2.msra.mxu0 0.0
    %1641 = vmatprep.subr.mxu0 0.0
    %1642 = vmatpush2.msra.mxu0 0.0
    %1643 = vmatprep.subr.mxu0 0.0
    %1644 = vmatpush2.msra.mxu0 0.0
    %1645 = vmatprep.subr.mxu0 0.0
    %1646 = vmatpush2.msra.mxu0 0.0
    %1647 = vmatprep.subr.mxu0 0.0
    %1648 = vmatpush2.msra.mxu0 0.0
    %1649 = vmatprep.subr.mxu0 0.0
    %1650 = vmatpush2.msra.mxu0 0.0
    %1651 = vmatprep.subr.mxu0 0.0
    %1652 = vmatpush2.msra.mxu0 0.0
    %1653 = vmatprep.subr.mxu0 0.0
    %1654 = vmatpush2.msra.mxu0 0.0
    %1655 = vmatprep.subr.mxu0 0.0
    %1656 = vmatpush2.msra.mxu0 0.0
    %1657 = vmatprep.subr.mxu0 0.0
    %1658 = vmatpush2.msra.mxu0 0.0
    %1659 = vmatprep.subr.mxu0 0.0
    %1660 = vmatpush2.msra.mxu0 0.0
    %1661 = vmatprep.mubr.f32.mxu0 0.0
    %1662 = vmatmul.mubr.f32.gmra.mxu0 %v1501
    %v1663 = vpop.f32.mrf.mxu0
    %v1664 = vadd.f32 0.0, %v1663
    %v1665 = vpop.f32.mrf.mxu0
    %1666 = vmatprep.mubr.f32.mxu0 0.0
    %1667 = vmatmul.mubr.f32.gmra.mxu0 %v1504
    %v1668 = vpop.f32.mrf.mxu0
    %v1669 = vadd.f32 0.0, %v1668
    %v1670 = vpop.f32.mrf.mxu0
    %1671 = vmatprep.mubr.f32.mxu0 0.0
    %1672 = vmatmul.mubr.f32.gmra.mxu0 %v1507
    %v1673 = vpop.f32.mrf.mxu0
    %v1674 = vadd.f32 0.0, %v1673
    %v1675 = vpop.f32.mrf.mxu0
    %1676 = vmatprep.mubr.f32.mxu0 0.0
    %1677 = vmatmul.mubr.f32.gmra.mxu0 %v1510
    %v1678 = vpop.f32.mrf.mxu0
    %v1679 = vadd.f32 0.0, %v1678
    %v1680 = vpop.f32.mrf.mxu0
    %1681 = vdwg.mxu0
    %v1682 = vmax.f32 %v1579, %v1589
    %v1683 = vmax.f32 %v1584, %v1594
    %v1684 = vmax.f32 %v1664, %v1674
    %v1685 = vmax.f32 %v1669, %v1679
    %1686 = vst [vmem:[#allocation2] sm:$0xff] 0.0
    %1687 = vst [vmem:[#allocation2 + $0x8] sm:$0xff] 0.0
    %1688 = vst [vmem:[#allocation2 + $0x10] sm:$0xff] 0.0
    %1689 = vst [vmem:[#allocation2 + $0x18] sm:$0xff] 0.0
    %1690 = vst [vmem:[#allocation2 + $0x40] sm:$0xff] 0.0
    %1691 = vst [vmem:[#allocation2 + $0x48] sm:$0xff] 0.0
    %1692 = vst [vmem:[#allocation2 + $0x50] sm:$0xff] 0.0
    %1693 = vst [vmem:[#allocation2 + $0x58] sm:$0xff] 0.0
    %v1698 = vrot.slane %v1682, 5
    %v1699 = vrot.slane %v1683, 5
    %v1700 = vsel %vm726, %v1698, %v1699
    %v1701 = vrot.slane %v1684, 5
    %v1702 = vrot.slane %v1685, 5
    %v1703 = vsel %vm726, %v1701, %v1702
    %1704 = vrot.lane.b32.xlu0 %v1698, 32
    %v1705 = vpop.permute.xlu0 %1704
    %1706 = vrot.lane.b32.xlu0 %v1700, 32
    %v1707 = vpop.permute.xlu0 %1706
    %1708 = vrot.lane.b32.xlu0 %v1701, 32
    %v1709 = vpop.permute.xlu0 %1708
    %1710 = vrot.lane.b32.xlu0 %v1703, 32
    %v1711 = vpop.permute.xlu0 %1710
    %1716 = vst.msk [vmem:[#allocation2] sm:$0xf8] %vm765, %v1705
    %1717 = vst.msk [vmem:[#allocation2 + $0x10] sm:$0xff] %vm767, %v1707
    %1718 = vst.msk [vmem:[#allocation2 + $0x40] sm:$0xf8] %vm765, %v1709
    %1719 = vst.msk [vmem:[#allocation2 + $0x50] sm:$0xff] %vm767, %v1711
    %v1720 = vrot.slane %v1682, 6
    %v1721 = vrot.slane %v1683, 6
    %v1722 = vsel %vm775, %v1720, %v1721
    %v1723 = vrot.slane %v1684, 6
    %v1724 = vrot.slane %v1685, 6
    %v1725 = vsel %vm775, %v1723, %v1724
    %1726 = vrot.lane.b32.xlu0 %v1720, 64
    %v1727 = vpop.permute.xlu0 %1726
    %1728 = vrot.lane.b32.xlu0 %v1722, 64
    %v1729 = vpop.permute.xlu0 %1728
    %1730 = vrot.lane.b32.xlu0 %v1723, 64
    %v1731 = vpop.permute.xlu0 %1730
    %1732 = vrot.lane.b32.xlu0 %v1725, 64
    %v1733 = vpop.permute.xlu0 %1732
    %1738 = vst.msk [vmem:[#allocation2] sm:$0xfc] %vm814, %v1727
    %1739 = vst.msk [vmem:[#allocation2 + $0x10] sm:$0xff] %vm816, %v1729
    %1740 = vst.msk [vmem:[#allocation2 + $0x40] sm:$0xfc] %vm814, %v1731
    %1741 = vst.msk [vmem:[#allocation2 + $0x50] sm:$0xff] %vm816, %v1733
    %v1742 = vrot.slane %v1682, 7
    %v1743 = vrot.slane %v1683, 7
    %v1744 = vsel %vm824, %v1742, %v1743
    %v1745 = vrot.slane %v1684, 7
    %v1746 = vrot.slane %v1685, 7
    %v1747 = vsel %vm824, %v1745, %v1746
    %1748 = vrot.lane.b32.xlu0 %v1742, 96
    %v1749 = vpop.permute.xlu0 %1748
    %1750 = vrot.lane.b32.xlu0 %v1744, 96
    %v1751 = vpop.permute.xlu0 %1750
    %1752 = vrot.lane.b32.xlu0 %v1745, 96
    %v1753 = vpop.permute.xlu0 %1752
    %1754 = vrot.lane.b32.xlu0 %v1747, 96
    %v1755 = vpop.permute.xlu0 %1754
    %1760 = vst.msk [vmem:[#allocation2] sm:$0xfe] %vm863, %v1749
    %1761 = vst.msk [vmem:[#allocation2 + $0x10] sm:$0xff] %vm865, %v1751
    %1762 = vst.msk [vmem:[#allocation2 + $0x40] sm:$0xfe] %vm863, %v1753
    %1763 = vst.msk [vmem:[#allocation2 + $0x50] sm:$0xff] %vm865, %v1755
    %1764 = vst.msk [vmem:[#allocation2 + $0x8] sm:$0xff] %vm135, %v1682
    %1765 = vst.msk [vmem:[#allocation2 + $0x18] sm:$0xff] %vm135, %v1683
    %1766 = vst.msk [vmem:[#allocation2 + $0x48] sm:$0xff] %vm135, %v1684
    %1767 = vst.msk [vmem:[#allocation2 + $0x58] sm:$0xff] %vm135, %v1685
    %v1768 = vrot.slane %v1682, 1
    %v1769 = vrot.slane %v1683, 1
    %v1770 = vsel %vm881, %v1768, %v1769
    %v1771 = vrot.slane %v1684, 1
    %v1772 = vrot.slane %v1685, 1
    %v1773 = vsel %vm881, %v1771, %v1772
    %1774 = vrot.lane.b32.xlu0 %v1770, 32
    %v1775 = vpop.permute.xlu0 %1774
    %1776 = vrot.lane.b32.xlu0 %v1769, 32
    %v1777 = vpop.permute.xlu0 %1776
    %1778 = vrot.lane.b32.xlu0 %v1773, 32
    %v1779 = vpop.permute.xlu0 %1778
    %1780 = vrot.lane.b32.xlu0 %v1772, 32
    %v1781 = vpop.permute.xlu0 %1780
    %1786 = vst.msk [vmem:[#allocation2 + $0x8] sm:$0xff] %vm767, %v1775
    %1787 = vst.msk [vmem:[#allocation2 + $0x18] sm:$0x7f] %vm923, %v1777
    %1788 = vst.msk [vmem:[#allocation2 + $0x48] sm:$0xff] %vm767, %v1779
    %1789 = vst.msk [vmem:[#allocation2 + $0x58] sm:$0x7f] %vm923, %v1781
    %v1790 = vrot.slane %v1682, 2
    %v1791 = vrot.slane %v1683, 2
    %v1792 = vsel %vm929, %v1790, %v1791
    %v1793 = vrot.slane %v1684, 2
    %v1794 = vrot.slane %v1685, 2
    %v1795 = vsel %vm929, %v1793, %v1794
    %1796 = vrot.lane.b32.xlu0 %v1792, 64
    %v1797 = vpop.permute.xlu0 %1796
    %1798 = vrot.lane.b32.xlu0 %v1791, 64
    %v1799 = vpop.permute.xlu0 %1798
    %1800 = vrot.lane.b32.xlu0 %v1795, 64
    %v1801 = vpop.permute.xlu0 %1800
    %1802 = vrot.lane.b32.xlu0 %v1794, 64
    %v1803 = vpop.permute.xlu0 %1802
    %1808 = vst.msk [vmem:[#allocation2 + $0x8] sm:$0xff] %vm816, %v1797
    %1809 = vst.msk [vmem:[#allocation2 + $0x18] sm:$0x3f] %vm971, %v1799
    %1810 = vst.msk [vmem:[#allocation2 + $0x48] sm:$0xff] %vm816, %v1801
    %1811 = vst.msk [vmem:[#allocation2 + $0x58] sm:$0x3f] %vm971, %v1803
    %v1812 = vrot.slane %v1682, 3
    %v1813 = vrot.slane %v1683, 3
    %v1814 = vsel %vm977, %v1812, %v1813
    %v1815 = vrot.slane %v1684, 3
    %v1816 = vrot.slane %v1685, 3
    %v1817 = vsel %vm977, %v1815, %v1816
    %1818 = vrot.lane.b32.xlu0 %v1814, 96
    %v1819 = vpop.permute.xlu0 %1818
    %1820 = vrot.lane.b32.xlu0 %v1813, 96
    %v1821 = vpop.permute.xlu0 %1820
    %1822 = vrot.lane.b32.xlu0 %v1817, 96
    %v1823 = vpop.permute.xlu0 %1822
    %1824 = vrot.lane.b32.xlu0 %v1816, 96
    %v1825 = vpop.permute.xlu0 %1824
    %1830 = vst.msk [vmem:[#allocation2 + $0x8] sm:$0xff] %vm865, %v1819
    %1831 = vst.msk [vmem:[#allocation2 + $0x18] sm:$0x1f] %vm1019, %v1821
    %1832 = vst.msk [vmem:[#allocation2 + $0x48] sm:$0xff] %vm865, %v1823
    %1833 = vst.msk [vmem:[#allocation2 + $0x58] sm:$0x1f] %vm1019, %v1825
    %v1834 = vld [vmem:[#allocation2] sm:$0xff]
    %v1835 = vld [vmem:[#allocation2 + $0x10] sm:$0xff]
    %v1836 = vld [vmem:[#allocation2 + $0x40] sm:$0xff]
    %v1837 = vld [vmem:[#allocation2 + $0x50] sm:$0xff]
    %v1838 = vsel %vm1030, -inf, %v1834
    %v1839 = vsel %vm1031, -inf, %v1835
    %v1840 = vsel %vm1030, -inf, %v1836
    %v1841 = vsel %vm1031, -inf, %v1837
    %vm1842 = vcmp.eq.s32.totalorder %v1026, 15
    %vm1843 = vcmp.eq.s32.totalorder %v1027, 15
    %v1844 = vld [vmem:[#allocation2 + $0x8] sm:$0xff]
    %v1845 = vld [vmem:[#allocation2 + $0x18] sm:$0xff]
    %v1846 = vld [vmem:[#allocation2 + $0x48] sm:$0xff]
    %v1847 = vld [vmem:[#allocation2 + $0x58] sm:$0xff]
    %v1848 = vsel %vm1842, -inf, %v1844
    %v1849 = vsel %vm1843, -inf, %v1845
    %v1850 = vsel %vm1842, -inf, %v1846
    %v1851 = vsel %vm1843, -inf, %v1847
    %1852 = vrot.lane.b32.xlu0 %v1682, 96
    %v1853 = vpop.permute.xlu0 %1852
    %1854 = vrot.lane.b32.xlu0 %v1683, 96
    %v1855 = vpop.permute.xlu0 %1854
    %1856 = vrot.lane.b32.xlu0 %v1684, 96
    %v1857 = vpop.permute.xlu0 %1856
    %1858 = vrot.lane.b32.xlu0 %v1685, 96
    %v1859 = vpop.permute.xlu0 %1858
    %v1864 = vmax.f32 %v1838, %v1853
    %v1865 = vmax.f32 %v1839, %v1855
    %v1866 = vmax.f32 %v1840, %v1857
    %v1867 = vmax.f32 %v1841, %v1859
    %1872 = vrot.lane.b32.xlu0 %v1848, 64
    %v1873 = vpop.permute.xlu0 %1872
    %1874 = vrot.lane.b32.xlu0 %v1849, 64
    %v1875 = vpop.permute.xlu0 %1874
    %1876 = vrot.lane.b32.xlu0 %v1850, 64
    %v1877 = vpop.permute.xlu0 %1876
    %1878 = vrot.lane.b32.xlu0 %v1851, 64
    %v1879 = vpop.permute.xlu0 %1878
    %v1884 = vmax.f32 %v1864, %v1873
    %v1885 = vmax.f32 %v1865, %v1875
    %v1886 = vmax.f32 %v1866, %v1877
    %v1887 = vmax.f32 %v1867, %v1879
    %1892 = vrot.lane.b32.xlu0 %v1884, 32
    %v1893 = vpop.permute.xlu0 %1892
    %1894 = vrot.lane.b32.xlu0 %v1885, 32
    %v1895 = vpop.permute.xlu0 %1894
    %1896 = vrot.lane.b32.xlu0 %v1886, 32
    %v1897 = vpop.permute.xlu0 %1896
    %1898 = vrot.lane.b32.xlu0 %v1887, 32
    %v1899 = vpop.permute.xlu0 %1898
    %1904 = vst.msk [vmem:[#allocation2] sm:$0xff] %vm135, %v1893
    %1905 = vst.msk [vmem:[#allocation2 + $0x10] sm:$0xff] %vm135, %v1895
    %1906 = vst.msk [vmem:[#allocation2 + $0x40] sm:$0xff] %vm135, %v1897
    %1907 = vst.msk [vmem:[#allocation2 + $0x50] sm:$0xff] %vm135, %v1899
    %v1908 = vld [vmem:[#allocation2] sm:$0xff]
    %v1909 = vld [vmem:[#allocation2 + $0x8] sm:$0xff]
    %v1910 = vld [vmem:[#allocation2 + $0x10] sm:$0xff]
    %v1911 = vld [vmem:[#allocation2 + $0x18] sm:$0xff]
    %v1912 = vld [vmem:[#allocation2 + $0x40] sm:$0xff]
    %v1913 = vld [vmem:[#allocation2 + $0x48] sm:$0xff]
    %v1914 = vld [vmem:[#allocation2 + $0x50] sm:$0xff]
    %v1915 = vld [vmem:[#allocation2 + $0x58] sm:$0xff]
    %v1916 = vpack.c.bf16 %v1910, %v1908
    %v1917 = vpack.c.bf16 %v1911, %v1909
    %v1918 = vpack.c.bf16 %v1914, %v1912
    %v1919 = vpack.c.bf16 %v1915, %v1913
    %v1920 = vld [vmem:[%s9] sm:$0xf]
    %v1921 = vld [vmem:[%s9 + $0x4] sm:$0xf]
    %v1922 = vld [vmem:[%s9 + $0x8] sm:$0xf]
    %v1923 = vld [vmem:[%s9 + $0xc] sm:$0xf]
    %v1924 = vld [vmem:[%s9 + $0x10] sm:$0xf]
    %v1925 = vld [vmem:[%s9 + $0x14] sm:$0xf]
    %v1926 = vld [vmem:[%s9 + $0x18] sm:$0xf]
    %v1927 = vld [vmem:[%s9 + $0x1c] sm:$0xf]
    %v1928 = vld [vmem:[%s9 + $0x20] sm:$0xf]
    %v1929 = vld [vmem:[%s9 + $0x24] sm:$0xf]
    %v1930 = vld [vmem:[%s9 + $0x28] sm:$0xf]
    %v1931 = vld [vmem:[%s9 + $0x2c] sm:$0xf]
    %v1932 = vld [vmem:[%s9 + $0x30] sm:$0xf]
    %v1933 = vld [vmem:[%s9 + $0x34] sm:$0xf]
    %v1934 = vld [vmem:[%s9 + $0x38] sm:$0xf]
    %v1935 = vld [vmem:[%s9 + $0x3c] sm:$0xf]
    %v1936 = vld [vmem:[%s9 + $0x40] sm:$0xf]
    %v1937 = vld [vmem:[%s9 + $0x44] sm:$0xf]
    %v1938 = vld [vmem:[%s9 + $0x48] sm:$0xf]
    %v1939 = vld [vmem:[%s9 + $0x4c] sm:$0xf]
    %v1940 = vld [vmem:[%s9 + $0x50] sm:$0xf]
    %v1941 = vld [vmem:[%s9 + $0x54] sm:$0xf]
    %v1942 = vld [vmem:[%s9 + $0x58] sm:$0xf]
    %v1943 = vld [vmem:[%s9 + $0x5c] sm:$0xf]
    %v1944 = vld [vmem:[%s9 + $0x60] sm:$0xf]
    %v1945 = vld [vmem:[%s9 + $0x64] sm:$0xf]
    %v1946 = vld [vmem:[%s9 + $0x68] sm:$0xf]
    %v1947 = vld [vmem:[%s9 + $0x6c] sm:$0xf]
    %v1948 = vld [vmem:[%s9 + $0x70] sm:$0xf]
    %v1949 = vld [vmem:[%s9 + $0x74] sm:$0xf]
    %v1950 = vld [vmem:[%s9 + $0x78] sm:$0xf]
    %v1951 = vld [vmem:[%s9 + $0x7c] sm:$0xf]
    %v1984 = vunpack.c.l.b16 %v1920
    %v1985 = vunpack.c.l.b16 %v1921
    %v1986 = vunpack.c.l.b16 %v1922
    %v1987 = vunpack.c.l.b16 %v1923
    %v1988 = vunpack.c.l.b16 %v1924
    %v1989 = vunpack.c.l.b16 %v1925
    %v1990 = vunpack.c.l.b16 %v1926
    %v1991 = vunpack.c.l.b16 %v1927
    %v1992 = vunpack.c.l.b16 %v1928
    %v1993 = vunpack.c.l.b16 %v1929
    %v1994 = vunpack.c.l.b16 %v1930
    %v1995 = vunpack.c.l.b16 %v1931
    %v1996 = vunpack.c.l.b16 %v1932
    %v1997 = vunpack.c.l.b16 %v1933
    %v1998 = vunpack.c.l.b16 %v1934
    %v1999 = vunpack.c.l.b16 %v1935
    %v2000 = vunpack.c.l.b16 %v1936
    %v2001 = vunpack.c.l.b16 %v1937
    %v2002 = vunpack.c.l.b16 %v1938
    %v2003 = vunpack.c.l.b16 %v1939
    %v2004 = vunpack.c.l.b16 %v1940
    %v2005 = vunpack.c.l.b16 %v1941
    %v2006 = vunpack.c.l.b16 %v1942
    %v2007 = vunpack.c.l.b16 %v1943
    %v2008 = vunpack.c.l.b16 %v1944
    %v2009 = vunpack.c.l.b16 %v1945
    %v2010 = vunpack.c.l.b16 %v1946
    %v2011 = vunpack.c.l.b16 %v1947
    %v2012 = vunpack.c.l.b16 %v1948
    %v2013 = vunpack.c.l.b16 %v1949
    %v2014 = vunpack.c.l.b16 %v1950
    %v2015 = vunpack.c.l.b16 %v1951
    %v2016 = vpack.c.b16 %v1985, %v1984
    %v2017 = vpack.c.b16 %v1987, %v1986
    %v2018 = vpack.c.b16 %v1989, %v1988
    %v2019 = vpack.c.b16 %v1991, %v1990
    %v2020 = vpack.c.b16 %v1993, %v1992
    %v2021 = vpack.c.b16 %v1995, %v1994
    %v2022 = vpack.c.b16 %v1997, %v1996
    %v2023 = vpack.c.b16 %v1999, %v1998
    %v2024 = vpack.c.b16 %v2001, %v2000
    %v2025 = vpack.c.b16 %v2003, %v2002
    %v2026 = vpack.c.b16 %v2005, %v2004
    %v2027 = vpack.c.b16 %v2007, %v2006
    %v2028 = vpack.c.b16 %v2009, %v2008
    %v2029 = vpack.c.b16 %v2011, %v2010
    %v2030 = vpack.c.b16 %v2013, %v2012
    %v2031 = vpack.c.b16 %v2015, %v2014
    %2048 = vmatprep.subr.bf16.mxu0 0
    %2049 = vmatpush1.bf16.msra.mxu0 %v2023
    %2050 = vmatprep.subr.bf16.mxu0 0
    %2051 = vmatpush1.bf16.msra.mxu0 %v2022
    %2052 = vmatprep.subr.bf16.mxu0 0
    %2053 = vmatpush1.bf16.msra.mxu0 %v2021
    %2054 = vmatprep.subr.bf16.mxu0 0
    %2055 = vmatpush1.bf16.msra.mxu0 %v2020
    %2056 = vmatprep.subr.bf16.mxu0 0
    %2057 = vmatpush1.bf16.msra.mxu0 %v2019
    %2058 = vmatprep.subr.bf16.mxu0 0
    %2059 = vmatpush1.bf16.msra.mxu0 %v2018
    %2060 = vmatprep.subr.bf16.mxu0 0
    %2061 = vmatpush1.bf16.msra.mxu0 %v2017
    %2062 = vmatprep.subr.bf16.mxu0 0
    %2063 = vmatpush1.bf16.msra.mxu0 %v2016
    %2064 = vmatprep.subr.bf16.mxu0 0
    %2065 = vmatpush2.bf16.msra.mxu0 %v2031
    %2066 = vmatprep.subr.bf16.mxu0 0
    %2067 = vmatpush2.bf16.msra.mxu0 %v2030
    %2068 = vmatprep.subr.bf16.mxu0 0
    %2069 = vmatpush2.bf16.msra.mxu0 %v2029
    %2070 = vmatprep.subr.bf16.mxu0 0
    %2071 = vmatpush2.bf16.msra.mxu0 %v2028
    %2072 = vmatprep.subr.bf16.mxu0 0
    %2073 = vmatpush2.bf16.msra.mxu0 %v2027
    %2074 = vmatprep.subr.bf16.mxu0 0
    %2075 = vmatpush2.bf16.msra.mxu0 %v2026
    %2076 = vmatprep.subr.bf16.mxu0 0
    %2077 = vmatpush2.bf16.msra.mxu0 %v2025
    %2078 = vmatprep.subr.bf16.mxu0 0
    %2079 = vmatpush2.bf16.msra.mxu0 %v2024
    %2080 = vmatprep.mubr.bf16.mxu0 %v1917
    %2081 = vmatmul.mubr.bf16.gmra.mxu0 %v1916
    %v2082 = vpop.f32.mrf.mxu0
    %v2083 = vadd.f32 0.0, %v2082
    %v2084 = vpop.f32.mrf.mxu0
    %v2085 = vpop.f32.mrf.mxu0
    %v2086 = vadd.f32 0.0, %v2085
    %v2087 = vpop.f32.mrf.mxu0
    %2088 = vmatprep.mubr.bf16.mxu0 %v1919
    %2089 = vmatmul.mubr.bf16.gmra.mxu0 %v1918
    %v2090 = vpop.f32.mrf.mxu0
    %v2091 = vadd.f32 0.0, %v2090
    %v2092 = vpop.f32.mrf.mxu0
    %v2093 = vpop.f32.mrf.mxu0
    %v2094 = vadd.f32 0.0, %v2093
    %v2095 = vpop.f32.mrf.mxu0
    %2096 = vdwg.mxu0
    %v2097 = vld [vmem:[%s10] sm:$0x1]
    %v2098 = vld [vmem:[%s10 + $0x1] sm:$0x1]
    %v2099 = vsel %vm135, %v2083, 0.0
    %v2100 = vsel %vm135, %v2086, 0.0
    %v2101 = vadd.f32 %v2099, %v2100
    %v2102 = vsel %vm135, %v2091, 0.0
    %v2103 = vadd.f32 %v2101, %v2102
    %v2104 = vsel %vm135, %v2094, 0.0
    %v2105 = vadd.f32 %v2103, %v2104
    %v2106 = vrot.slane %v2105, 4
    %v2107 = vadd.f32 %v2105, %v2106
    %v2108 = vrot.slane %v2107, 2
    %v2109 = vadd.f32 %v2107, %v2108
    %v2110 = vrot.slane %v2109, 1
    %v2111 = vadd.f32 %v2109, %v2110
    %v2112 = vmul.f32 %v2111, %v494
    %v2113 = vsub.f32 %v2083, %v2112
    %v2114 = vsub.f32 %v2086, %v2112
    %v2115 = vsub.f32 %v2091, %v2112
    %v2116 = vsub.f32 %v2094, %v2112
    %v2117 = vmul.f32 %v2113, %v2113
    %v2118 = vmul.f32 %v2114, %v2114
    %v2119 = vmul.f32 %v2115, %v2115
    %v2120 = vmul.f32 %v2116, %v2116
    %v2121 = vsel %vm135, %v2117, 0.0
    %v2122 = vsel %vm135, %v2118, 0.0
    %v2123 = vadd.f32 %v2121, %v2122
    %v2124 = vsel %vm135, %v2119, 0.0
    %v2125 = vadd.f32 %v2123, %v2124
    %v2126 = vsel %vm135, %v2120, 0.0
    %v2127 = vadd.f32 %v2125, %v2126
    %v2128 = vrot.slane %v2127, 4
    %v2129 = vadd.f32 %v2127, %v2128
    %v2130 = vrot.slane %v2129, 2
    %v2131 = vadd.f32 %v2129, %v2130
    %v2132 = vrot.slane %v2131, 1
    %v2133 = vadd.f32 %v2131, %v2132
    %v2134 = vmul.f32 %v2133, %v494
    %v2135 = vadd.f32 %v2134, 1e-05
    %v2136 = vrsqrt.pop %v2135
    %v2137 = vmul.f32 %v2097, %v2136
    %v2138 = vlaneseq
    %v2139 = vshrl.u32 %v2138, 7
    %v2140 = vsub.s32 0, %v2139
    %v2141 = vrot.slane %v2137, %v2140
    %v2142 = vmul.f32 %v2113, %v2141
    %v2143 = vmul.f32 %v2114, %v2141
    %v2144 = vmul.f32 %v2115, %v2141
    %v2145 = vmul.f32 %v2116, %v2141
    %v2146 = vlaneseq
    %v2147 = vshrl.u32 %v2146, 7
    %v2148 = vsub.s32 0, %v2147
    %v2149 = vrot.slane %v2098, %v2148
    %v2150 = vadd.f32 %v2142, %v2149
    %v2151 = vadd.f32 %v2143, %v2149
    %v2152 = vadd.f32 %v2144, %v2149
    %v2153 = vadd.f32 %v2145, %v2149
    %v2154 = vmax.f32 %v2150, 0.0
    %v2155 = vmax.f32 %v2151, 0.0
    %v2156 = vmax.f32 %v2152, 0.0
    %v2157 = vmax.f32 %v2153, 0.0
    %v2158 = vld [vmem:[%s18] sm:$0xff]
    %v2159 = vld [vmem:[%s18 + $0x8] sm:$0xff]
    %v2161 = vsel %vm543, %v2158, 0
    %v2164 = vsel %vm543, %v2159, 0
    %2166 = vmatprep.subr.mxu0 0.0
    %2167 = vmatpush1.msra.mxu0 0.0
    %2168 = vmatprep.subr.mxu0 0.0
    %2169 = vmatpush1.msra.mxu0 0.0
    %2170 = vmatprep.subr.mxu0 0.0
    %2171 = vmatpush1.msra.mxu0 0.0
    %2172 = vmatprep.subr.mxu0 0.0
    %2173 = vmatpush1.msra.mxu0 0.0
    %2174 = vmatprep.subr.mxu0 0.0
    %2175 = vmatpush1.msra.mxu0 0.0
    %2176 = vmatprep.subr.mxu0 0.0
    %2177 = vmatpush1.msra.mxu0 0.0
    %2178 = vmatprep.subr.mxu0 0.0
    %2179 = vmatpush1.msra.mxu0 0.0
    %2180 = vmatprep.subr.mxu0 0.0
    %2181 = vmatpush1.msra.mxu0 0.0
    %2182 = vmatprep.subr.mxu0 0.0
    %2183 = vmatpush1.msra.mxu0 0.0
    %2184 = vmatprep.subr.mxu0 0.0
    %2185 = vmatpush1.msra.mxu0 0.0
    %2186 = vmatprep.subr.mxu0 0.0
    %2187 = vmatpush1.msra.mxu0 0.0
    %2188 = vmatprep.subr.mxu0 0.0
    %2189 = vmatpush1.msra.mxu0 0.0
    %2190 = vmatprep.subr.mxu0 0.0
    %2191 = vmatpush1.msra.mxu0 0.0
    %2192 = vmatprep.subr.mxu0 0.0
    %2193 = vmatpush1.msra.mxu0 0.0
    %2194 = vmatprep.subr.mxu0 0.0
    %2195 = vmatpush1.msra.mxu0 %v2155
    %2196 = vmatprep.subr.mxu0 0.0
    %2197 = vmatpush1.msra.mxu0 %v2154
    %2198 = vmatprep.subr.mxu0 0.0
    %2199 = vmatpush2.msra.mxu0 0.0
    %2200 = vmatprep.subr.mxu0 0.0
    %2201 = vmatpush2.msra.mxu0 0.0
    %2202 = vmatprep.subr.mxu0 0.0
    %2203 = vmatpush2.msra.mxu0 0.0
    %2204 = vmatprep.subr.mxu0 0.0
    %2205 = vmatpush2.msra.mxu0 0.0
    %2206 = vmatprep.subr.mxu0 0.0
    %2207 = vmatpush2.msra.mxu0 0.0
    %2208 = vmatprep.subr.mxu0 0.0
    %2209 = vmatpush2.msra.mxu0 0.0
    %2210 = vmatprep.subr.mxu0 0.0
    %2211 = vmatpush2.msra.mxu0 0.0
    %2212 = vmatprep.subr.mxu0 0.0
    %2213 = vmatpush2.msra.mxu0 0.0
    %2214 = vmatprep.subr.mxu0 0.0
    %2215 = vmatpush2.msra.mxu0 0.0
    %2216 = vmatprep.subr.mxu0 0.0
    %2217 = vmatpush2.msra.mxu0 0.0
    %2218 = vmatprep.subr.mxu0 0.0
    %2219 = vmatpush2.msra.mxu0 0.0
    %2220 = vmatprep.subr.mxu0 0.0
    %2221 = vmatpush2.msra.mxu0 0.0
    %2222 = vmatprep.subr.mxu0 0.0
    %2223 = vmatpush2.msra.mxu0 0.0
    %2224 = vmatprep.subr.mxu0 0.0
    %2225 = vmatpush2.msra.mxu0 0.0
    %2226 = vmatprep.subr.mxu0 0.0
    %2227 = vmatpush2.msra.mxu0 0.0
    %2228 = vmatprep.subr.mxu0 0.0
    %2229 = vmatpush2.msra.mxu0 0.0
    %2230 = vmatprep.mubr.f32.mxu0 0.0
    %2231 = vmatmul.mubr.f32.gmra.mxu0 %v2161
    %v2232 = vpop.f32.mrf.mxu0
    %v2233 = vadd.f32 0.0, %v2232
    %v2234 = vpop.f32.mrf.mxu0
    %2235 = vmatprep.mubr.f32.mxu0 0.0
    %2236 = vmatmul.mubr.f32.gmra.mxu0 %v2164
    %v2237 = vpop.f32.mrf.mxu0
    %v2238 = vadd.f32 0.0, %v2237
    %v2239 = vpop.f32.mrf.mxu0
    %2240 = vdwg.mxu0
    %2241 = vmatprep.subr.mxu0 0.0
    %2242 = vmatpush1.msra.mxu0 0.0
    %2243 = vmatprep.subr.mxu0 0.0
    %2244 = vmatpush1.msra.mxu0 0.0
    %2245 = vmatprep.subr.mxu0 0.0
    %2246 = vmatpush1.msra.mxu0 0.0
    %2247 = vmatprep.subr.mxu0 0.0
    %2248 = vmatpush1.msra.mxu0 0.0
    %2249 = vmatprep.subr.mxu0 0.0
    %2250 = vmatpush1.msra.mxu0 0.0
    %2251 = vmatprep.subr.mxu0 0.0
    %2252 = vmatpush1.msra.mxu0 0.0
    %2253 = vmatprep.subr.mxu0 0.0
    %2254 = vmatpush1.msra.mxu0 0.0
    %2255 = vmatprep.subr.mxu0 0.0
    %2256 = vmatpush1.msra.mxu0 0.0
    %2257 = vmatprep.subr.mxu0 0.0
    %2258 = vmatpush1.msra.mxu0 0.0
    %2259 = vmatprep.subr.mxu0 0.0
    %2260 = vmatpush1.msra.mxu0 0.0
    %2261 = vmatprep.subr.mxu0 0.0
    %2262 = vmatpush1.msra.mxu0 0.0
    %2263 = vmatprep.subr.mxu0 0.0
    %2264 = vmatpush1.msra.mxu0 0.0
    %2265 = vmatprep.subr.mxu0 0.0
    %2266 = vmatpush1.msra.mxu0 0.0
    %2267 = vmatprep.subr.mxu0 0.0
    %2268 = vmatpush1.msra.mxu0 0.0
    %2269 = vmatprep.subr.mxu0 0.0
    %2270 = vmatpush1.msra.mxu0 %v2157
    %2271 = vmatprep.subr.mxu0 0.0
    %2272 = vmatpush1.msra.mxu0 %v2156
    %2273 = vmatprep.subr.mxu0 0.0
    %2274 = vmatpush2.msra.mxu0 0.0
    %2275 = vmatprep.subr.mxu0 0.0
    %2276 = vmatpush2.msra.mxu0 0.0
    %2277 = vmatprep.subr.mxu0 0.0
    %2278 = vmatpush2.msra.mxu0 0.0
    %2279 = vmatprep.subr.mxu0 0.0
    %2280 = vmatpush2.msra.mxu0 0.0
    %2281 = vmatprep.subr.mxu0 0.0
    %2282 = vmatpush2.msra.mxu0 0.0
    %2283 = vmatprep.subr.mxu0 0.0
    %2284 = vmatpush2.msra.mxu0 0.0
    %2285 = vmatprep.subr.mxu0 0.0
    %2286 = vmatpush2.msra.mxu0 0.0
    %2287 = vmatprep.subr.mxu0 0.0
    %2288 = vmatpush2.msra.mxu0 0.0
    %2289 = vmatprep.subr.mxu0 0.0
    %2290 = vmatpush2.msra.mxu0 0.0
    %2291 = vmatprep.subr.mxu0 0.0
    %2292 = vmatpush2.msra.mxu0 0.0
    %2293 = vmatprep.subr.mxu0 0.0
    %2294 = vmatpush2.msra.mxu0 0.0
    %2295 = vmatprep.subr.mxu0 0.0
    %2296 = vmatpush2.msra.mxu0 0.0
    %2297 = vmatprep.subr.mxu0 0.0
    %2298 = vmatpush2.msra.mxu0 0.0
    %2299 = vmatprep.subr.mxu0 0.0
    %2300 = vmatpush2.msra.mxu0 0.0
    %2301 = vmatprep.subr.mxu0 0.0
    %2302 = vmatpush2.msra.mxu0 0.0
    %2303 = vmatprep.subr.mxu0 0.0
    %2304 = vmatpush2.msra.mxu0 0.0
    %2305 = vmatprep.mubr.f32.mxu0 0.0
    %2306 = vmatmul.mubr.f32.gmra.mxu0 %v2161
    %v2307 = vpop.f32.mrf.mxu0
    %v2308 = vadd.f32 0.0, %v2307
    %v2309 = vpop.f32.mrf.mxu0
    %2310 = vmatprep.mubr.f32.mxu0 0.0
    %2311 = vmatmul.mubr.f32.gmra.mxu0 %v2164
    %v2312 = vpop.f32.mrf.mxu0
    %v2313 = vadd.f32 0.0, %v2312
    %v2314 = vpop.f32.mrf.mxu0
    %2315 = vdwg.mxu0
    %v2316 = vmax.f32 %v2233, %v2238
    %v2317 = vmax.f32 %v2308, %v2313
    %v2318 = vadd.f32 %v2316, %v700
    %v2319 = vadd.f32 %v2317, %v701
    %v2320 = vld [vmem:[%s19] sm:$0xff]
    %vm2321 = vcmask 64512
    %v2323 = vsel %vm2321, %v2320, 0
    %2325 = vmatprep.subr.mxu0 0.0
    %2326 = vmatpush1.msra.mxu0 0.0
    %2327 = vmatprep.subr.mxu0 0.0
    %2328 = vmatpush1.msra.mxu0 0.0
    %2329 = vmatprep.subr.mxu0 0.0
    %2330 = vmatpush1.msra.mxu0 0.0
    %2331 = vmatprep.subr.mxu0 0.0
    %2332 = vmatpush1.msra.mxu0 0.0
    %2333 = vmatprep.subr.mxu0 0.0
    %2334 = vmatpush1.msra.mxu0 0.0
    %2335 = vmatprep.subr.mxu0 0.0
    %2336 = vmatpush1.msra.mxu0 0.0
    %2337 = vmatprep.subr.mxu0 0.0
    %2338 = vmatpush1.msra.mxu0 0.0
    %2339 = vmatprep.subr.mxu0 0.0
    %2340 = vmatpush1.msra.mxu0 0.0
    %2341 = vmatprep.subr.mxu0 0.0
    %2342 = vmatpush1.msra.mxu0 0.0
    %2343 = vmatprep.subr.mxu0 0.0
    %2344 = vmatpush1.msra.mxu0 0.0
    %2345 = vmatprep.subr.mxu0 0.0
    %2346 = vmatpush1.msra.mxu0 0.0
    %2347 = vmatprep.subr.mxu0 0.0
    %2348 = vmatpush1.msra.mxu0 0.0
    %2349 = vmatprep.subr.mxu0 0.0
    %2350 = vmatpush1.msra.mxu0 0.0
    %2351 = vmatprep.subr.mxu0 0.0
    %2352 = vmatpush1.msra.mxu0 0.0
    %2353 = vmatprep.subr.mxu0 0.0
    %2354 = vmatpush1.msra.mxu0 0.0
    %2355 = vmatprep.subr.mxu0 0.0
    %2356 = vmatpush1.msra.mxu0 %v2318
    %2357 = vmatprep.subr.mxu0 0.0
    %2358 = vmatpush2.msra.mxu0 0.0
    %2359 = vmatprep.subr.mxu0 0.0
    %2360 = vmatpush2.msra.mxu0 0.0
    %2361 = vmatprep.subr.mxu0 0.0
    %2362 = vmatpush2.msra.mxu0 0.0
    %2363 = vmatprep.subr.mxu0 0.0
    %2364 = vmatpush2.msra.mxu0 0.0
    %2365 = vmatprep.subr.mxu0 0.0
    %2366 = vmatpush2.msra.mxu0 0.0
    %2367 = vmatprep.subr.mxu0 0.0
    %2368 = vmatpush2.msra.mxu0 0.0
    %2369 = vmatprep.subr.mxu0 0.0
    %2370 = vmatpush2.msra.mxu0 0.0
    %2371 = vmatprep.subr.mxu0 0.0
    %2372 = vmatpush2.msra.mxu0 0.0
    %2373 = vmatprep.subr.mxu0 0.0
    %2374 = vmatpush2.msra.mxu0 0.0
    %2375 = vmatprep.subr.mxu0 0.0
    %2376 = vmatpush2.msra.mxu0 0.0
    %2377 = vmatprep.subr.mxu0 0.0
    %2378 = vmatpush2.msra.mxu0 0.0
    %2379 = vmatprep.subr.mxu0 0.0
    %2380 = vmatpush2.msra.mxu0 0.0
    %2381 = vmatprep.subr.mxu0 0.0
    %2382 = vmatpush2.msra.mxu0 0.0
    %2383 = vmatprep.subr.mxu0 0.0
    %2384 = vmatpush2.msra.mxu0 0.0
    %2385 = vmatprep.subr.mxu0 0.0
    %2386 = vmatpush2.msra.mxu0 0.0
    %2387 = vmatprep.subr.mxu0 0.0
    %2388 = vmatpush2.msra.mxu0 0.0
    %2389 = vmatprep.mubr.f32.mxu0 0.0
    %2390 = vmatmul.mubr.f32.gmra.mxu0 %v2323
    %v2391 = vpop.f32.mrf.mxu0
    %v2392 = vadd.f32 0.0, %v2391
    %v2393 = vpop.f32.mrf.mxu0
    %2394 = vdwg.mxu0
    %2395 = vmatprep.subr.mxu0 0.0
    %2396 = vmatpush1.msra.mxu0 0.0
    %2397 = vmatprep.subr.mxu0 0.0
    %2398 = vmatpush1.msra.mxu0 0.0
    %2399 = vmatprep.subr.mxu0 0.0
    %2400 = vmatpush1.msra.mxu0 0.0
    %2401 = vmatprep.subr.mxu0 0.0
    %2402 = vmatpush1.msra.mxu0 0.0
    %2403 = vmatprep.subr.mxu0 0.0
    %2404 = vmatpush1.msra.mxu0 0.0
    %2405 = vmatprep.subr.mxu0 0.0
    %2406 = vmatpush1.msra.mxu0 0.0
    %2407 = vmatprep.subr.mxu0 0.0
    %2408 = vmatpush1.msra.mxu0 0.0
    %2409 = vmatprep.subr.mxu0 0.0
    %2410 = vmatpush1.msra.mxu0 0.0
    %2411 = vmatprep.subr.mxu0 0.0
    %2412 = vmatpush1.msra.mxu0 0.0
    %2413 = vmatprep.subr.mxu0 0.0
    %2414 = vmatpush1.msra.mxu0 0.0
    %2415 = vmatprep.subr.mxu0 0.0
    %2416 = vmatpush1.msra.mxu0 0.0
    %2417 = vmatprep.subr.mxu0 0.0
    %2418 = vmatpush1.msra.mxu0 0.0
    %2419 = vmatprep.subr.mxu0 0.0
    %2420 = vmatpush1.msra.mxu0 0.0
    %2421 = vmatprep.subr.mxu0 0.0
    %2422 = vmatpush1.msra.mxu0 0.0
    %2423 = vmatprep.subr.mxu0 0.0
    %2424 = vmatpush1.msra.mxu0 0.0
    %2425 = vmatprep.subr.mxu0 0.0
    %2426 = vmatpush1.msra.mxu0 %v2319
    %2427 = vmatprep.subr.mxu0 0.0
    %2428 = vmatpush2.msra.mxu0 0.0
    %2429 = vmatprep.subr.mxu0 0.0
    %2430 = vmatpush2.msra.mxu0 0.0
    %2431 = vmatprep.subr.mxu0 0.0
    %2432 = vmatpush2.msra.mxu0 0.0
    %2433 = vmatprep.subr.mxu0 0.0
    %2434 = vmatpush2.msra.mxu0 0.0
    %2435 = vmatprep.subr.mxu0 0.0
    %2436 = vmatpush2.msra.mxu0 0.0
    %2437 = vmatprep.subr.mxu0 0.0
    %2438 = vmatpush2.msra.mxu0 0.0
    %2439 = vmatprep.subr.mxu0 0.0
    %2440 = vmatpush2.msra.mxu0 0.0
    %2441 = vmatprep.subr.mxu0 0.0
    %2442 = vmatpush2.msra.mxu0 0.0
    %2443 = vmatprep.subr.mxu0 0.0
    %2444 = vmatpush2.msra.mxu0 0.0
    %2445 = vmatprep.subr.mxu0 0.0
    %2446 = vmatpush2.msra.mxu0 0.0
    %2447 = vmatprep.subr.mxu0 0.0
    %2448 = vmatpush2.msra.mxu0 0.0
    %2449 = vmatprep.subr.mxu0 0.0
    %2450 = vmatpush2.msra.mxu0 0.0
    %2451 = vmatprep.subr.mxu0 0.0
    %2452 = vmatpush2.msra.mxu0 0.0
    %2453 = vmatprep.subr.mxu0 0.0
    %2454 = vmatpush2.msra.mxu0 0.0
    %2455 = vmatprep.subr.mxu0 0.0
    %2456 = vmatpush2.msra.mxu0 0.0
    %2457 = vmatprep.subr.mxu0 0.0
    %2458 = vmatpush2.msra.mxu0 0.0
    %2459 = vmatprep.mubr.f32.mxu0 0.0
    %2460 = vmatmul.mubr.f32.gmra.mxu0 %v2323
    %v2461 = vpop.f32.mrf.mxu0
    %v2462 = vadd.f32 0.0, %v2461
    %v2463 = vpop.f32.mrf.mxu0
    %2464 = vdwg.mxu0
    %v2465 = vpack.c.bf16 %v2392, %v2392
    %v2466 = vpack.c.bf16 %v2462, %v2462
    %v2467 = vld [vmem:[%s5] sm:$0xf]
    %v2468 = vld [vmem:[%s5 + $0x4] sm:$0xf]
    %v2469 = vld [vmem:[%s5 + $0x8] sm:$0xf]
    %v2470 = vld [vmem:[%s5 + $0xc] sm:$0xf]
    %v2473 = vcombine.low %v2465, %v2466
    %v2475 = vunpack.c.l.s4 1983009808
    %v2476 = vunpack.c.0.s8 %v2475
    %v2477 = vlaneseq
    %v2478 = vshrl.u32 %v2477, 7
    %v2479 = vsub.s32 %v2476, %v2478
    %v2480 = vrot.slane %v2473, %v2479
    %v2485 = vunpack.c.l.b16 %v2467
    %v2486 = vunpack.c.l.b16 %v2468
    %v2487 = vunpack.c.l.b16 %v2469
    %v2488 = vunpack.c.l.b16 %v2470
    %v2489 = vpack.c.b16 %v2486, %v2485
    %v2490 = vpack.c.b16 %v2488, %v2487
    %v2494 = vsel %vm135, %v2480, 0
    %2496 = vmatprep.subr.bf16.mxu0 0
    %2497 = vmatpush1.bf16.msra.mxu0 0
    %2498 = vmatprep.subr.bf16.mxu0 0
    %2499 = vmatpush1.bf16.msra.mxu0 0
    %2500 = vmatprep.subr.bf16.mxu0 0
    %2501 = vmatpush1.bf16.msra.mxu0 0
    %2502 = vmatprep.subr.bf16.mxu0 0
    %2503 = vmatpush1.bf16.msra.mxu0 0
    %2504 = vmatprep.subr.bf16.mxu0 0
    %2505 = vmatpush1.bf16.msra.mxu0 0
    %2506 = vmatprep.subr.bf16.mxu0 0
    %2507 = vmatpush1.bf16.msra.mxu0 0
    %2508 = vmatprep.subr.bf16.mxu0 0
    %2509 = vmatpush1.bf16.msra.mxu0 %v2490
    %2510 = vmatprep.subr.bf16.mxu0 0
    %2511 = vmatpush1.bf16.msra.mxu0 %v2489
    %2512 = vmatprep.subr.bf16.mxu0 0
    %2513 = vmatpush2.bf16.msra.mxu0 0
    %2514 = vmatprep.subr.bf16.mxu0 0
    %2515 = vmatpush2.bf16.msra.mxu0 0
    %2516 = vmatprep.subr.bf16.mxu0 0
    %2517 = vmatpush2.bf16.msra.mxu0 0
    %2518 = vmatprep.subr.bf16.mxu0 0
    %2519 = vmatpush2.bf16.msra.mxu0 0
    %2520 = vmatprep.subr.bf16.mxu0 0
    %2521 = vmatpush2.bf16.msra.mxu0 0
    %2522 = vmatprep.subr.bf16.mxu0 0
    %2523 = vmatpush2.bf16.msra.mxu0 0
    %2524 = vmatprep.subr.bf16.mxu0 0
    %2525 = vmatpush2.bf16.msra.mxu0 0
    %2526 = vmatprep.subr.bf16.mxu0 0
    %2527 = vmatpush2.bf16.msra.mxu0 0
    %2528 = vmatprep.mubr.bf16.mxu0 0
    %2529 = vmatmul.mubr.bf16.gmra.mxu0 %v2494
    %v2530 = vpop.f32.mrf.mxu0
    %v2531 = vadd.f32 0.0, %v2530
    %v2532 = vpop.f32.mrf.mxu0
    %v2533 = vpop.f32.mrf.mxu0
    %v2534 = vpop.f32.mrf.mxu0
    %2535 = vdwg.mxu0
    %v2537 = vcombine.high %v2531, %v2531
    %v2539 = vld [vmem:[%s6] sm:$0x1]
    %v2540 = vld [vmem:[%s6 + $0x1] sm:$0x1]
    %vm2541 = vcmask 257024
    %v2542 = vsel %vm2541, %v2531, 0.0
    %v2543 = vsel %vm2541, %v2537, 0.0
    %v2544 = vadd.f32 %v2542, %v2543
    %v2545 = vrot.slane %v2544, 4
    %v2546 = vadd.f32 %v2544, %v2545
    %v2547 = vrot.slane %v2546, 2
    %v2548 = vadd.f32 %v2546, %v2547
    %v2549 = vrot.slane %v2548, 1
    %v2550 = vadd.f32 %v2548, %v2549
    %v2551 = vrcp.pop 8.0
    %v2552 = vmul.f32 %v2550, %v2551
    %v2553 = vsub.f32 %v2531, %v2552
    %v2554 = vsub.f32 %v2537, %v2552
    %v2555 = vmul.f32 %v2553, %v2553
    %v2556 = vmul.f32 %v2554, %v2554
    %v2557 = vsel %vm2541, %v2555, 0.0
    %v2558 = vsel %vm2541, %v2556, 0.0
    %v2559 = vadd.f32 %v2557, %v2558
    %v2560 = vrot.slane %v2559, 4
    %v2561 = vadd.f32 %v2559, %v2560
    %v2562 = vrot.slane %v2561, 2
    %v2563 = vadd.f32 %v2561, %v2562
    %v2564 = vrot.slane %v2563, 1
    %v2565 = vadd.f32 %v2563, %v2564
    %v2566 = vmul.f32 %v2565, %v2551
    %v2567 = vadd.f32 %v2566, 1e-05
    %v2568 = vrsqrt.pop %v2567
    %v2569 = vmul.f32 %v2539, %v2568
    %v2570 = vlaneseq
    %v2571 = vshrl.u32 %v2570, 7
    %v2572 = vsub.s32 0, %v2571
    %v2573 = vrot.slane %v2569, %v2572
    %v2574 = vmul.f32 %v2553, %v2573
    %v2575 = vmul.f32 %v2554, %v2573
    %v2576 = vlaneseq
    %v2577 = vshrl.u32 %v2576, 7
    %v2578 = vsub.s32 0, %v2577
    %v2579 = vrot.slane %v2540, %v2578
    %v2580 = vadd.f32 %v2574, %v2579
    %v2581 = vadd.f32 %v2575, %v2579
    %v2582 = vmax.f32 %v2580, 0.0
    %v2583 = vmax.f32 %v2581, 0.0
    %v2584 = vld [vmem:[%s20] sm:$0xf]
    %vm2585 = vcmask 31744
    %v2587 = vsel %vm2585, %v2584, 0
    %vm2589 = vcmask 1043456
    %v2591 = vsel %vm2589, %v2582, 0
    %2593 = vmatprep.subr.mxu0 0.0
    %2594 = vmatpush1.msra.mxu0 0.0
    %2595 = vmatprep.subr.mxu0 0.0
    %2596 = vmatpush1.msra.mxu0 0.0
    %2597 = vmatprep.subr.mxu0 0.0
    %2598 = vmatpush1.msra.mxu0 0.0
    %2599 = vmatprep.subr.mxu0 0.0
    %2600 = vmatpush1.msra.mxu0 0.0
    %2601 = vmatprep.subr.mxu0 0.0
    %2602 = vmatpush1.msra.mxu0 0.0
    %2603 = vmatprep.subr.mxu0 0.0
    %2604 = vmatpush1.msra.mxu0 0.0
    %2605 = vmatprep.subr.mxu0 0.0
    %2606 = vmatpush1.msra.mxu0 0.0
    %2607 = vmatprep.subr.mxu0 0.0
    %2608 = vmatpush1.msra.mxu0 0.0
    %2609 = vmatprep.subr.mxu0 0.0
    %2610 = vmatpush1.msra.mxu0 0.0
    %2611 = vmatprep.subr.mxu0 0.0
    %2612 = vmatpush1.msra.mxu0 0.0
    %2613 = vmatprep.subr.mxu0 0.0
    %2614 = vmatpush1.msra.mxu0 0.0
    %2615 = vmatprep.subr.mxu0 0.0
    %2616 = vmatpush1.msra.mxu0 0.0
    %2617 = vmatprep.subr.mxu0 0.0
    %2618 = vmatpush1.msra.mxu0 0.0
    %2619 = vmatprep.subr.mxu0 0.0
    %2620 = vmatpush1.msra.mxu0 0.0
    %2621 = vmatprep.subr.mxu0 0.0
    %2622 = vmatpush1.msra.mxu0 0.0
    %2623 = vmatprep.subr.mxu0 0.0
    %2624 = vmatpush1.msra.mxu0 %v2591
    %2625 = vmatprep.subr.mxu0 0.0
    %2626 = vmatpush2.msra.mxu0 0.0
    %2627 = vmatprep.subr.mxu0 0.0
    %2628 = vmatpush2.msra.mxu0 0.0
    %2629 = vmatprep.subr.mxu0 0.0
    %2630 = vmatpush2.msra.mxu0 0.0
    %2631 = vmatprep.subr.mxu0 0.0
    %2632 = vmatpush2.msra.mxu0 0.0
    %2633 = vmatprep.subr.mxu0 0.0
    %2634 = vmatpush2.msra.mxu0 0.0
    %2635 = vmatprep.subr.mxu0 0.0
    %2636 = vmatpush2.msra.mxu0 0.0
    %2637 = vmatprep.subr.mxu0 0.0
    %2638 = vmatpush2.msra.mxu0 0.0
    %2639 = vmatprep.subr.mxu0 0.0
    %2640 = vmatpush2.msra.mxu0 0.0
    %2641 = vmatprep.subr.mxu0 0.0
    %2642 = vmatpush2.msra.mxu0 0.0
    %2643 = vmatprep.subr.mxu0 0.0
    %2644 = vmatpush2.msra.mxu0 0.0
    %2645 = vmatprep.subr.mxu0 0.0
    %2646 = vmatpush2.msra.mxu0 0.0
    %2647 = vmatprep.subr.mxu0 0.0
    %2648 = vmatpush2.msra.mxu0 0.0
    %2649 = vmatprep.subr.mxu0 0.0
    %2650 = vmatpush2.msra.mxu0 0.0
    %2651 = vmatprep.subr.mxu0 0.0
    %2652 = vmatpush2.msra.mxu0 0.0
    %2653 = vmatprep.subr.mxu0 0.0
    %2654 = vmatpush2.msra.mxu0 0.0
    %2655 = vmatprep.subr.mxu0 0.0
    %2656 = vmatpush2.msra.mxu0 0.0
    %2657 = vmatprep.mubr.f32.mxu0 0.0
    %2658 = vmatmul.mubr.f32.gmra.mxu0 %v2587
    %v2659 = vpop.f32.mrf.mxu0
    %v2660 = vadd.f32 0.0, %v2659
    %v2661 = vpop.f32.mrf.mxu0
    %2662 = vdwg.mxu0
    %v2664 = vsel %vm2589, %v2583, 0
    %2666 = vmatprep.subr.mxu0 0.0
    %2667 = vmatpush1.msra.mxu0 0.0
    %2668 = vmatprep.subr.mxu0 0.0
    %2669 = vmatpush1.msra.mxu0 0.0
    %2670 = vmatprep.subr.mxu0 0.0
    %2671 = vmatpush1.msra.mxu0 0.0
    %2672 = vmatprep.subr.mxu0 0.0
    %2673 = vmatpush1.msra.mxu0 0.0
    %2674 = vmatprep.subr.mxu0 0.0
    %2675 = vmatpush1.msra.mxu0 0.0
    %2676 = vmatprep.subr.mxu0 0.0
    %2677 = vmatpush1.msra.mxu0 0.0
    %2678 = vmatprep.subr.mxu0 0.0
    %2679 = vmatpush1.msra.mxu0 0.0
    %2680 = vmatprep.subr.mxu0 0.0
    %2681 = vmatpush1.msra.mxu0 0.0
    %2682 = vmatprep.subr.mxu0 0.0
    %2683 = vmatpush1.msra.mxu0 0.0
    %2684 = vmatprep.subr.mxu0 0.0
    %2685 = vmatpush1.msra.mxu0 0.0
    %2686 = vmatprep.subr.mxu0 0.0
    %2687 = vmatpush1.msra.mxu0 0.0
    %2688 = vmatprep.subr.mxu0 0.0
    %2689 = vmatpush1.msra.mxu0 0.0
    %2690 = vmatprep.subr.mxu0 0.0
    %2691 = vmatpush1.msra.mxu0 0.0
    %2692 = vmatprep.subr.mxu0 0.0
    %2693 = vmatpush1.msra.mxu0 0.0
    %2694 = vmatprep.subr.mxu0 0.0
    %2695 = vmatpush1.msra.mxu0 0.0
    %2696 = vmatprep.subr.mxu0 0.0
    %2697 = vmatpush1.msra.mxu0 %v2664
    %2698 = vmatprep.subr.mxu0 0.0
    %2699 = vmatpush2.msra.mxu0 0.0
    %2700 = vmatprep.subr.mxu0 0.0
    %2701 = vmatpush2.msra.mxu0 0.0
    %2702 = vmatprep.subr.mxu0 0.0
    %2703 = vmatpush2.msra.mxu0 0.0
    %2704 = vmatprep.subr.mxu0 0.0
    %2705 = vmatpush2.msra.mxu0 0.0
    %2706 = vmatprep.subr.mxu0 0.0
    %2707 = vmatpush2.msra.mxu0 0.0
    %2708 = vmatprep.subr.mxu0 0.0
    %2709 = vmatpush2.msra.mxu0 0.0
    %2710 = vmatprep.subr.mxu0 0.0
    %2711 = vmatpush2.msra.mxu0 0.0
    %2712 = vmatprep.subr.mxu0 0.0
    %2713 = vmatpush2.msra.mxu0 0.0
    %2714 = vmatprep.subr.mxu0 0.0
    %2715 = vmatpush2.msra.mxu0 0.0
    %2716 = vmatprep.subr.mxu0 0.0
    %2717 = vmatpush2.msra.mxu0 0.0
    %2718 = vmatprep.subr.mxu0 0.0
    %2719 = vmatpush2.msra.mxu0 0.0
    %2720 = vmatprep.subr.mxu0 0.0
    %2721 = vmatpush2.msra.mxu0 0.0
    %2722 = vmatprep.subr.mxu0 0.0
    %2723 = vmatpush2.msra.mxu0 0.0
    %2724 = vmatprep.subr.mxu0 0.0
    %2725 = vmatpush2.msra.mxu0 0.0
    %2726 = vmatprep.subr.mxu0 0.0
    %2727 = vmatpush2.msra.mxu0 0.0
    %2728 = vmatprep.subr.mxu0 0.0
    %2729 = vmatpush2.msra.mxu0 0.0
    %2730 = vmatprep.mubr.f32.mxu0 0.0
    %2731 = vmatmul.mubr.f32.gmra.mxu0 %v2587
    %v2732 = vpop.f32.mrf.mxu0
    %v2733 = vadd.f32 0.0, %v2732
    %v2734 = vpop.f32.mrf.mxu0
    %2735 = vdwg.mxu0
    %v2738 = vrot.slane %v2660, 2
    %v2739 = vrot.slane %v2733, 2
    %v2742 = vmax.f32 %v2660, %v2738
    %v2743 = vmax.f32 %v2733, %v2739
    %2744 = vst [vmem:[#allocation2] sm:$0xff] 0.0
    %2745 = vst [vmem:[#allocation2 + $0x8] sm:$0xff] 0.0
    %2746 = vst [vmem:[#allocation2 + $0x40] sm:$0xff] 0.0
    %2747 = vst [vmem:[#allocation2 + $0x48] sm:$0xff] 0.0
    %v2750 = vrot.slane %v2318, 5
    %v2751 = vrot.slane %v2319, 5
    %2752 = vrot.lane.b32.xlu0 %v2750, 32
    %v2753 = vpop.permute.xlu0 %2752
    %2754 = vrot.lane.b32.xlu0 %v2751, 32
    %v2755 = vpop.permute.xlu0 %2754
    %2758 = vst.msk [vmem:[#allocation2] sm:$0xf8] %vm765, %v2753
    %2759 = vst.msk [vmem:[#allocation2 + $0x40] sm:$0xf8] %vm765, %v2755
    %v2760 = vrot.slane %v2318, 6
    %v2761 = vrot.slane %v2319, 6
    %2762 = vrot.lane.b32.xlu0 %v2760, 64
    %v2763 = vpop.permute.xlu0 %2762
    %2764 = vrot.lane.b32.xlu0 %v2761, 64
    %v2765 = vpop.permute.xlu0 %2764
    %2768 = vst.msk [vmem:[#allocation2] sm:$0xfc] %vm814, %v2763
    %2769 = vst.msk [vmem:[#allocation2 + $0x40] sm:$0xfc] %vm814, %v2765
    %v2770 = vrot.slane %v2318, 7
    %v2771 = vrot.slane %v2319, 7
    %2772 = vrot.lane.b32.xlu0 %v2770, 96
    %v2773 = vpop.permute.xlu0 %2772
    %2774 = vrot.lane.b32.xlu0 %v2771, 96
    %v2775 = vpop.permute.xlu0 %2774
    %2778 = vst.msk [vmem:[#allocation2] sm:$0xfe] %vm863, %v2773
    %2779 = vst.msk [vmem:[#allocation2 + $0x40] sm:$0xfe] %vm863, %v2775
    %2780 = vst.msk [vmem:[#allocation2 + $0x8] sm:$0xff] %vm135, %v2318
    %2781 = vst.msk [vmem:[#allocation2 + $0x48] sm:$0xff] %vm135, %v2319
    %v2782 = vrot.slane %v2318, 1
    %v2783 = vrot.slane %v2319, 1
    %2784 = vrot.lane.b32.xlu0 %v2782, 32
    %v2785 = vpop.permute.xlu0 %2784
    %2786 = vrot.lane.b32.xlu0 %v2783, 32
    %v2787 = vpop.permute.xlu0 %2786
    %2790 = vst.msk [vmem:[#allocation2 + $0x8] sm:$0x7f] %vm923, %v2785
    %2791 = vst.msk [vmem:[#allocation2 + $0x48] sm:$0x7f] %vm923, %v2787
    %v2792 = vrot.slane %v2318, 2
    %v2793 = vrot.slane %v2319, 2
    %2794 = vrot.lane.b32.xlu0 %v2792, 64
    %v2795 = vpop.permute.xlu0 %2794
    %2796 = vrot.lane.b32.xlu0 %v2793, 64
    %v2797 = vpop.permute.xlu0 %2796
    %2800 = vst.msk [vmem:[#allocation2 + $0x8] sm:$0x3f] %vm971, %v2795
    %2801 = vst.msk [vmem:[#allocation2 + $0x48] sm:$0x3f] %vm971, %v2797
    %v2802 = vrot.slane %v2318, 3
    %v2803 = vrot.slane %v2319, 3
    %2804 = vrot.lane.b32.xlu0 %v2802, 96
    %v2805 = vpop.permute.xlu0 %2804
    %2806 = vrot.lane.b32.xlu0 %v2803, 96
    %v2807 = vpop.permute.xlu0 %2806
    %2810 = vst.msk [vmem:[#allocation2 + $0x8] sm:$0x1f] %vm1019, %v2805
    %2811 = vst.msk [vmem:[#allocation2 + $0x48] sm:$0x1f] %vm1019, %v2807
    %v2812 = vld [vmem:[#allocation2] sm:$0xff]
    %v2813 = vld [vmem:[#allocation2 + $0x40] sm:$0xff]
    %v2814 = vsel %vm1030, -inf, %v2812
    %v2815 = vsel %vm1030, -inf, %v2813
    %vm2816 = vcmp.eq.s32.totalorder %v1026, 7
    %v2817 = vld [vmem:[#allocation2 + $0x8] sm:$0xff]
    %v2818 = vld [vmem:[#allocation2 + $0x48] sm:$0xff]
    %v2819 = vsel %vm2816, -inf, %v2817
    %v2820 = vsel %vm2816, -inf, %v2818
    %2821 = vrot.lane.b32.xlu0 %v2318, 96
    %v2822 = vpop.permute.xlu0 %2821
    %2823 = vrot.lane.b32.xlu0 %v2319, 96
    %v2824 = vpop.permute.xlu0 %2823
    %v2827 = vmax.f32 %v2814, %v2822
    %v2828 = vmax.f32 %v2815, %v2824
    %2831 = vrot.lane.b32.xlu0 %v2819, 64
    %v2832 = vpop.permute.xlu0 %2831
    %2833 = vrot.lane.b32.xlu0 %v2820, 64
    %v2834 = vpop.permute.xlu0 %2833
    %v2837 = vmax.f32 %v2827, %v2832
    %v2838 = vmax.f32 %v2828, %v2834
    %2841 = vrot.lane.b32.xlu0 %v2837, 32
    %v2842 = vpop.permute.xlu0 %2841
    %2843 = vrot.lane.b32.xlu0 %v2838, 32
    %v2844 = vpop.permute.xlu0 %2843
    %2847 = vst.msk [vmem:[#allocation2] sm:$0xff] %vm135, %v2842
    %2848 = vst.msk [vmem:[#allocation2 + $0x40] sm:$0xff] %vm135, %v2844
    %v2849 = vld [vmem:[#allocation2] sm:$0xff]
    %v2850 = vld [vmem:[#allocation2 + $0x8] sm:$0xff]
    %v2851 = vld [vmem:[#allocation2 + $0x40] sm:$0xff]
    %v2852 = vld [vmem:[#allocation2 + $0x48] sm:$0xff]
    %v2853 = vpack.c.bf16 %v2849, %v2849
    %v2854 = vpack.c.bf16 %v2850, %v2850
    %v2855 = vpack.c.bf16 %v2851, %v2851
    %v2856 = vpack.c.bf16 %v2852, %v2852
    %v2857 = vld [vmem:[%s11] sm:$0xf]
    %v2858 = vld [vmem:[%s11 + $0x4] sm:$0xf]
    %v2859 = vld [vmem:[%s11 + $0x8] sm:$0xf]
    %v2860 = vld [vmem:[%s11 + $0xc] sm:$0xf]
    %v2861 = vld [vmem:[%s11 + $0x10] sm:$0xf]
    %v2862 = vld [vmem:[%s11 + $0x14] sm:$0xf]
    %v2863 = vld [vmem:[%s11 + $0x18] sm:$0xf]
    %v2864 = vld [vmem:[%s11 + $0x1c] sm:$0xf]
    %v2865 = vld [vmem:[%s11 + $0x20] sm:$0xf]
    %v2866 = vld [vmem:[%s11 + $0x24] sm:$0xf]
    %v2867 = vld [vmem:[%s11 + $0x28] sm:$0xf]
    %v2868 = vld [vmem:[%s11 + $0x2c] sm:$0xf]
    %v2869 = vld [vmem:[%s11 + $0x30] sm:$0xf]
    %v2870 = vld [vmem:[%s11 + $0x34] sm:$0xf]
    %v2871 = vld [vmem:[%s11 + $0x38] sm:$0xf]
    %v2872 = vld [vmem:[%s11 + $0x3c] sm:$0xf]
    %v2873 = vld [vmem:[%s11 + $0x40] sm:$0xf]
    %v2874 = vld [vmem:[%s11 + $0x44] sm:$0xf]
    %v2875 = vld [vmem:[%s11 + $0x48] sm:$0xf]
    %v2876 = vld [vmem:[%s11 + $0x4c] sm:$0xf]
    %v2877 = vld [vmem:[%s11 + $0x50] sm:$0xf]
    %v2878 = vld [vmem:[%s11 + $0x54] sm:$0xf]
    %v2879 = vld [vmem:[%s11 + $0x58] sm:$0xf]
    %v2880 = vld [vmem:[%s11 + $0x5c] sm:$0xf]
    %v2881 = vld [vmem:[%s11 + $0x60] sm:$0xf]
    %v2882 = vld [vmem:[%s11 + $0x64] sm:$0xf]
    %v2883 = vld [vmem:[%s11 + $0x68] sm:$0xf]
    %v2884 = vld [vmem:[%s11 + $0x6c] sm:$0xf]
    %v2885 = vld [vmem:[%s11 + $0x70] sm:$0xf]
    %v2886 = vld [vmem:[%s11 + $0x74] sm:$0xf]
    %v2887 = vld [vmem:[%s11 + $0x78] sm:$0xf]
    %v2888 = vld [vmem:[%s11 + $0x7c] sm:$0xf]
    %v2893 = vunpack.c.l.b16 %v2853
    %v2894 = vunpack.c.l.b16 %v2854
    %v2895 = vunpack.c.l.b16 %v2855
    %v2896 = vunpack.c.l.b16 %v2856
    %v2897 = vpack.c.b16 %v2895, %v2893
    %v2898 = vpack.c.b16 %v2896, %v2894
    %v2933 = vunpack.c.l.b16 %v2857
    %v2934 = vunpack.c.l.b16 %v2858
    %v2935 = vunpack.c.l.b16 %v2859
    %v2936 = vunpack.c.l.b16 %v2860
    %v2937 = vunpack.c.l.b16 %v2861
    %v2938 = vunpack.c.l.b16 %v2862
    %v2939 = vunpack.c.l.b16 %v2863
    %v2940 = vunpack.c.l.b16 %v2864
    %v2941 = vunpack.c.l.b16 %v2865
    %v2942 = vunpack.c.l.b16 %v2866
    %v2943 = vunpack.c.l.b16 %v2867
    %v2944 = vunpack.c.l.b16 %v2868
    %v2945 = vunpack.c.l.b16 %v2869
    %v2946 = vunpack.c.l.b16 %v2870
    %v2947 = vunpack.c.l.b16 %v2871
    %v2948 = vunpack.c.l.b16 %v2872
    %v2949 = vunpack.c.l.b16 %v2873
    %v2950 = vunpack.c.l.b16 %v2874
    %v2951 = vunpack.c.l.b16 %v2875
    %v2952 = vunpack.c.l.b16 %v2876
    %v2953 = vunpack.c.l.b16 %v2877
    %v2954 = vunpack.c.l.b16 %v2878
    %v2955 = vunpack.c.l.b16 %v2879
    %v2956 = vunpack.c.l.b16 %v2880
    %v2957 = vunpack.c.l.b16 %v2881
    %v2958 = vunpack.c.l.b16 %v2882
    %v2959 = vunpack.c.l.b16 %v2883
    %v2960 = vunpack.c.l.b16 %v2884
    %v2961 = vunpack.c.l.b16 %v2885
    %v2962 = vunpack.c.l.b16 %v2886
    %v2963 = vunpack.c.l.b16 %v2887
    %v2964 = vunpack.c.l.b16 %v2888
    %v2965 = vpack.c.b16 %v2934, %v2933
    %v2966 = vpack.c.b16 %v2936, %v2935
    %v2967 = vpack.c.b16 %v2938, %v2937
    %v2968 = vpack.c.b16 %v2940, %v2939
    %v2969 = vpack.c.b16 %v2942, %v2941
    %v2970 = vpack.c.b16 %v2944, %v2943
    %v2971 = vpack.c.b16 %v2946, %v2945
    %v2972 = vpack.c.b16 %v2948, %v2947
    %v2973 = vpack.c.b16 %v2950, %v2949
    %v2974 = vpack.c.b16 %v2952, %v2951
    %v2975 = vpack.c.b16 %v2954, %v2953
    %v2976 = vpack.c.b16 %v2956, %v2955
    %v2977 = vpack.c.b16 %v2958, %v2957
    %v2978 = vpack.c.b16 %v2960, %v2959
    %v2979 = vpack.c.b16 %v2962, %v2961
    %v2980 = vpack.c.b16 %v2964, %v2963
    %2997 = vmatprep.subr.bf16.mxu0 0
    %2998 = vmatpush1.bf16.msra.mxu0 %v2972
    %2999 = vmatprep.subr.bf16.mxu0 0
    %3000 = vmatpush1.bf16.msra.mxu0 %v2971
    %3001 = vmatprep.subr.bf16.mxu0 0
    %3002 = vmatpush1.bf16.msra.mxu0 %v2970
    %3003 = vmatprep.subr.bf16.mxu0 0
    %3004 = vmatpush1.bf16.msra.mxu0 %v2969
    %3005 = vmatprep.subr.bf16.mxu0 0
    %3006 = vmatpush1.bf16.msra.mxu0 %v2968
    %3007 = vmatprep.subr.bf16.mxu0 0
    %3008 = vmatpush1.bf16.msra.mxu0 %v2967
    %3009 = vmatprep.subr.bf16.mxu0 0
    %3010 = vmatpush1.bf16.msra.mxu0 %v2966
    %3011 = vmatprep.subr.bf16.mxu0 0
    %3012 = vmatpush1.bf16.msra.mxu0 %v2965
    %3013 = vmatprep.subr.bf16.mxu0 0
    %3014 = vmatpush2.bf16.msra.mxu0 %v2980
    %3015 = vmatprep.subr.bf16.mxu0 0
    %3016 = vmatpush2.bf16.msra.mxu0 %v2979
    %3017 = vmatprep.subr.bf16.mxu0 0
    %3018 = vmatpush2.bf16.msra.mxu0 %v2978
    %3019 = vmatprep.subr.bf16.mxu0 0
    %3020 = vmatpush2.bf16.msra.mxu0 %v2977
    %3021 = vmatprep.subr.bf16.mxu0 0
    %3022 = vmatpush2.bf16.msra.mxu0 %v2976
    %3023 = vmatprep.subr.bf16.mxu0 0
    %3024 = vmatpush2.bf16.msra.mxu0 %v2975
    %3025 = vmatprep.subr.bf16.mxu0 0
    %3026 = vmatpush2.bf16.msra.mxu0 %v2974
    %3027 = vmatprep.subr.bf16.mxu0 0
    %3028 = vmatpush2.bf16.msra.mxu0 %v2973
    %3029 = vmatprep.mubr.bf16.mxu0 %v2898
    %3030 = vmatmul.mubr.bf16.gmra.mxu0 %v2897
    %v3031 = vpop.f32.mrf.mxu0
    %v3032 = vadd.f32 0.0, %v3031
    %v3033 = vpop.f32.mrf.mxu0
    %v3034 = vpop.f32.mrf.mxu0
    %v3035 = vadd.f32 0.0, %v3034
    %v3036 = vpop.f32.mrf.mxu0
    %3037 = vdwg.mxu0
    %v3038 = vld [vmem:[%s12] sm:$0x1]
    %v3039 = vld [vmem:[%s12 + $0x1] sm:$0x1]
    %v3040 = vsel %vm135, %v3032, 0.0
    %v3041 = vsel %vm135, %v3035, 0.0
    %v3042 = vadd.f32 %v3040, %v3041
    %v3043 = vrot.slane %v3042, 4
    %v3044 = vadd.f32 %v3042, %v3043
    %v3045 = vrot.slane %v3044, 2
    %v3046 = vadd.f32 %v3044, %v3045
    %v3047 = vrot.slane %v3046, 1
    %v3048 = vadd.f32 %v3046, %v3047
    %v3049 = vrcp.pop 16.0
    %v3050 = vmul.f32 %v3048, %v3049
    %v3051 = vsub.f32 %v3032, %v3050
    %v3052 = vsub.f32 %v3035, %v3050
    %v3053 = vmul.f32 %v3051, %v3051
    %v3054 = vmul.f32 %v3052, %v3052
    %v3055 = vsel %vm135, %v3053, 0.0
    %v3056 = vsel %vm135, %v3054, 0.0
    %v3057 = vadd.f32 %v3055, %v3056
    %v3058 = vrot.slane %v3057, 4
    %v3059 = vadd.f32 %v3057, %v3058
    %v3060 = vrot.slane %v3059, 2
    %v3061 = vadd.f32 %v3059, %v3060
    %v3062 = vrot.slane %v3061, 1
    %v3063 = vadd.f32 %v3061, %v3062
    %v3064 = vmul.f32 %v3063, %v3049
    %v3065 = vadd.f32 %v3064, 1e-05
    %v3066 = vrsqrt.pop %v3065
    %v3067 = vmul.f32 %v3038, %v3066
    %v3068 = vlaneseq
    %v3069 = vshrl.u32 %v3068, 7
    %v3070 = vsub.s32 0, %v3069
    %v3071 = vrot.slane %v3067, %v3070
    %v3072 = vmul.f32 %v3051, %v3071
    %v3073 = vmul.f32 %v3052, %v3071
    %v3074 = vlaneseq
    %v3075 = vshrl.u32 %v3074, 7
    %v3076 = vsub.s32 0, %v3075
    %v3077 = vrot.slane %v3039, %v3076
    %v3078 = vadd.f32 %v3072, %v3077
    %v3079 = vadd.f32 %v3073, %v3077
    %v3080 = vmax.f32 %v3078, 0.0
    %v3081 = vmax.f32 %v3079, 0.0
    %v3082 = vld [vmem:[%s19] sm:$0xff]
    %v3084 = vsel %vm2321, %v3082, 0
    %3086 = vmatprep.subr.mxu0 0.0
    %3087 = vmatpush1.msra.mxu0 0.0
    %3088 = vmatprep.subr.mxu0 0.0
    %3089 = vmatpush1.msra.mxu0 0.0
    %3090 = vmatprep.subr.mxu0 0.0
    %3091 = vmatpush1.msra.mxu0 0.0
    %3092 = vmatprep.subr.mxu0 0.0
    %3093 = vmatpush1.msra.mxu0 0.0
    %3094 = vmatprep.subr.mxu0 0.0
    %3095 = vmatpush1.msra.mxu0 0.0
    %3096 = vmatprep.subr.mxu0 0.0
    %3097 = vmatpush1.msra.mxu0 0.0
    %3098 = vmatprep.subr.mxu0 0.0
    %3099 = vmatpush1.msra.mxu0 0.0
    %3100 = vmatprep.subr.mxu0 0.0
    %3101 = vmatpush1.msra.mxu0 0.0
    %3102 = vmatprep.subr.mxu0 0.0
    %3103 = vmatpush1.msra.mxu0 0.0
    %3104 = vmatprep.subr.mxu0 0.0
    %3105 = vmatpush1.msra.mxu0 0.0
    %3106 = vmatprep.subr.mxu0 0.0
    %3107 = vmatpush1.msra.mxu0 0.0
    %3108 = vmatprep.subr.mxu0 0.0
    %3109 = vmatpush1.msra.mxu0 0.0
    %3110 = vmatprep.subr.mxu0 0.0
    %3111 = vmatpush1.msra.mxu0 0.0
    %3112 = vmatprep.subr.mxu0 0.0
    %3113 = vmatpush1.msra.mxu0 0.0
    %3114 = vmatprep.subr.mxu0 0.0
    %3115 = vmatpush1.msra.mxu0 0.0
    %3116 = vmatprep.subr.mxu0 0.0
    %3117 = vmatpush1.msra.mxu0 %v3080
    %3118 = vmatprep.subr.mxu0 0.0
    %3119 = vmatpush2.msra.mxu0 0.0
    %3120 = vmatprep.subr.mxu0 0.0
    %3121 = vmatpush2.msra.mxu0 0.0
    %3122 = vmatprep.subr.mxu0 0.0
    %3123 = vmatpush2.msra.mxu0 0.0
    %3124 = vmatprep.subr.mxu0 0.0
    %3125 = vmatpush2.msra.mxu0 0.0
    %3126 = vmatprep.subr.mxu0 0.0
    %3127 = vmatpush2.msra.mxu0 0.0
    %3128 = vmatprep.subr.mxu0 0.0
    %3129 = vmatpush2.msra.mxu0 0.0
    %3130 = vmatprep.subr.mxu0 0.0
    %3131 = vmatpush2.msra.mxu0 0.0
    %3132 = vmatprep.subr.mxu0 0.0
    %3133 = vmatpush2.msra.mxu0 0.0
    %3134 = vmatprep.subr.mxu0 0.0
    %3135 = vmatpush2.msra.mxu0 0.0
    %3136 = vmatprep.subr.mxu0 0.0
    %3137 = vmatpush2.msra.mxu0 0.0
    %3138 = vmatprep.subr.mxu0 0.0
    %3139 = vmatpush2.msra.mxu0 0.0
    %3140 = vmatprep.subr.mxu0 0.0
    %3141 = vmatpush2.msra.mxu0 0.0
    %3142 = vmatprep.subr.mxu0 0.0
    %3143 = vmatpush2.msra.mxu0 0.0
    %3144 = vmatprep.subr.mxu0 0.0
    %3145 = vmatpush2.msra.mxu0 0.0
    %3146 = vmatprep.subr.mxu0 0.0
    %3147 = vmatpush2.msra.mxu0 0.0
    %3148 = vmatprep.subr.mxu0 0.0
    %3149 = vmatpush2.msra.mxu0 0.0
    %3150 = vmatprep.mubr.f32.mxu0 0.0
    %3151 = vmatmul.mubr.f32.gmra.mxu0 %v3084
    %v3152 = vpop.f32.mrf.mxu0
    %v3153 = vadd.f32 0.0, %v3152
    %v3154 = vpop.f32.mrf.mxu0
    %3155 = vdwg.mxu0
    %3156 = vmatprep.subr.mxu0 0.0
    %3157 = vmatpush1.msra.mxu0 0.0
    %3158 = vmatprep.subr.mxu0 0.0
    %3159 = vmatpush1.msra.mxu0 0.0
    %3160 = vmatprep.subr.mxu0 0.0
    %3161 = vmatpush1.msra.mxu0 0.0
    %3162 = vmatprep.subr.mxu0 0.0
    %3163 = vmatpush1.msra.mxu0 0.0
    %3164 = vmatprep.subr.mxu0 0.0
    %3165 = vmatpush1.msra.mxu0 0.0
    %3166 = vmatprep.subr.mxu0 0.0
    %3167 = vmatpush1.msra.mxu0 0.0
    %3168 = vmatprep.subr.mxu0 0.0
    %3169 = vmatpush1.msra.mxu0 0.0
    %3170 = vmatprep.subr.mxu0 0.0
    %3171 = vmatpush1.msra.mxu0 0.0
    %3172 = vmatprep.subr.mxu0 0.0
    %3173 = vmatpush1.msra.mxu0 0.0
    %3174 = vmatprep.subr.mxu0 0.0
    %3175 = vmatpush1.msra.mxu0 0.0
    %3176 = vmatprep.subr.mxu0 0.0
    %3177 = vmatpush1.msra.mxu0 0.0
    %3178 = vmatprep.subr.mxu0 0.0
    %3179 = vmatpush1.msra.mxu0 0.0
    %3180 = vmatprep.subr.mxu0 0.0
    %3181 = vmatpush1.msra.mxu0 0.0
    %3182 = vmatprep.subr.mxu0 0.0
    %3183 = vmatpush1.msra.mxu0 0.0
    %3184 = vmatprep.subr.mxu0 0.0
    %3185 = vmatpush1.msra.mxu0 0.0
    %3186 = vmatprep.subr.mxu0 0.0
    %3187 = vmatpush1.msra.mxu0 %v3081
    %3188 = vmatprep.subr.mxu0 0.0
    %3189 = vmatpush2.msra.mxu0 0.0
    %3190 = vmatprep.subr.mxu0 0.0
    %3191 = vmatpush2.msra.mxu0 0.0
    %3192 = vmatprep.subr.mxu0 0.0
    %3193 = vmatpush2.msra.mxu0 0.0
    %3194 = vmatprep.subr.mxu0 0.0
    %3195 = vmatpush2.msra.mxu0 0.0
    %3196 = vmatprep.subr.mxu0 0.0
    %3197 = vmatpush2.msra.mxu0 0.0
    %3198 = vmatprep.subr.mxu0 0.0
    %3199 = vmatpush2.msra.mxu0 0.0
    %3200 = vmatprep.subr.mxu0 0.0
    %3201 = vmatpush2.msra.mxu0 0.0
    %3202 = vmatprep.subr.mxu0 0.0
    %3203 = vmatpush2.msra.mxu0 0.0
    %3204 = vmatprep.subr.mxu0 0.0
    %3205 = vmatpush2.msra.mxu0 0.0
    %3206 = vmatprep.subr.mxu0 0.0
    %3207 = vmatpush2.msra.mxu0 0.0
    %3208 = vmatprep.subr.mxu0 0.0
    %3209 = vmatpush2.msra.mxu0 0.0
    %3210 = vmatprep.subr.mxu0 0.0
    %3211 = vmatpush2.msra.mxu0 0.0
    %3212 = vmatprep.subr.mxu0 0.0
    %3213 = vmatpush2.msra.mxu0 0.0
    %3214 = vmatprep.subr.mxu0 0.0
    %3215 = vmatpush2.msra.mxu0 0.0
    %3216 = vmatprep.subr.mxu0 0.0
    %3217 = vmatpush2.msra.mxu0 0.0
    %3218 = vmatprep.subr.mxu0 0.0
    %3219 = vmatpush2.msra.mxu0 0.0
    %3220 = vmatprep.mubr.f32.mxu0 0.0
    %3221 = vmatmul.mubr.f32.gmra.mxu0 %v3084
    %v3222 = vpop.f32.mrf.mxu0
    %v3223 = vadd.f32 0.0, %v3222
    %v3224 = vpop.f32.mrf.mxu0
    %3225 = vdwg.mxu0
    %v3228 = vrot.slane %v3153, 4
    %v3229 = vrot.slane %v3223, 4
    %v3232 = vmax.f32 %v3153, %v3228
    %v3233 = vmax.f32 %v3223, %v3229
    %3234 = vst [vmem:[#allocation2] sm:$0xf] 0.0
    %3235 = vst [vmem:[#allocation2 + $0x8] sm:$0xf] 0.0
    %3236 = vst [vmem:[#allocation2 + $0x40] sm:$0xf] 0.0
    %3237 = vst [vmem:[#allocation2 + $0x48] sm:$0xf] 0.0
    %3240 = vrot.lane.b32.xlu0 %v3232, 32
    %v3241 = vpop.permute.xlu0 %3240
    %3242 = vrot.lane.b32.xlu0 %v3233, 32
    %v3243 = vpop.permute.xlu0 %3242
    %vm3246 = vcmask 516352
    %3247 = vst.msk [vmem:[#allocation2 + $0x3] sm:$0x1] %vm3246, %v3241
    %3248 = vst.msk [vmem:[#allocation2 + $0x43] sm:$0x1] %vm3246, %v3243
    %v3249 = vrot.slane %v3232, 6
    %v3250 = vrot.slane %v3233, 6
    %3251 = vrot.lane.b32.xlu0 %v3249, 64
    %v3252 = vpop.permute.xlu0 %3251
    %3253 = vrot.lane.b32.xlu0 %v3250, 64
    %v3254 = vpop.permute.xlu0 %3253
    %vm3257 = vcmask 781826
    %3258 = vst.msk [vmem:[#allocation2] sm:$0xc] %vm3257, %v3252
    %3259 = vst.msk [vmem:[#allocation2 + $0x40] sm:$0xc] %vm3257, %v3254
    %v3260 = vrot.slane %v3232, 7
    %v3261 = vrot.slane %v3233, 7
    %3262 = vrot.lane.b32.xlu0 %v3260, 96
    %v3263 = vpop.permute.xlu0 %3262
    %3264 = vrot.lane.b32.xlu0 %v3261, 96
    %v3265 = vpop.permute.xlu0 %3264
    %vm3268 = vcmask 1044225
    %3269 = vst.msk [vmem:[#allocation2] sm:$0xe] %vm3268, %v3263
    %3270 = vst.msk [vmem:[#allocation2 + $0x40] sm:$0xe] %vm3268, %v3265
    %3271 = vst.msk [vmem:[#allocation2 + $0x8] sm:$0xf] %vm2541, %v3232
    %3272 = vst.msk [vmem:[#allocation2 + $0x48] sm:$0xf] %vm2541, %v3233
    %v3273 = vrot.slane %v3232, 1
    %v3274 = vrot.slane %v3233, 1
    %3275 = vrot.lane.b32.xlu0 %v3273, 32
    %v3276 = vpop.permute.xlu0 %3275
    %3277 = vrot.lane.b32.xlu0 %v3274, 32
    %v3278 = vpop.permute.xlu0 %3277
    %vm3281 = vcmask 518400
    %3282 = vst.msk [vmem:[#allocation2 + $0x8] sm:$0x7] %vm3281, %v3276
    %3283 = vst.msk [vmem:[#allocation2 + $0x48] sm:$0x7] %vm3281, %v3278
    %v3284 = vrot.slane %v3232, 2
    %v3285 = vrot.slane %v3233, 2
    %3286 = vrot.lane.b32.xlu0 %v3284, 64
    %v3287 = vpop.permute.xlu0 %3286
    %3288 = vrot.lane.b32.xlu0 %v3285, 64
    %v3289 = vpop.permute.xlu0 %3288
    %vm3292 = vcmask 779776
    %3293 = vst.msk [vmem:[#allocation2 + $0x8] sm:$0x3] %vm3292, %v3287
    %3294 = vst.msk [vmem:[#allocation2 + $0x48] sm:$0x3] %vm3292, %v3289
    %v3295 = vrot.slane %v3232, 3
    %v3296 = vrot.slane %v3233, 3
    %3297 = vrot.lane.b32.xlu0 %v3295, 96
    %v3298 = vpop.permute.xlu0 %3297
    %3299 = vrot.lane.b32.xlu0 %v3296, 96
    %v3300 = vpop.permute.xlu0 %3299
    %vm3303 = vcmask 1041152
    %3304 = vst.msk [vmem:[#allocation2 + $0x8] sm:$0x1] %vm3303, %v3298
    %3305 = vst.msk [vmem:[#allocation2 + $0x48] sm:$0x1] %vm3303, %v3300
    %v3306 = vld [vmem:[#allocation2] sm:$0xf]
    %v3307 = vld [vmem:[#allocation2 + $0x40] sm:$0xf]
    %v3308 = vsel %vm1030, -inf, %v3306
    %v3309 = vsel %vm1030, -inf, %v3307
    %vm3310 = vcmp.eq.s32.totalorder %v1026, 3
    %v3311 = vld [vmem:[#allocation2 + $0x8] sm:$0xf]
    %v3312 = vld [vmem:[#allocation2 + $0x48] sm:$0xf]
    %v3313 = vsel %vm3310, -inf, %v3311
    %v3314 = vsel %vm3310, -inf, %v3312
    %3315 = vrot.lane.b32.xlu0 %v3232, 96
    %v3316 = vpop.permute.xlu0 %3315
    %3317 = vrot.lane.b32.xlu0 %v3233, 96
    %v3318 = vpop.permute.xlu0 %3317
    %v3321 = vmax.f32 %v3308, %v3316
    %v3322 = vmax.f32 %v3309, %v3318
    %3325 = vrot.lane.b32.xlu0 %v3313, 64
    %v3326 = vpop.permute.xlu0 %3325
    %3327 = vrot.lane.b32.xlu0 %v3314, 64
    %v3328 = vpop.permute.xlu0 %3327
    %v3331 = vmax.f32 %v3321, %v3326
    %v3332 = vmax.f32 %v3322, %v3328
    %3335 = vrot.lane.b32.xlu0 %v3331, 32
    %v3336 = vpop.permute.xlu0 %3335
    %3337 = vrot.lane.b32.xlu0 %v3332, 32
    %v3338 = vpop.permute.xlu0 %3337
    %3341 = vst.msk [vmem:[#allocation2] sm:$0xf] %vm2541, %v3336
    %3342 = vst.msk [vmem:[#allocation2 + $0x40] sm:$0xf] %vm2541, %v3338
    %v3343 = vld [vmem:[#allocation2] sm:$0xf]
    %v3344 = vld [vmem:[#allocation2 + $0x8] sm:$0xf]
    %v3345 = vld [vmem:[#allocation2 + $0x40] sm:$0xf]
    %v3346 = vld [vmem:[#allocation2 + $0x48] sm:$0xf]
    %v3347 = vpack.c.bf16 %v3343, %v3343
    %v3348 = vpack.c.bf16 %v3344, %v3344
    %v3349 = vpack.c.bf16 %v3345, %v3345
    %v3350 = vpack.c.bf16 %v3346, %v3346
    %v3351 = vld [vmem:[%s13] sm:$0xf]
    %v3352 = vld [vmem:[%s13 + $0x4] sm:$0xf]
    %v3353 = vld [vmem:[%s13 + $0x8] sm:$0xf]
    %v3354 = vld [vmem:[%s13 + $0xc] sm:$0xf]
    %v3355 = vld [vmem:[%s13 + $0x10] sm:$0xf]
    %v3356 = vld [vmem:[%s13 + $0x14] sm:$0xf]
    %v3357 = vld [vmem:[%s13 + $0x18] sm:$0xf]
    %v3358 = vld [vmem:[%s13 + $0x1c] sm:$0xf]
    %v3359 = vld [vmem:[%s13 + $0x20] sm:$0xf]
    %v3360 = vld [vmem:[%s13 + $0x24] sm:$0xf]
    %v3361 = vld [vmem:[%s13 + $0x28] sm:$0xf]
    %v3362 = vld [vmem:[%s13 + $0x2c] sm:$0xf]
    %v3363 = vld [vmem:[%s13 + $0x30] sm:$0xf]
    %v3364 = vld [vmem:[%s13 + $0x34] sm:$0xf]
    %v3365 = vld [vmem:[%s13 + $0x38] sm:$0xf]
    %v3366 = vld [vmem:[%s13 + $0x3c] sm:$0xf]
    %v3367 = vld [vmem:[%s13 + $0x40] sm:$0xf]
    %v3368 = vld [vmem:[%s13 + $0x44] sm:$0xf]
    %v3369 = vld [vmem:[%s13 + $0x48] sm:$0xf]
    %v3370 = vld [vmem:[%s13 + $0x4c] sm:$0xf]
    %v3371 = vld [vmem:[%s13 + $0x50] sm:$0xf]
    %v3372 = vld [vmem:[%s13 + $0x54] sm:$0xf]
    %v3373 = vld [vmem:[%s13 + $0x58] sm:$0xf]
    %v3374 = vld [vmem:[%s13 + $0x5c] sm:$0xf]
    %v3375 = vld [vmem:[%s13 + $0x60] sm:$0xf]
    %v3376 = vld [vmem:[%s13 + $0x64] sm:$0xf]
    %v3377 = vld [vmem:[%s13 + $0x68] sm:$0xf]
    %v3378 = vld [vmem:[%s13 + $0x6c] sm:$0xf]
    %v3379 = vld [vmem:[%s13 + $0x70] sm:$0xf]
    %v3380 = vld [vmem:[%s13 + $0x74] sm:$0xf]
    %v3381 = vld [vmem:[%s13 + $0x78] sm:$0xf]
    %v3382 = vld [vmem:[%s13 + $0x7c] sm:$0xf]
    %v3387 = vcombine.low %v3347, %v3348
    %v3389 = vunpack.c.l.s4 1983009808
    %v3390 = vunpack.c.0.s8 %v3389
    %v3391 = vlaneseq
    %v3392 = vshrl.u32 %v3391, 7
    %v3393 = vsub.s32 %v3390, %v3392
    %v3394 = vrot.slane %v3387, %v3393
    %v3395 = vcombine.low %v3349, %v3350
    %v3397 = vunpack.c.l.s4 1983009808
    %v3398 = vunpack.c.0.s8 %v3397
    %v3399 = vlaneseq
    %v3400 = vshrl.u32 %v3399, 7
    %v3401 = vsub.s32 %v3398, %v3400
    %v3402 = vrot.slane %v3395, %v3401
    %v3403 = vcombine.low %v3394, %v3402
    %v3405 = vunpack.c.l.s4 1983009808
    %v3406 = vunpack.c.0.s8 %v3405
    %v3407 = vlaneseq
    %v3408 = vshrl.u32 %v3407, 7
    %v3409 = vsub.s32 %v3406, %v3408
    %v3410 = vrot.slane %v3403, %v3409
    %v3411 = vcombine.high %v3410, %v3410
    %v3446 = vunpack.c.l.b16 %v3351
    %v3447 = vunpack.c.l.b16 %v3352
    %v3448 = vunpack.c.l.b16 %v3353
    %v3449 = vunpack.c.l.b16 %v3354
    %v3450 = vunpack.c.l.b16 %v3355
    %v3451 = vunpack.c.l.b16 %v3356
    %v3452 = vunpack.c.l.b16 %v3357
    %v3453 = vunpack.c.l.b16 %v3358
    %v3454 = vunpack.c.l.b16 %v3359
    %v3455 = vunpack.c.l.b16 %v3360
    %v3456 = vunpack.c.l.b16 %v3361
    %v3457 = vunpack.c.l.b16 %v3362
    %v3458 = vunpack.c.l.b16 %v3363
    %v3459 = vunpack.c.l.b16 %v3364
    %v3460 = vunpack.c.l.b16 %v3365
    %v3461 = vunpack.c.l.b16 %v3366
    %v3462 = vunpack.c.l.b16 %v3367
    %v3463 = vunpack.c.l.b16 %v3368
    %v3464 = vunpack.c.l.b16 %v3369
    %v3465 = vunpack.c.l.b16 %v3370
    %v3466 = vunpack.c.l.b16 %v3371
    %v3467 = vunpack.c.l.b16 %v3372
    %v3468 = vunpack.c.l.b16 %v3373
    %v3469 = vunpack.c.l.b16 %v3374
    %v3470 = vunpack.c.l.b16 %v3375
    %v3471 = vunpack.c.l.b16 %v3376
    %v3472 = vunpack.c.l.b16 %v3377
    %v3473 = vunpack.c.l.b16 %v3378
    %v3474 = vunpack.c.l.b16 %v3379
    %v3475 = vunpack.c.l.b16 %v3380
    %v3476 = vunpack.c.l.b16 %v3381
    %v3477 = vunpack.c.l.b16 %v3382
    %v3478 = vpack.c.b16 %v3447, %v3446
    %v3479 = vpack.c.b16 %v3449, %v3448
    %v3480 = vpack.c.b16 %v3451, %v3450
    %v3481 = vpack.c.b16 %v3453, %v3452
    %v3482 = vpack.c.b16 %v3455, %v3454
    %v3483 = vpack.c.b16 %v3457, %v3456
    %v3484 = vpack.c.b16 %v3459, %v3458
    %v3485 = vpack.c.b16 %v3461, %v3460
    %v3486 = vpack.c.b16 %v3463, %v3462
    %v3487 = vpack.c.b16 %v3465, %v3464
    %v3488 = vpack.c.b16 %v3467, %v3466
    %v3489 = vpack.c.b16 %v3469, %v3468
    %v3490 = vpack.c.b16 %v3471, %v3470
    %v3491 = vpack.c.b16 %v3473, %v3472
    %v3492 = vpack.c.b16 %v3475, %v3474
    %v3493 = vpack.c.b16 %v3477, %v3476
    %3510 = vmatprep.subr.bf16.mxu0 0
    %3511 = vmatpush1.bf16.msra.mxu0 %v3485
    %3512 = vmatprep.subr.bf16.mxu0 0
    %3513 = vmatpush1.bf16.msra.mxu0 %v3484
    %3514 = vmatprep.subr.bf16.mxu0 0
    %3515 = vmatpush1.bf16.msra.mxu0 %v3483
    %3516 = vmatprep.subr.bf16.mxu0 0
    %3517 = vmatpush1.bf16.msra.mxu0 %v3482
    %3518 = vmatprep.subr.bf16.mxu0 0
    %3519 = vmatpush1.bf16.msra.mxu0 %v3481
    %3520 = vmatprep.subr.bf16.mxu0 0
    %3521 = vmatpush1.bf16.msra.mxu0 %v3480
    %3522 = vmatprep.subr.bf16.mxu0 0
    %3523 = vmatpush1.bf16.msra.mxu0 %v3479
    %3524 = vmatprep.subr.bf16.mxu0 0
    %3525 = vmatpush1.bf16.msra.mxu0 %v3478
    %3526 = vmatprep.subr.bf16.mxu0 0
    %3527 = vmatpush2.bf16.msra.mxu0 %v3493
    %3528 = vmatprep.subr.bf16.mxu0 0
    %3529 = vmatpush2.bf16.msra.mxu0 %v3492
    %3530 = vmatprep.subr.bf16.mxu0 0
    %3531 = vmatpush2.bf16.msra.mxu0 %v3491
    %3532 = vmatprep.subr.bf16.mxu0 0
    %3533 = vmatpush2.bf16.msra.mxu0 %v3490
    %3534 = vmatprep.subr.bf16.mxu0 0
    %3535 = vmatpush2.bf16.msra.mxu0 %v3489
    %3536 = vmatprep.subr.bf16.mxu0 0
    %3537 = vmatpush2.bf16.msra.mxu0 %v3488
    %3538 = vmatprep.subr.bf16.mxu0 0
    %3539 = vmatpush2.bf16.msra.mxu0 %v3487
    %3540 = vmatprep.subr.bf16.mxu0 0
    %3541 = vmatpush2.bf16.msra.mxu0 %v3486
    %3542 = vmatprep.mubr.bf16.mxu0 %v3411
    %3543 = vmatmul.mubr.bf16.gmra.mxu0 %v3410
    %v3544 = vpop.f32.mrf.mxu0
    %v3545 = vadd.f32 0.0, %v3544
    %v3546 = vpop.f32.mrf.mxu0
    %v3547 = vpop.f32.mrf.mxu0
    %v3548 = vpop.f32.mrf.mxu0
    %3549 = vdwg.mxu0
    %v3551 = vcombine.high %v3545, %v3545
    %v3553 = vld [vmem:[%s14] sm:$0x1]
    %v3554 = vld [vmem:[%s14 + $0x1] sm:$0x1]
    %v3555 = vsel %vm2541, %v3545, 0.0
    %v3556 = vsel %vm2541, %v3551, 0.0
    %v3557 = vadd.f32 %v3555, %v3556
    %v3558 = vrot.slane %v3557, 4
    %v3559 = vadd.f32 %v3557, %v3558
    %v3560 = vrot.slane %v3559, 2
    %v3561 = vadd.f32 %v3559, %v3560
    %v3562 = vrot.slane %v3561, 1
    %v3563 = vadd.f32 %v3561, %v3562
    %v3564 = vmul.f32 %v3563, %v2551
    %v3565 = vsub.f32 %v3545, %v3564
    %v3566 = vsub.f32 %v3551, %v3564
    %v3567 = vmul.f32 %v3565, %v3565
    %v3568 = vmul.f32 %v3566, %v3566
    %v3569 = vsel %vm2541, %v3567, 0.0
    %v3570 = vsel %vm2541, %v3568, 0.0
    %v3571 = vadd.f32 %v3569, %v3570
    %v3572 = vrot.slane %v3571, 4
    %v3573 = vadd.f32 %v3571, %v3572
    %v3574 = vrot.slane %v3573, 2
    %v3575 = vadd.f32 %v3573, %v3574
    %v3576 = vrot.slane %v3575, 1
    %v3577 = vadd.f32 %v3575, %v3576
    %v3578 = vmul.f32 %v3577, %v2551
    %v3579 = vadd.f32 %v3578, 1e-05
    %v3580 = vrsqrt.pop %v3579
    %v3581 = vmul.f32 %v3553, %v3580
    %v3582 = vlaneseq
    %v3583 = vshrl.u32 %v3582, 7
    %v3584 = vsub.s32 0, %v3583
    %v3585 = vrot.slane %v3581, %v3584
    %v3586 = vmul.f32 %v3565, %v3585
    %v3587 = vmul.f32 %v3566, %v3585
    %v3588 = vlaneseq
    %v3589 = vshrl.u32 %v3588, 7
    %v3590 = vsub.s32 0, %v3589
    %v3591 = vrot.slane %v3554, %v3590
    %v3592 = vadd.f32 %v3586, %v3591
    %v3593 = vadd.f32 %v3587, %v3591
    %v3594 = vmax.f32 %v3592, 0.0
    %v3595 = vmax.f32 %v3593, 0.0
    %v3596 = vld [vmem:[%s20] sm:$0xf]
    %v3598 = vsel %vm2585, %v3596, 0
    %v3601 = vsel %vm2589, %v3594, 0
    %3603 = vmatprep.subr.mxu0 0.0
    %3604 = vmatpush1.msra.mxu0 0.0
    %3605 = vmatprep.subr.mxu0 0.0
    %3606 = vmatpush1.msra.mxu0 0.0
    %3607 = vmatprep.subr.mxu0 0.0
    %3608 = vmatpush1.msra.mxu0 0.0
    %3609 = vmatprep.subr.mxu0 0.0
    %3610 = vmatpush1.msra.mxu0 0.0
    %3611 = vmatprep.subr.mxu0 0.0
    %3612 = vmatpush1.msra.mxu0 0.0
    %3613 = vmatprep.subr.mxu0 0.0
    %3614 = vmatpush1.msra.mxu0 0.0
    %3615 = vmatprep.subr.mxu0 0.0
    %3616 = vmatpush1.msra.mxu0 0.0
    %3617 = vmatprep.subr.mxu0 0.0
    %3618 = vmatpush1.msra.mxu0 0.0
    %3619 = vmatprep.subr.mxu0 0.0
    %3620 = vmatpush1.msra.mxu0 0.0
    %3621 = vmatprep.subr.mxu0 0.0
    %3622 = vmatpush1.msra.mxu0 0.0
    %3623 = vmatprep.subr.mxu0 0.0
    %3624 = vmatpush1.msra.mxu0 0.0
    %3625 = vmatprep.subr.mxu0 0.0
    %3626 = vmatpush1.msra.mxu0 0.0
    %3627 = vmatprep.subr.mxu0 0.0
    %3628 = vmatpush1.msra.mxu0 0.0
    %3629 = vmatprep.subr.mxu0 0.0
    %3630 = vmatpush1.msra.mxu0 0.0
    %3631 = vmatprep.subr.mxu0 0.0
    %3632 = vmatpush1.msra.mxu0 0.0
    %3633 = vmatprep.subr.mxu0 0.0
    %3634 = vmatpush1.msra.mxu0 %v3601
    %3635 = vmatprep.subr.mxu0 0.0
    %3636 = vmatpush2.msra.mxu0 0.0
    %3637 = vmatprep.subr.mxu0 0.0
    %3638 = vmatpush2.msra.mxu0 0.0
    %3639 = vmatprep.subr.mxu0 0.0
    %3640 = vmatpush2.msra.mxu0 0.0
    %3641 = vmatprep.subr.mxu0 0.0
    %3642 = vmatpush2.msra.mxu0 0.0
    %3643 = vmatprep.subr.mxu0 0.0
    %3644 = vmatpush2.msra.mxu0 0.0
    %3645 = vmatprep.subr.mxu0 0.0
    %3646 = vmatpush2.msra.mxu0 0.0
    %3647 = vmatprep.subr.mxu0 0.0
    %3648 = vmatpush2.msra.mxu0 0.0
    %3649 = vmatprep.subr.mxu0 0.0
    %3650 = vmatpush2.msra.mxu0 0.0
    %3651 = vmatprep.subr.mxu0 0.0
    %3652 = vmatpush2.msra.mxu0 0.0
    %3653 = vmatprep.subr.mxu0 0.0
    %3654 = vmatpush2.msra.mxu0 0.0
    %3655 = vmatprep.subr.mxu0 0.0
    %3656 = vmatpush2.msra.mxu0 0.0
    %3657 = vmatprep.subr.mxu0 0.0
    %3658 = vmatpush2.msra.mxu0 0.0
    %3659 = vmatprep.subr.mxu0 0.0
    %3660 = vmatpush2.msra.mxu0 0.0
    %3661 = vmatprep.subr.mxu0 0.0
    %3662 = vmatpush2.msra.mxu0 0.0
    %3663 = vmatprep.subr.mxu0 0.0
    %3664 = vmatpush2.msra.mxu0 0.0
    %3665 = vmatprep.subr.mxu0 0.0
    %3666 = vmatpush2.msra.mxu0 0.0
    %3667 = vmatprep.mubr.f32.mxu0 0.0
    %3668 = vmatmul.mubr.f32.gmra.mxu0 %v3598
    %v3669 = vpop.f32.mrf.mxu0
    %v3670 = vadd.f32 0.0, %v3669
    %v3671 = vpop.f32.mrf.mxu0
    %3672 = vdwg.mxu0
    %v3674 = vsel %vm2589, %v3595, 0
    %3676 = vmatprep.subr.mxu0 0.0
    %3677 = vmatpush1.msra.mxu0 0.0
    %3678 = vmatprep.subr.mxu0 0.0
    %3679 = vmatpush1.msra.mxu0 0.0
    %3680 = vmatprep.subr.mxu0 0.0
    %3681 = vmatpush1.msra.mxu0 0.0
    %3682 = vmatprep.subr.mxu0 0.0
    %3683 = vmatpush1.msra.mxu0 0.0
    %3684 = vmatprep.subr.mxu0 0.0
    %3685 = vmatpush1.msra.mxu0 0.0
    %3686 = vmatprep.subr.mxu0 0.0
    %3687 = vmatpush1.msra.mxu0 0.0
    %3688 = vmatprep.subr.mxu0 0.0
    %3689 = vmatpush1.msra.mxu0 0.0
    %3690 = vmatprep.subr.mxu0 0.0
    %3691 = vmatpush1.msra.mxu0 0.0
    %3692 = vmatprep.subr.mxu0 0.0
    %3693 = vmatpush1.msra.mxu0 0.0
    %3694 = vmatprep.subr.mxu0 0.0
    %3695 = vmatpush1.msra.mxu0 0.0
    %3696 = vmatprep.subr.mxu0 0.0
    %3697 = vmatpush1.msra.mxu0 0.0
    %3698 = vmatprep.subr.mxu0 0.0
    %3699 = vmatpush1.msra.mxu0 0.0
    %3700 = vmatprep.subr.mxu0 0.0
    %3701 = vmatpush1.msra.mxu0 0.0
    %3702 = vmatprep.subr.mxu0 0.0
    %3703 = vmatpush1.msra.mxu0 0.0
    %3704 = vmatprep.subr.mxu0 0.0
    %3705 = vmatpush1.msra.mxu0 0.0
    %3706 = vmatprep.subr.mxu0 0.0
    %3707 = vmatpush1.msra.mxu0 %v3674
    %3708 = vmatprep.subr.mxu0 0.0
    %3709 = vmatpush2.msra.mxu0 0.0
    %3710 = vmatprep.subr.mxu0 0.0
    %3711 = vmatpush2.msra.mxu0 0.0
    %3712 = vmatprep.subr.mxu0 0.0
    %3713 = vmatpush2.msra.mxu0 0.0
    %3714 = vmatprep.subr.mxu0 0.0
    %3715 = vmatpush2.msra.mxu0 0.0
    %3716 = vmatprep.subr.mxu0 0.0
    %3717 = vmatpush2.msra.mxu0 0.0
    %3718 = vmatprep.subr.mxu0 0.0
    %3719 = vmatpush2.msra.mxu0 0.0
    %3720 = vmatprep.subr.mxu0 0.0
    %3721 = vmatpush2.msra.mxu0 0.0
    %3722 = vmatprep.subr.mxu0 0.0
    %3723 = vmatpush2.msra.mxu0 0.0
    %3724 = vmatprep.subr.mxu0 0.0
    %3725 = vmatpush2.msra.mxu0 0.0
    %3726 = vmatprep.subr.mxu0 0.0
    %3727 = vmatpush2.msra.mxu0 0.0
    %3728 = vmatprep.subr.mxu0 0.0
    %3729 = vmatpush2.msra.mxu0 0.0
    %3730 = vmatprep.subr.mxu0 0.0
    %3731 = vmatpush2.msra.mxu0 0.0
    %3732 = vmatprep.subr.mxu0 0.0
    %3733 = vmatpush2.msra.mxu0 0.0
    %3734 = vmatprep.subr.mxu0 0.0
    %3735 = vmatpush2.msra.mxu0 0.0
    %3736 = vmatprep.subr.mxu0 0.0
    %3737 = vmatpush2.msra.mxu0 0.0
    %3738 = vmatprep.subr.mxu0 0.0
    %3739 = vmatpush2.msra.mxu0 0.0
    %3740 = vmatprep.mubr.f32.mxu0 0.0
    %3741 = vmatmul.mubr.f32.gmra.mxu0 %v3598
    %v3742 = vpop.f32.mrf.mxu0
    %v3743 = vadd.f32 0.0, %v3742
    %v3744 = vpop.f32.mrf.mxu0
    %3745 = vdwg.mxu0
    %v3748 = vrot.slane %v3670, 2
    %v3749 = vrot.slane %v3743, 2
    %v3752 = vmax.f32 %v3670, %v3748
    %v3753 = vmax.f32 %v3743, %v3749
    %v3754 = vadd.f32 %v3752, %v2742
    %v3755 = vadd.f32 %v3753, %v2743
    %vm3756 = vcmask 254976
    %v3757 = vsel %vm3756, %v3754, 0.0
    %v3758 = vrot.slane %v3757, 4
    %v3759 = vadd.f32 %v3757, %v3758
    %v3760 = vrot.slane %v3759, 2
    %v3761 = vadd.f32 %v3759, %v3760
    %v3762 = vrot.slane %v3761, 1
    %v3763 = vadd.f32 %v3761, %v3762
    %v3764 = vsel %vm3756, %v3755, 0.0
    %v3765 = vrot.slane %v3764, 4
    %v3766 = vadd.f32 %v3764, %v3765
    %v3767 = vrot.slane %v3766, 2
    %v3768 = vadd.f32 %v3766, %v3767
    %v3769 = vrot.slane %v3768, 1
    %v3770 = vadd.f32 %v3768, %v3769
    %v3771 = vrcp.pop 2.0
    %v3772 = vmul.f32 %v3763, %v3771
    %v3773 = vmul.f32 %v3770, %v3771
    %v3774 = vpack.c.bf16 %v3772, %v3772
    %v3775 = vpack.c.bf16 %v3773, %v3773
    %v3776 = vld [vmem:[%s15] sm:$0xf]
    %v3777 = vld [vmem:[%s15 + $0x4] sm:$0xf]
    %v3778 = vld [vmem:[%s15 + $0x8] sm:$0xf]
    %v3779 = vld [vmem:[%s15 + $0xc] sm:$0xf]
    %v3780 = vld [vmem:[%s16] sm:$0x1]
    %v3782 = vlaneseq
    %v3783 = vshrl.u32 %v3782, 7
    %v3784 = vsub.s32 0, %v3783
    %v3785 = vrot.slane %v3780, %v3784
    %v3789 = vunpack.c.l.b16 %v3774
    %v3790 = vunpack.c.l.b16 %v3775
    %vm3791 = vcmask 1041409
    %v3792 = vsel %vm3791, %v3790, %v3789
    %v3793 = vpack.c.b16 %v3792, %v3792
    %v3798 = vunpack.c.l.b16 %v3776
    %v3799 = vunpack.c.l.b16 %v3777
    %v3800 = vunpack.c.l.b16 %v3778
    %v3801 = vunpack.c.l.b16 %v3779
    %v3802 = vpack.c.b16 %v3799, %v3798
    %v3803 = vpack.c.b16 %v3801, %v3800
    %v3807 = vsel %vm135, %v3793, 0
    %3809 = vmatprep.subr.bf16.mxu0 0
    %3810 = vmatpush1.bf16.msra.mxu0 0
    %3811 = vmatprep.subr.bf16.mxu0 0
    %3812 = vmatpush1.bf16.msra.mxu0 0
    %3813 = vmatprep.subr.bf16.mxu0 0
    %3814 = vmatpush1.bf16.msra.mxu0 0
    %3815 = vmatprep.subr.bf16.mxu0 0
    %3816 = vmatpush1.bf16.msra.mxu0 0
    %3817 = vmatprep.subr.bf16.mxu0 0
    %3818 = vmatpush1.bf16.msra.mxu0 0
    %3819 = vmatprep.subr.bf16.mxu0 0
    %3820 = vmatpush1.bf16.msra.mxu0 0
    %3821 = vmatprep.subr.bf16.mxu0 0
    %3822 = vmatpush1.bf16.msra.mxu0 %v3803
    %3823 = vmatprep.subr.bf16.mxu0 0
    %3824 = vmatpush1.bf16.msra.mxu0 %v3802
    %3825 = vmatprep.subr.bf16.mxu0 0
    %3826 = vmatpush2.bf16.msra.mxu0 0
    %3827 = vmatprep.subr.bf16.mxu0 0
    %3828 = vmatpush2.bf16.msra.mxu0 0
    %3829 = vmatprep.subr.bf16.mxu0 0
    %3830 = vmatpush2.bf16.msra.mxu0 0
    %3831 = vmatprep.subr.bf16.mxu0 0
    %3832 = vmatpush2.bf16.msra.mxu0 0
    %3833 = vmatprep.subr.bf16.mxu0 0
    %3834 = vmatpush2.bf16.msra.mxu0 0
    %3835 = vmatprep.subr.bf16.mxu0 0
    %3836 = vmatpush2.bf16.msra.mxu0 0
    %3837 = vmatprep.subr.bf16.mxu0 0
    %3838 = vmatpush2.bf16.msra.mxu0 0
    %3839 = vmatprep.subr.bf16.mxu0 0
    %3840 = vmatpush2.bf16.msra.mxu0 0
    %3841 = vmatprep.mubr.bf16.mxu0 0
    %3842 = vmatmul.mubr.bf16.gmra.mxu0 %v3807
    %v3843 = vpop.f32.mrf.mxu0
    %v3844 = vadd.f32 %v3785, %v3843
    %v3845 = vpop.f32.mrf.mxu0
    %v3846 = vpop.f32.mrf.mxu0
    %v3847 = vpop.f32.mrf.mxu0
    %3848 = vdwg.mxu0
    %vm3849 = vcmask 74752
    %3850 = vst.msk [vmem:[#allocation3] sm:$0x3] %vm3849, %v3844
    // Predicated region
    $region86: #{mini_inception_time.1} parent=1 // pred_check
      _
    $region87: #{mini_inception_time.1} parent=1 // pred_check_branch
      %3852 = sbr.rel (0) target = $region89
    $region88: #{mini_inception_time.1} parent=1 // pred_region
      %s3854 = ssub.s32 32, 32
      %3855 = vsyncadd [#allocation4], %s3854
      %s3857 = sshll.u32 [#allocation3], 4
      %s3858 = int_to_ptr.vmem [resolvable:$true] %s3857
      %3860 = dma.vmem_to_hbm [thread:$0]  %s3858, 32, %s21, [#allocation4]
    $region89: #{mini_inception_time.1} parent=1 // pred_fallthru
      _
    // Predicated region
    $region90: #{mini_inception_time.1} parent=1 // pred_check
      _
    $region91: #{mini_inception_time.1} parent=1 // pred_check_branch
      %3862 = sbr.rel (0) target = $region93
    $region92: #{mini_inception_time.1} parent=1 // pred_region
      %3863 = dma.done [#allocation4], 32
    $region93: #{mini_inception_time.1} parent=1 // pred_fallthru
      _
    %3864 = vsyncpa [#allocation4], 1

</llo_original>
